<compile_context>
chip_gen: v6e
topology: v6e:2x2x1
jax: 0.10.0
libtpu: 0.0.40
codegen_flags: <defaults>
</compile_context>

<pallas_src>
import functools

import jax
import jax.numpy as jnp
from jax.experimental import pallas as pl
from jax.experimental.pallas import tpu as pltpu


def _round_up(n, m):
    return ((n + m - 1) // m) * m


def _cdiv(a, b):
    return (a + b - 1) // b


def _device_kind():
    try:
        return jax.devices()[0].device_kind.lower()
    except Exception:
        return ""


def _vmem_capacity_bytes(kind):
    try:
        return int(pltpu.get_tpu_info().vmem_capacity_bytes)
    except Exception:
        pass
    # Fallbacks: 128 MiB on v5e/v6e, 64 MiB (conservative) otherwise (incl. v7x).
    if any(s in kind for s in ("v5", "v6")):
        return 128 << 20
    return 64 << 20


def _decoder_kernel(n_hidden, compute_dtype, act_dtype, x_ref, *refs):
    """refs = (w0, b0, w1, b1, ..., w_out, b_out, out_ref)."""
    out_ref = refs[-1]
    p = refs[:-1]

    h = x_ref[...]  # (T, d_in); f32 for the first layer, bf16 afterwards.

    # Hidden layers: Linear -> tanh.  MXU dot with f32 accumulation; bias add in
    # f32; tanh in bf16 on chips with a bf16 EUP (v6e/v7x), f32 otherwise.
    for li in range(n_hidden):
        w = p[2 * li][...]
        b = p[2 * li + 1][...]
        z = jnp.dot(h, w, preferred_element_type=jnp.float32) + b
        h = jnp.tanh(z.astype(act_dtype)).astype(compute_dtype)

    # Output layer: Linear (no activation) -> (T, 1) f32.
    w_out = p[2 * n_hidden][...]
    b_out = p[2 * n_hidden + 1][...]
    out = jnp.dot(h, w_out, preferred_element_type=jnp.float32) + b_out

    # Lane-dense store: (T, 1) -> (T//128, 128) when out_ref is the wide layout;
    # a no-op reshape for the (T, 1) fallback layout.
    out_ref[...] = out.reshape(out_ref.shape).astype(out_ref.dtype)


def decoder_forward(x, params, *, tile=8192, use_bf16=True, first_layer_f32=True):
    """Forward pass of the DeepSDF standard Decoder.

    x:      [N, latent_size + 3] float32 (xyz are the last 3 columns).
    params: list of (W [in, out], b [1, out]) — hidden layers then output layer.
    """
    n, d_in = x.shape
    n_hidden = len(params) - 1

    kind = _device_kind()
    vmem_cap = _vmem_capacity_bytes(kind)
    compute_dtype = jnp.bfloat16 if use_bf16 else jnp.float32
    itemsize = 2 if use_bf16 else 4
    # bf16 EUP exists on v6e/v7x; keep f32 tanh on v5e and older.
    has_bf16_eup = not any(s in kind for s in ("v2", "v3", "v4", "v5"))
    act_dtype = jnp.bfloat16 if (use_bf16 and has_bf16_eup) else jnp.float32

    # ---- Host-side param prep: fold the xyz*100 scale into W0's last 3 rows.
    w0, b0 = params[0]
    row_scale = jnp.concatenate(
        [jnp.ones((d_in - 3, 1), jnp.float32), jnp.full((3, 1), 100.0, jnp.float32)],
        axis=0)
    prepped = [(w0 * row_scale, b0)] + list(params[1:])

    keep_first_f32 = first_layer_f32 or not use_bf16
    flat = []
    for li, (w, b) in enumerate(prepped):
        w_dt = jnp.float32 if (li == 0 and keep_first_f32) else compute_dtype
        flat.append(w.astype(w_dt))      # MXU operand
        flat.append(b.astype(jnp.float32))  # added to the f32 accumulator

    widths = [w.shape[1] for w, _ in prepped]
    max_w = max(widths + [d_in])

    # ---- Row-tile selection --------------------------------------------------
    # Cap T so the live activation slab (f32 z + next-layer h) stays well inside
    # the scoped VMEM of the smallest target (v7x: 64 MiB physical).
    per_row = max(max_w, 128) * (4 + itemsize + 4)
    t_cap = max(1024, ((int(0.4 * vmem_cap) // per_row) // 1024) * 1024)
    tile_eff = max(1024, min(_round_up(tile, 1024), t_cap))

    n_min = _round_up(max(n, 1), 128)
    if n_min <= tile_eff:
        t = n_min                     # single grid step, block == full array
        n_pad = n_min
    else:
        steps = _cdiv(n, tile_eff)
        # Rebalance so the last step is not mostly padding; keep t a multiple of
        # 1024 so the lane-dense out block (t//128, 128) is (8,128)-aligned.
        t = _round_up(_cdiv(n, steps), 1024)
        n_pad = t * steps
    grid = (n_pad // t,)

    x_dt = jnp.float32 if keep_first_f32 else compute_dtype
    x_in = x.astype(x_dt)
    if n_pad != n:
        x_in = jnp.pad(x_in, ((0, n_pad - n), (0, 0)))
    x_item = 4 if keep_first_f32 else itemsize

    # ---- Cost / VMEM bookkeeping ----------------------------------------------
    weight_bytes = sum(int(a.size) * a.dtype.itemsize for a in flat)
    full_dims = [d_in] + widths
    flops = 2 * n_pad * sum(full_dims[i] * full_dims[i + 1]
                            for i in range(len(full_dims) - 1))
    transcendentals = n_pad * sum(widths[:-1])
    bytes_accessed = n_pad * d_in * x_item + weight_bytes + n_pad * 4

    def vmem_need(w_buffers):
        return int(w_buffers * weight_bytes
                   + 2 * t * d_in * x_item          # double-buffered input tile
                   + 2 * t * 4                       # double-buffered output tile
                   + t * max_w * (4 + itemsize)      # live z + h activations
                   + t * max(max_w, 128) * 4         # relayout / spill headroom
                   + (4 << 20))

    kernel = functools.partial(_decoder_kernel, n_hidden, compute_dtype, act_dtype)

    def build(lane_dense, single_buffer_weights):
        in_specs = [pl.BlockSpec((t, d_in), lambda i: (i, 0))]
        for arr in flat:
            if single_buffer_weights:
                # Constant index_map: the block never changes across grid steps,
                # so one VMEM buffer is enough (saves ~weight_bytes of VMEM).
                spec = pl.BlockSpec(arr.shape, lambda i: (0, 0),
                                    pipeline_mode=pl.Buffered(1))
            else:
                spec = pl.BlockSpec(arr.shape, lambda i: (0, 0))
            in_specs.append(spec)

        if lane_dense:
            out_shape = jax.ShapeDtypeStruct((n_pad // 128, 128), jnp.float32)
            out_specs = pl.BlockSpec((t // 128, 128), lambda i: (i, 0))
        else:
            out_shape = jax.ShapeDtypeStruct((n_pad, 1), jnp.float32)
            out_specs = pl.BlockSpec((t, 1), lambda i: (i, 0))

        w_buffers = 1 if single_buffer_weights else 2
        vmem_limit = int(min(max(vmem_need(w_buffers), 16 << 20),
                             int(0.72 * vmem_cap)))
        cost = pl.CostEstimate(flops=int(flops),
                               transcendentals=int(transcendentals),
                               bytes_accessed=int(bytes_accessed))
        return pl.pallas_call(
            kernel,
            out_shape=out_shape,
            grid=grid,
            in_specs=in_specs,
            out_specs=out_specs,
            compiler_params=pltpu.CompilerParams(
                # Single batch axis; "parallel" lets megacore chips split it.
                # TODO(synk): on v7x verify both TCs are used; if not, switch to
                # pltpu.CORE_PARALLEL on a leading size-2 core axis.
                dimension_semantics=("parallel",),
                vmem_limit_bytes=vmem_limit),
            cost_estimate=cost)

    # Preferred config first; fall back gracefully if the installed
    # Pallas/Mosaic rejects the lane-dense reshape store or Buffered(1).
    attempts = ((True, True), (True, False), (False, False))
    out = None
    last_err = None
    lane_dense_used = False
    for lane_dense, sbuf in attempts:
        try:
            out = build(lane_dense, sbuf)(x_in, *flat)
            lane_dense_used = lane_dense
            break
        except Exception as err:  # noqa: BLE001 - config fallback only
            last_err = err
    if out is None:
        raise last_err

    if lane_dense_used:
        out = out.reshape(n_pad, 1)
    return out[:n]


def init_decoder_params(key, latent_size, dims):
    """Mirror nn.Linear default init: uniform(+-1/sqrt(fan_in)).

    Full layer widths: [latent_size + 3] + dims + [1].
    """
    full_dims = [latent_size + 3] + list(dims) + [1]
    params = []
    for ii in range(len(full_dims) - 1):
        fan_in, fan_out = full_dims[ii], full_dims[ii + 1]
        key, kw, kb = jax.random.split(key, 3)
        bound = 1.0 / jnp.sqrt(jnp.float32(fan_in))
        w = jax.random.uniform(kw, (fan_in, fan_out), jnp.float32,
                               minval=-bound, maxval=bound)
        b = jax.random.uniform(kb, (1, fan_out), jnp.float32,
                               minval=-bound, maxval=bound)
        params.append((w, b))
    return params


def decoder_reference(x, params):
    """Pure-JAX f32 reference of the PyTorch forward."""
    xyz = x[:, -3:] * 100.0
    latent = x[:, :-3]
    h = jnp.concatenate([latent, xyz], axis=1)
    for w, b in params[:-1]:
        h = jnp.tanh(h @ w + b)
    w_out, b_out = params[-1]
    return h @ w_out + b_out


if __name__ == "__main__":
    latent_size = 13          # input dim = latent_size + 3 = 16
    dims = [32, 32, 32]       # hidden widths (len(dims) >= 3)
    batch = 16

    key = jax.random.PRNGKey(0)
    key_x, key_p = jax.random.split(key)

    x = jax.random.normal(key_x, (batch, latent_size + 3), dtype=jnp.float32)
    params = init_decoder_params(key_p, latent_size, dims)

    ref = decoder_reference(x, params)

    # f32 path: must match the reference tightly.
    out_f32 = jax.block_until_ready(decoder_forward(x, params, use_bf16=False))
    assert out_f32.shape == (batch, 1), out_f32.shape
    assert jnp.allclose(out_f32, ref, atol=1e-4, rtol=1e-4), (
        float(jnp.max(jnp.abs(out_f32 - ref)))
    )

    # bf16-MXU path (default / fast): loose tolerance vs. the f32 reference.
    out_bf16 = jax.block_until_ready(decoder_forward(x, params, use_bf16=True))
    assert out_bf16.shape == (batch, 1), out_bf16.shape
    assert jnp.allclose(out_bf16, ref, atol=2e-2, rtol=2e-2), (
        float(jnp.max(jnp.abs(out_bf16 - ref)))
    )

    print("KERNEL_OK")
</pallas_src>

<mosaic_0001>
module attributes {stable_mosaic.version = 11 : i64} {
  func.func @_decoder_kernel(%arg0: i32, %arg1: memref<128x16xf32, #tpu.memory_space<vmem>>, %arg2: memref<16x32xf32, #tpu.memory_space<vmem>>, %arg3: memref<1x32xf32, #tpu.memory_space<vmem>>, %arg4: memref<32x32xf32, #tpu.memory_space<vmem>>, %arg5: memref<1x32xf32, #tpu.memory_space<vmem>>, %arg6: memref<32x32xf32, #tpu.memory_space<vmem>>, %arg7: memref<1x32xf32, #tpu.memory_space<vmem>>, %arg8: memref<32x1xf32, #tpu.memory_space<vmem>>, %arg9: memref<1x1xf32, #tpu.memory_space<vmem>>, %arg10: memref<1x128xf32, #tpu.memory_space<vmem>>) attributes {dimension_semantics = [#tpu.dimension_semantics<parallel>], iteration_bounds = array<i64: 1>, scalar_prefetch = 0 : i64, scratch_operands = 0 : i64, tpu.core_type = #tpu.core_type<tc>, window_params = [{transform_indices = @transform_0, window_bounds = array<i64: 128, 16>}, {pipeline_mode = #tpu.pipeline_mode<synchronous>, transform_indices = @transform_1, window_bounds = array<i64: 16, 32>}, {pipeline_mode = #tpu.pipeline_mode<synchronous>, transform_indices = @transform_2, window_bounds = array<i64: 1, 32>}, {pipeline_mode = #tpu.pipeline_mode<synchronous>, transform_indices = @transform_3, window_bounds = array<i64: 32, 32>}, {pipeline_mode = #tpu.pipeline_mode<synchronous>, transform_indices = @transform_4, window_bounds = array<i64: 1, 32>}, {pipeline_mode = #tpu.pipeline_mode<synchronous>, transform_indices = @transform_5, window_bounds = array<i64: 32, 32>}, {pipeline_mode = #tpu.pipeline_mode<synchronous>, transform_indices = @transform_6, window_bounds = array<i64: 1, 32>}, {pipeline_mode = #tpu.pipeline_mode<synchronous>, transform_indices = @transform_7, window_bounds = array<i64: 32, 1>}, {pipeline_mode = #tpu.pipeline_mode<synchronous>, transform_indices = @transform_8, window_bounds = array<i64: 1, 1>}, {transform_indices = @transform_9, window_bounds = array<i64: 1, 128>}]} {
    %c0 = arith.constant 0 : index
    %c0_0 = arith.constant 0 : index
    %0 = vector.load %arg1[%c0, %c0_0] : memref<128x16xf32, #tpu.memory_space<vmem>>, vector<128x16xf32>
    %c0_1 = arith.constant 0 : index
    %c0_2 = arith.constant 0 : index
    %1 = vector.load %arg2[%c0_1, %c0_2] : memref<16x32xf32, #tpu.memory_space<vmem>>, vector<16x32xf32>
    %c0_3 = arith.constant 0 : index
    %c0_4 = arith.constant 0 : index
    %2 = vector.load %arg3[%c0_3, %c0_4] : memref<1x32xf32, #tpu.memory_space<vmem>>, vector<1x32xf32>
    %cst = arith.constant dense<0.000000e+00> : vector<128x32xf32>
    %3 = tpu.matmul %0, %1, %cst {dimension_numbers = #tpu.dot_dimension_numbers<[1], [0], [0], [1], [0, 0, 1, 1], [], []>} : vector<128x16xf32>, vector<16x32xf32>, vector<128x32xf32> -> vector<128x32xf32>
    %4 = vector.broadcast %2 : vector<1x32xf32> to vector<128x32xf32>
    %5 = arith.addf %3, %4 : vector<128x32xf32>
    %6 = math.tanh %5 : vector<128x32xf32>
    %c0_5 = arith.constant 0 : index
    %c0_6 = arith.constant 0 : index
    %7 = vector.load %arg4[%c0_5, %c0_6] : memref<32x32xf32, #tpu.memory_space<vmem>>, vector<32x32xf32>
    %c0_7 = arith.constant 0 : index
    %c0_8 = arith.constant 0 : index
    %8 = vector.load %arg5[%c0_7, %c0_8] : memref<1x32xf32, #tpu.memory_space<vmem>>, vector<1x32xf32>
    %cst_9 = arith.constant dense<0.000000e+00> : vector<128x32xf32>
    %9 = tpu.matmul %6, %7, %cst_9 {dimension_numbers = #tpu.dot_dimension_numbers<[1], [0], [0], [1], [0, 0, 1, 1], [], []>} : vector<128x32xf32>, vector<32x32xf32>, vector<128x32xf32> -> vector<128x32xf32>
    %10 = vector.broadcast %8 : vector<1x32xf32> to vector<128x32xf32>
    %11 = arith.addf %9, %10 : vector<128x32xf32>
    %12 = math.tanh %11 : vector<128x32xf32>
    %c0_10 = arith.constant 0 : index
    %c0_11 = arith.constant 0 : index
    %13 = vector.load %arg6[%c0_10, %c0_11] : memref<32x32xf32, #tpu.memory_space<vmem>>, vector<32x32xf32>
    %c0_12 = arith.constant 0 : index
    %c0_13 = arith.constant 0 : index
    %14 = vector.load %arg7[%c0_12, %c0_13] : memref<1x32xf32, #tpu.memory_space<vmem>>, vector<1x32xf32>
    %cst_14 = arith.constant dense<0.000000e+00> : vector<128x32xf32>
    %15 = tpu.matmul %12, %13, %cst_14 {dimension_numbers = #tpu.dot_dimension_numbers<[1], [0], [0], [1], [0, 0, 1, 1], [], []>} : vector<128x32xf32>, vector<32x32xf32>, vector<128x32xf32> -> vector<128x32xf32>
    %16 = vector.broadcast %14 : vector<1x32xf32> to vector<128x32xf32>
    %17 = arith.addf %15, %16 : vector<128x32xf32>
    %18 = math.tanh %17 : vector<128x32xf32>
    %c0_15 = arith.constant 0 : index
    %c0_16 = arith.constant 0 : index
    %19 = vector.load %arg8[%c0_15, %c0_16] : memref<32x1xf32, #tpu.memory_space<vmem>>, vector<32x1xf32>
    %c0_17 = arith.constant 0 : index
    %c0_18 = arith.constant 0 : index
    %20 = vector.load %arg9[%c0_17, %c0_18] : memref<1x1xf32, #tpu.memory_space<vmem>>, vector<1x1xf32>
    %cst_19 = arith.constant dense<0.000000e+00> : vector<128x1xf32>
    %21 = tpu.matmul %18, %19, %cst_19 {dimension_numbers = #tpu.dot_dimension_numbers<[1], [0], [0], [1], [0, 0, 1, 1], [], []>} : vector<128x32xf32>, vector<32x1xf32>, vector<128x1xf32> -> vector<128x1xf32>
    %22 = vector.broadcast %20 : vector<1x1xf32> to vector<128x1xf32>
    %23 = arith.addf %21, %22 : vector<128x1xf32>
    %24 = vector.shape_cast %23 : vector<128x1xf32> to vector<1x128xf32>
    %c0_20 = arith.constant 0 : index
    %c0_21 = arith.constant 0 : index
    %25 = vector.load %arg10[%c0_20, %c0_21] : memref<1x128xf32, #tpu.memory_space<vmem>>, vector<1x128xf32>
    tpu.vector_store %arg10[%c0_20, %c0_21], %24 {strides = array<i32>} : memref<1x128xf32, #tpu.memory_space<vmem>>, vector<1x128xf32>,
    return
  }
  func.func @transform_0(%arg0: i32) -> (i32, i32) {
    %c0_i32 = arith.constant 0 : i32
    %c0_i32_0 = arith.constant 0 : i32
    return %arg0, %c0_i32 : i32, i32
  }
  func.func @transform_1(%arg0: i32) -> (i32, i32) {
    %c0_i32 = arith.constant 0 : i32
    %c0_i32_0 = arith.constant 0 : i32
    %c0_i32_1 = arith.constant 0 : i32
    return %c0_i32, %c0_i32_0 : i32, i32
  }
  func.func @transform_2(%arg0: i32) -> (i32, i32) {
    %c0_i32 = arith.constant 0 : i32
    %c0_i32_0 = arith.constant 0 : i32
    %c0_i32_1 = arith.constant 0 : i32
    return %c0_i32, %c0_i32_0 : i32, i32
  }
  func.func @transform_3(%arg0: i32) -> (i32, i32) {
    %c0_i32 = arith.constant 0 : i32
    %c0_i32_0 = arith.constant 0 : i32
    %c0_i32_1 = arith.constant 0 : i32
    return %c0_i32, %c0_i32_0 : i32, i32
  }
  func.func @transform_4(%arg0: i32) -> (i32, i32) {
    %c0_i32 = arith.constant 0 : i32
    %c0_i32_0 = arith.constant 0 : i32
    %c0_i32_1 = arith.constant 0 : i32
    return %c0_i32, %c0_i32_0 : i32, i32
  }
  func.func @transform_5(%arg0: i32) -> (i32, i32) {
    %c0_i32 = arith.constant 0 : i32
    %c0_i32_0 = arith.constant 0 : i32
    %c0_i32_1 = arith.constant 0 : i32
    return %c0_i32, %c0_i32_0 : i32, i32
  }
  func.func @transform_6(%arg0: i32) -> (i32, i32) {
    %c0_i32 = arith.constant 0 : i32
    %c0_i32_0 = arith.constant 0 : i32
    %c0_i32_1 = arith.constant 0 : i32
    return %c0_i32, %c0_i32_0 : i32, i32
  }
  func.func @transform_7(%arg0: i32) -> (i32, i32) {
    %c0_i32 = arith.constant 0 : i32
    %c0_i32_0 = arith.constant 0 : i32
    %c0_i32_1 = arith.constant 0 : i32
    return %c0_i32, %c0_i32_0 : i32, i32
  }
  func.func @transform_8(%arg0: i32) -> (i32, i32) {
    %c0_i32 = arith.constant 0 : i32
    %c0_i32_0 = arith.constant 0 : i32
    %c0_i32_1 = arith.constant 0 : i32
    return %c0_i32, %c0_i32_0 : i32, i32
  }
  func.func @transform_9(%arg0: i32) -> (i32, i32) {
    %c0_i32 = arith.constant 0 : i32
    %c0_i32_0 = arith.constant 0 : i32
    return %arg0, %c0_i32 : i32, i32
  }
}

module attributes {stable_mosaic.version = 11 : i64} {
  func.func @_decoder_kernel(%arg0: i32, %arg1: memref<128x16xf32, #tpu.memory_space<vmem>>, %arg2: memref<16x32xf32, #tpu.memory_space<vmem>>, %arg3: memref<1x32xf32, #tpu.memory_space<vmem>>, %arg4: memref<32x32xf32, #tpu.memory_space<vmem>>, %arg5: memref<1x32xf32, #tpu.memory_space<vmem>>, %arg6: memref<32x32xf32, #tpu.memory_space<vmem>>, %arg7: memref<1x32xf32, #tpu.memory_space<vmem>>, %arg8: memref<32x1xf32, #tpu.memory_space<vmem>>, %arg9: memref<1x1xf32, #tpu.memory_space<vmem>>, %arg10: memref<1x128xf32, #tpu.memory_space<vmem>>) attributes {dimension_semantics = [#tpu.dimension_semantics<parallel>], iteration_bounds = array<i64: 1>, scalar_prefetch = 0 : i64, scratch_operands = 0 : i64, tpu.core_type = #tpu.core_type<tc>, window_params = [{transform_indices = @transform_0, window_bounds = array<i64: 128, 16>}, {pipeline_mode = #tpu.pipeline_mode<synchronous>, transform_indices = @transform_1, window_bounds = array<i64: 16, 32>}, {pipeline_mode = #tpu.pipeline_mode<synchronous>, transform_indices = @transform_2, window_bounds = array<i64: 1, 32>}, {pipeline_mode = #tpu.pipeline_mode<synchronous>, transform_indices = @transform_3, window_bounds = array<i64: 32, 32>}, {pipeline_mode = #tpu.pipeline_mode<synchronous>, transform_indices = @transform_4, window_bounds = array<i64: 1, 32>}, {pipeline_mode = #tpu.pipeline_mode<synchronous>, transform_indices = @transform_5, window_bounds = array<i64: 32, 32>}, {pipeline_mode = #tpu.pipeline_mode<synchronous>, transform_indices = @transform_6, window_bounds = array<i64: 1, 32>}, {pipeline_mode = #tpu.pipeline_mode<synchronous>, transform_indices = @transform_7, window_bounds = array<i64: 32, 1>}, {pipeline_mode = #tpu.pipeline_mode<synchronous>, transform_indices = @transform_8, window_bounds = array<i64: 1, 1>}, {transform_indices = @transform_9, window_bounds = array<i64: 1, 128>}]} {
    %c0 = arith.constant 0 : index
    %c0_0 = arith.constant 0 : index
    %0 = vector.load %arg1[%c0, %c0_0] : memref<128x16xf32, #tpu.memory_space<vmem>>, vector<128x16xf32>
    %c0_1 = arith.constant 0 : index
    %c0_2 = arith.constant 0 : index
    %1 = vector.load %arg2[%c0_1, %c0_2] : memref<16x32xf32, #tpu.memory_space<vmem>>, vector<16x32xf32>
    %c0_3 = arith.constant 0 : index
    %c0_4 = arith.constant 0 : index
    %2 = vector.load %arg3[%c0_3, %c0_4] : memref<1x32xf32, #tpu.memory_space<vmem>>, vector<1x32xf32>
    %cst = arith.constant dense<0.000000e+00> : vector<128x32xf32>
    %3 = tpu.matmul %0, %1, %cst {dimension_numbers = #tpu.dot_dimension_numbers<[1], [0], [0], [1], [0, 0, 1, 1], [], []>} : vector<128x16xf32>, vector<16x32xf32>, vector<128x32xf32> -> vector<128x32xf32>
    %4 = vector.broadcast %2 : vector<1x32xf32> to vector<128x32xf32>
    %5 = arith.addf %3, %4 : vector<128x32xf32>
    %6 = math.tanh %5 : vector<128x32xf32>
    %c0_5 = arith.constant 0 : index
    %c0_6 = arith.constant 0 : index
    %7 = vector.load %arg4[%c0_5, %c0_6] : memref<32x32xf32, #tpu.memory_space<vmem>>, vector<32x32xf32>
    %c0_7 = arith.constant 0 : index
    %c0_8 = arith.constant 0 : index
    %8 = vector.load %arg5[%c0_7, %c0_8] : memref<1x32xf32, #tpu.memory_space<vmem>>, vector<1x32xf32>
    %cst_9 = arith.constant dense<0.000000e+00> : vector<128x32xf32>
    %9 = tpu.matmul %6, %7, %cst_9 {dimension_numbers = #tpu.dot_dimension_numbers<[1], [0], [0], [1], [0, 0, 1, 1], [], []>} : vector<128x32xf32>, vector<32x32xf32>, vector<128x32xf32> -> vector<128x32xf32>
    %10 = vector.broadcast %8 : vector<1x32xf32> to vector<128x32xf32>
    %11 = arith.addf %9, %10 : vector<128x32xf32>
    %12 = math.tanh %11 : vector<128x32xf32>
    %c0_10 = arith.constant 0 : index
    %c0_11 = arith.constant 0 : index
    %13 = vector.load %arg6[%c0_10, %c0_11] : memref<32x32xf32, #tpu.memory_space<vmem>>, vector<32x32xf32>
    %c0_12 = arith.constant 0 : index
    %c0_13 = arith.constant 0 : index
    %14 = vector.load %arg7[%c0_12, %c0_13] : memref<1x32xf32, #tpu.memory_space<vmem>>, vector<1x32xf32>
    %cst_14 = arith.constant dense<0.000000e+00> : vector<128x32xf32>
    %15 = tpu.matmul %12, %13, %cst_14 {dimension_numbers = #tpu.dot_dimension_numbers<[1], [0], [0], [1], [0, 0, 1, 1], [], []>} : vector<128x32xf32>, vector<32x32xf32>, vector<128x32xf32> -> vector<128x32xf32>
    %16 = vector.broadcast %14 : vector<1x32xf32> to vector<128x32xf32>
    %17 = arith.addf %15, %16 : vector<128x32xf32>
    %18 = math.tanh %17 : vector<128x32xf32>
    %c0_15 = arith.constant 0 : index
    %c0_16 = arith.constant 0 : index
    %19 = vector.load %arg8[%c0_15, %c0_16] : memref<32x1xf32, #tpu.memory_space<vmem>>, vector<32x1xf32>
    %c0_17 = arith.constant 0 : index
    %c0_18 = arith.constant 0 : index
    %20 = vector.load %arg9[%c0_17, %c0_18] : memref<1x1xf32, #tpu.memory_space<vmem>>, vector<1x1xf32>
    %cst_19 = arith.constant dense<0.000000e+00> : vector<128x1xf32>
    %21 = tpu.matmul %18, %19, %cst_19 {dimension_numbers = #tpu.dot_dimension_numbers<[1], [0], [0], [1], [0, 0, 1, 1], [], []>} : vector<128x32xf32>, vector<32x1xf32>, vector<128x1xf32> -> vector<128x1xf32>
    %22 = vector.broadcast %20 : vector<1x1xf32> to vector<128x1xf32>
    %23 = arith.addf %21, %22 : vector<128x1xf32>
    %24 = vector.shape_cast %23 : vector<128x1xf32> to vector<1x128xf32>
    %c0_20 = arith.constant 0 : index
    %c0_21 = arith.constant 0 : index
    %25 = vector.load %arg10[%c0_20, %c0_21] : memref<1x128xf32, #tpu.memory_space<vmem>>, vector<1x128xf32>
    tpu.vector_store %arg10[%c0_20, %c0_21], %24 {strides = array<i32>} : memref<1x128xf32, #tpu.memory_space<vmem>>, vector<1x128xf32>,
    return
  }
  func.func @transform_0(%arg0: i32) -> (i32, i32) {
    %c0_i32 = arith.constant 0 : i32
    %c0_i32_0 = arith.constant 0 : i32
    return %arg0, %c0_i32 : i32, i32
  }
  func.func @transform_1(%arg0: i32) -> (i32, i32) {
    %c0_i32 = arith.constant 0 : i32
    %c0_i32_0 = arith.constant 0 : i32
    %c0_i32_1 = arith.constant 0 : i32
    return %c0_i32, %c0_i32_0 : i32, i32
  }
  func.func @transform_2(%arg0: i32) -> (i32, i32) {
    %c0_i32 = arith.constant 0 : i32
    %c0_i32_0 = arith.constant 0 : i32
    %c0_i32_1 = arith.constant 0 : i32
    return %c0_i32, %c0_i32_0 : i32, i32
  }
  func.func @transform_3(%arg0: i32) -> (i32, i32) {
    %c0_i32 = arith.constant 0 : i32
    %c0_i32_0 = arith.constant 0 : i32
    %c0_i32_1 = arith.constant 0 : i32
    return %c0_i32, %c0_i32_0 : i32, i32
  }
  func.func @transform_4(%arg0: i32) -> (i32, i32) {
    %c0_i32 = arith.constant 0 : i32
    %c0_i32_0 = arith.constant 0 : i32
    %c0_i32_1 = arith.constant 0 : i32
    return %c0_i32, %c0_i32_0 : i32, i32
  }
  func.func @transform_5(%arg0: i32) -> (i32, i32) {
    %c0_i32 = arith.constant 0 : i32
    %c0_i32_0 = arith.constant 0 : i32
    %c0_i32_1 = arith.constant 0 : i32
    return %c0_i32, %c0_i32_0 : i32, i32
  }
  func.func @transform_6(%arg0: i32) -> (i32, i32) {
    %c0_i32 = arith.constant 0 : i32
    %c0_i32_0 = arith.constant 0 : i32
    %c0_i32_1 = arith.constant 0 : i32
    return %c0_i32, %c0_i32_0 : i32, i32
  }
  func.func @transform_7(%arg0: i32) -> (i32, i32) {
    %c0_i32 = arith.constant 0 : i32
    %c0_i32_0 = arith.constant 0 : i32
    %c0_i32_1 = arith.constant 0 : i32
    return %c0_i32, %c0_i32_0 : i32, i32
  }
  func.func @transform_8(%arg0: i32) -> (i32, i32) {
    %c0_i32 = arith.constant 0 : i32
    %c0_i32_0 = arith.constant 0 : i32
    %c0_i32_1 = arith.constant 0 : i32
    return %c0_i32, %c0_i32_0 : i32, i32
  }
  func.func @transform_9(%arg0: i32) -> (i32, i32) {
    %c0_i32 = arith.constant 0 : i32
    %c0_i32_0 = arith.constant 0 : i32
    return %arg0, %c0_i32 : i32, i32
  }
}

module attributes {stable_mosaic.version = 11 : i64} {
  func.func @_decoder_kernel(%arg0: i32, %arg1: memref<128x16xf32, #tpu.memory_space<vmem>>, %arg2: memref<16x32xf32, #tpu.memory_space<vmem>>, %arg3: memref<1x32xf32, #tpu.memory_space<vmem>>, %arg4: memref<32x32xf32, #tpu.memory_space<vmem>>, %arg5: memref<1x32xf32, #tpu.memory_space<vmem>>, %arg6: memref<32x32xf32, #tpu.memory_space<vmem>>, %arg7: memref<1x32xf32, #tpu.memory_space<vmem>>, %arg8: memref<32x1xf32, #tpu.memory_space<vmem>>, %arg9: memref<1x1xf32, #tpu.memory_space<vmem>>, %arg10: memref<128x1xf32, #tpu.memory_space<vmem>>) attributes {dimension_semantics = [#tpu.dimension_semantics<parallel>], iteration_bounds = array<i64: 1>, scalar_prefetch = 0 : i64, scratch_operands = 0 : i64, tpu.core_type = #tpu.core_type<tc>, window_params = [{transform_indices = @transform_0, window_bounds = array<i64: 128, 16>}, {pipeline_mode = #tpu.pipeline_mode<synchronous>, transform_indices = @transform_1, window_bounds = array<i64: 16, 32>}, {pipeline_mode = #tpu.pipeline_mode<synchronous>, transform_indices = @transform_2, window_bounds = array<i64: 1, 32>}, {pipeline_mode = #tpu.pipeline_mode<synchronous>, transform_indices = @transform_3, window_bounds = array<i64: 32, 32>}, {pipeline_mode = #tpu.pipeline_mode<synchronous>, transform_indices = @transform_4, window_bounds = array<i64: 1, 32>}, {pipeline_mode = #tpu.pipeline_mode<synchronous>, transform_indices = @transform_5, window_bounds = array<i64: 32, 32>}, {pipeline_mode = #tpu.pipeline_mode<synchronous>, transform_indices = @transform_6, window_bounds = array<i64: 1, 32>}, {pipeline_mode = #tpu.pipeline_mode<synchronous>, transform_indices = @transform_7, window_bounds = array<i64: 32, 1>}, {pipeline_mode = #tpu.pipeline_mode<synchronous>, transform_indices = @transform_8, window_bounds = array<i64: 1, 1>}, {transform_indices = @transform_9, window_bounds = array<i64: 128, 1>}]} {
    %c0 = arith.constant 0 : index
    %c0_0 = arith.constant 0 : index
    %0 = vector.load %arg1[%c0, %c0_0] : memref<128x16xf32, #tpu.memory_space<vmem>>, vector<128x16xf32>
    %c0_1 = arith.constant 0 : index
    %c0_2 = arith.constant 0 : index
    %1 = vector.load %arg2[%c0_1, %c0_2] : memref<16x32xf32, #tpu.memory_space<vmem>>, vector<16x32xf32>
    %c0_3 = arith.constant 0 : index
    %c0_4 = arith.constant 0 : index
    %2 = vector.load %arg3[%c0_3, %c0_4] : memref<1x32xf32, #tpu.memory_space<vmem>>, vector<1x32xf32>
    %cst = arith.constant dense<0.000000e+00> : vector<128x32xf32>
    %3 = tpu.matmul %0, %1, %cst {dimension_numbers = #tpu.dot_dimension_numbers<[1], [0], [0], [1], [0, 0, 1, 1], [], []>} : vector<128x16xf32>, vector<16x32xf32>, vector<128x32xf32> -> vector<128x32xf32>
    %4 = vector.broadcast %2 : vector<1x32xf32> to vector<128x32xf32>
    %5 = arith.addf %3, %4 : vector<128x32xf32>
    %6 = math.tanh %5 : vector<128x32xf32>
    %c0_5 = arith.constant 0 : index
    %c0_6 = arith.constant 0 : index
    %7 = vector.load %arg4[%c0_5, %c0_6] : memref<32x32xf32, #tpu.memory_space<vmem>>, vector<32x32xf32>
    %c0_7 = arith.constant 0 : index
    %c0_8 = arith.constant 0 : index
    %8 = vector.load %arg5[%c0_7, %c0_8] : memref<1x32xf32, #tpu.memory_space<vmem>>, vector<1x32xf32>
    %cst_9 = arith.constant dense<0.000000e+00> : vector<128x32xf32>
    %9 = tpu.matmul %6, %7, %cst_9 {dimension_numbers = #tpu.dot_dimension_numbers<[1], [0], [0], [1], [0, 0, 1, 1], [], []>} : vector<128x32xf32>, vector<32x32xf32>, vector<128x32xf32> -> vector<128x32xf32>
    %10 = vector.broadcast %8 : vector<1x32xf32> to vector<128x32xf32>
    %11 = arith.addf %9, %10 : vector<128x32xf32>
    %12 = math.tanh %11 : vector<128x32xf32>
    %c0_10 = arith.constant 0 : index
    %c0_11 = arith.constant 0 : index
    %13 = vector.load %arg6[%c0_10, %c0_11] : memref<32x32xf32, #tpu.memory_space<vmem>>, vector<32x32xf32>
    %c0_12 = arith.constant 0 : index
    %c0_13 = arith.constant 0 : index
    %14 = vector.load %arg7[%c0_12, %c0_13] : memref<1x32xf32, #tpu.memory_space<vmem>>, vector<1x32xf32>
    %cst_14 = arith.constant dense<0.000000e+00> : vector<128x32xf32>
    %15 = tpu.matmul %12, %13, %cst_14 {dimension_numbers = #tpu.dot_dimension_numbers<[1], [0], [0], [1], [0, 0, 1, 1], [], []>} : vector<128x32xf32>, vector<32x32xf32>, vector<128x32xf32> -> vector<128x32xf32>
    %16 = vector.broadcast %14 : vector<1x32xf32> to vector<128x32xf32>
    %17 = arith.addf %15, %16 : vector<128x32xf32>
    %18 = math.tanh %17 : vector<128x32xf32>
    %c0_15 = arith.constant 0 : index
    %c0_16 = arith.constant 0 : index
    %19 = vector.load %arg8[%c0_15, %c0_16] : memref<32x1xf32, #tpu.memory_space<vmem>>, vector<32x1xf32>
    %c0_17 = arith.constant 0 : index
    %c0_18 = arith.constant 0 : index
    %20 = vector.load %arg9[%c0_17, %c0_18] : memref<1x1xf32, #tpu.memory_space<vmem>>, vector<1x1xf32>
    %cst_19 = arith.constant dense<0.000000e+00> : vector<128x1xf32>
    %21 = tpu.matmul %18, %19, %cst_19 {dimension_numbers = #tpu.dot_dimension_numbers<[1], [0], [0], [1], [0, 0, 1, 1], [], []>} : vector<128x32xf32>, vector<32x1xf32>, vector<128x1xf32> -> vector<128x1xf32>
    %22 = vector.broadcast %20 : vector<1x1xf32> to vector<128x1xf32>
    %23 = arith.addf %21, %22 : vector<128x1xf32>
    %c0_20 = arith.constant 0 : index
    %c0_21 = arith.constant 0 : index
    %24 = vector.load %arg10[%c0_20, %c0_21] : memref<128x1xf32, #tpu.memory_space<vmem>>, vector<128x1xf32>
    tpu.vector_store %arg10[%c0_20, %c0_21], %23 {strides = array<i32>} : memref<128x1xf32, #tpu.memory_space<vmem>>, vector<128x1xf32>,
    return
  }
  func.func @transform_0(%arg0: i32) -> (i32, i32) {
    %c0_i32 = arith.constant 0 : i32
    %c0_i32_0 = arith.constant 0 : i32
    return %arg0, %c0_i32 : i32, i32
  }
  func.func @transform_1(%arg0: i32) -> (i32, i32) {
    %c0_i32 = arith.constant 0 : i32
    %c0_i32_0 = arith.constant 0 : i32
    %c0_i32_1 = arith.constant 0 : i32
    return %c0_i32, %c0_i32_0 : i32, i32
  }
  func.func @transform_2(%arg0: i32) -> (i32, i32) {
    %c0_i32 = arith.constant 0 : i32
    %c0_i32_0 = arith.constant 0 : i32
    %c0_i32_1 = arith.constant 0 : i32
    return %c0_i32, %c0_i32_0 : i32, i32
  }
  func.func @transform_3(%arg0: i32) -> (i32, i32) {
    %c0_i32 = arith.constant 0 : i32
    %c0_i32_0 = arith.constant 0 : i32
    %c0_i32_1 = arith.constant 0 : i32
    return %c0_i32, %c0_i32_0 : i32, i32
  }
  func.func @transform_4(%arg0: i32) -> (i32, i32) {
    %c0_i32 = arith.constant 0 : i32
    %c0_i32_0 = arith.constant 0 : i32
    %c0_i32_1 = arith.constant 0 : i32
    return %c0_i32, %c0_i32_0 : i32, i32
  }
  func.func @transform_5(%arg0: i32) -> (i32, i32) {
    %c0_i32 = arith.constant 0 : i32
    %c0_i32_0 = arith.constant 0 : i32
    %c0_i32_1 = arith.constant 0 : i32
    return %c0_i32, %c0_i32_0 : i32, i32
  }
  func.func @transform_6(%arg0: i32) -> (i32, i32) {
    %c0_i32 = arith.constant 0 : i32
    %c0_i32_0 = arith.constant 0 : i32
    %c0_i32_1 = arith.constant 0 : i32
    return %c0_i32, %c0_i32_0 : i32, i32
  }
  func.func @transform_7(%arg0: i32) -> (i32, i32) {
    %c0_i32 = arith.constant 0 : i32
    %c0_i32_0 = arith.constant 0 : i32
    %c0_i32_1 = arith.constant 0 : i32
    return %c0_i32, %c0_i32_0 : i32, i32
  }
  func.func @transform_8(%arg0: i32) -> (i32, i32) {
    %c0_i32 = arith.constant 0 : i32
    %c0_i32_0 = arith.constant 0 : i32
    %c0_i32_1 = arith.constant 0 : i32
    return %c0_i32, %c0_i32_0 : i32, i32
  }
  func.func @transform_9(%arg0: i32) -> (i32, i32) {
    %c0_i32 = arith.constant 0 : i32
    %c0_i32_0 = arith.constant 0 : i32
    return %arg0, %c0_i32 : i32, i32
  }
}

</mosaic_0001>

<llo_original>
// kernel: tpu_custom_call.1
$region0: #{tpu_custom_call.1}
  #allocation0 [shape = 'u32[]', space=smem, size = 0x4, offset = 0x4, fixed_abs, tag = 'smem constant byte address 0x4 - core index']
  #allocation1 [shape = 'u32[144,128]{1,0:T(1,128)}', space=vmem, size = 0x12000, scoped, tag = 'internal scratch']
  #allocation2 [shape = 'f32[1,1]{1,0:T(1,128)S(1)}', space=vmem, size = 0x200, scoped, tag = 'scoped memory for tpu_custom_call.1']
  %s0 = inlined_call_operand.vmem [shape: f32[128,16], index: 0, kind: input, shape index: {}]
  %s1 = inlined_call_operand.vmem [shape: f32[16,32], index: 1, kind: input, shape index: {}]
  %s2 = inlined_call_operand.vmem [shape: f32[1,32], index: 2, kind: input, shape index: {}]
  %s3 = inlined_call_operand.vmem [shape: f32[32,32], index: 3, kind: input, shape index: {}]
  %s4 = inlined_call_operand.vmem [shape: f32[1,32], index: 4, kind: input, shape index: {}]
  %s5 = inlined_call_operand.vmem [shape: f32[32,32], index: 5, kind: input, shape index: {}]
  %s6 = inlined_call_operand.vmem [shape: f32[1,32], index: 6, kind: input, shape index: {}]
  %s7 = inlined_call_operand.vmem [shape: f32[32,1], index: 7, kind: input, shape index: {}]
  %s8 = inlined_call_operand.<no memory space> [shape: f32[1,1], index: 8, kind: input, shape index: {}]
  %s9 = inlined_call_operand.hbm [shape: f32[1,128], index: 9, kind: output, shape index: {}]
  %s10 = sld [smem:[#allocation0]]
  $region46: #{tpu_custom_call.1} parent=0
    _
  %s12 = ssub.s32 1, %s10
  %s13 = scalar_select 0, %s12, %s10
  %v14 = vstv %s8
  %15 = vst [vmem:[#allocation2] sm:$0x1] %v14
  $region1: #{tpu_custom_call.1} parent=0
    #allocation3 [shape = 'u8[512]{0}', space=vmem, size = 0x400, scoped, tag = 'output window, operand 0, single buffered']
    #allocation4 [shape = 's32[1]{0}', space=sflag, size = 0x4, scoped, tag = 'scoped memory for tpu_custom_call.1']
    %16 = vsyncpa [#allocation4], 0
    // Predicated region
    $region2: #{tpu_custom_call.1} parent=1 // pred_check
      _
    $region3: #{tpu_custom_call.1} parent=1 // pred_check_branch
      %18 = sbr.rel (0) target = $region5
    $region4: #{tpu_custom_call.1} parent=1 // pred_region
      _
    $region5: #{tpu_custom_call.1} parent=1 // pred_fallthru
      _
    // Predicated region
    $region6: #{tpu_custom_call.1} parent=1 // pred_check
      _
    $region7: #{tpu_custom_call.1} parent=1 // pred_check_branch
      %20 = sbr.rel (0) target = $region9
    $region8: #{tpu_custom_call.1} parent=1 // pred_region
      _
    $region9: #{tpu_custom_call.1} parent=1 // pred_fallthru
      _
    // Predicated region
    $region10: #{tpu_custom_call.1} parent=1 // pred_check
      _
    $region11: #{tpu_custom_call.1} parent=1 // pred_check_branch
      %22 = sbr.rel (0) target = $region13
    $region12: #{tpu_custom_call.1} parent=1 // pred_region
      _
    $region13: #{tpu_custom_call.1} parent=1 // pred_fallthru
      _
    // Predicated region
    $region14: #{tpu_custom_call.1} parent=1 // pred_check
      _
    $region15: #{tpu_custom_call.1} parent=1 // pred_check_branch
      %24 = sbr.rel (0) target = $region17
    $region16: #{tpu_custom_call.1} parent=1 // pred_region
      _
    $region17: #{tpu_custom_call.1} parent=1 // pred_fallthru
      _
    // Predicated region
    $region18: #{tpu_custom_call.1} parent=1 // pred_check
      _
    $region19: #{tpu_custom_call.1} parent=1 // pred_check_branch
      %26 = sbr.rel (0) target = $region21
    $region20: #{tpu_custom_call.1} parent=1 // pred_region
      _
    $region21: #{tpu_custom_call.1} parent=1 // pred_fallthru
      _
    // Predicated region
    $region22: #{tpu_custom_call.1} parent=1 // pred_check
      _
    $region23: #{tpu_custom_call.1} parent=1 // pred_check_branch
      %28 = sbr.rel (0) target = $region25
    $region24: #{tpu_custom_call.1} parent=1 // pred_region
      _
    $region25: #{tpu_custom_call.1} parent=1 // pred_fallthru
      _
    // Predicated region
    $region26: #{tpu_custom_call.1} parent=1 // pred_check
      _
    $region27: #{tpu_custom_call.1} parent=1 // pred_check_branch
      %30 = sbr.rel (0) target = $region29
    $region28: #{tpu_custom_call.1} parent=1 // pred_region
      _
    $region29: #{tpu_custom_call.1} parent=1 // pred_fallthru
      _
    // Predicated region
    $region30: #{tpu_custom_call.1} parent=1 // pred_check
      _
    $region31: #{tpu_custom_call.1} parent=1 // pred_check_branch
      %32 = sbr.rel (0) target = $region33
    $region32: #{tpu_custom_call.1} parent=1 // pred_region
      _
    $region33: #{tpu_custom_call.1} parent=1 // pred_fallthru
      _
    // Predicated region
    $region34: #{tpu_custom_call.1} parent=1 // pred_check
      _
    $region35: #{tpu_custom_call.1} parent=1 // pred_check_branch
      %34 = sbr.rel (0) target = $region37
    $region36: #{tpu_custom_call.1} parent=1 // pred_region
      _
    $region37: #{tpu_custom_call.1} parent=1 // pred_fallthru
      _
    %v35 = vld [vmem:[%s0] sm:$0xff]
    %v36 = vld [vmem:[%s0 + $0x8] sm:$0xff]
    %v37 = vld [vmem:[%s0 + $0x10] sm:$0xff]
    %v38 = vld [vmem:[%s0 + $0x18] sm:$0xff]
    %v39 = vld [vmem:[%s0 + $0x20] sm:$0xff]
    %v40 = vld [vmem:[%s0 + $0x28] sm:$0xff]
    %v41 = vld [vmem:[%s0 + $0x30] sm:$0xff]
    %v42 = vld [vmem:[%s0 + $0x38] sm:$0xff]
    %v43 = vld [vmem:[%s0 + $0x40] sm:$0xff]
    %v44 = vld [vmem:[%s0 + $0x48] sm:$0xff]
    %v45 = vld [vmem:[%s0 + $0x50] sm:$0xff]
    %v46 = vld [vmem:[%s0 + $0x58] sm:$0xff]
    %v47 = vld [vmem:[%s0 + $0x60] sm:$0xff]
    %v48 = vld [vmem:[%s0 + $0x68] sm:$0xff]
    %v49 = vld [vmem:[%s0 + $0x70] sm:$0xff]
    %v50 = vld [vmem:[%s0 + $0x78] sm:$0xff]
    %v51 = vld [vmem:[%s1] sm:$0xff]
    %v52 = vld [vmem:[%s1 + $0x8] sm:$0xff]
    %v53 = vld [vmem:[%s2] sm:$0x1]
    %v55 = vlaneseq
    %v56 = vshrl.u32 %v55, 7
    %v57 = vsub.s32 0, %v56
    %v58 = vrot.slane %v53, %v57
    %vm60 = vcmask 130048
    %v62 = vsel %vm60, %v35, 0
    %v65 = vsel %vm60, %v36, 0
    %v68 = vsel %vm60, %v37, 0
    %v71 = vsel %vm60, %v38, 0
    %v74 = vsel %vm60, %v39, 0
    %v77 = vsel %vm60, %v40, 0
    %v80 = vsel %vm60, %v41, 0
    %v83 = vsel %vm60, %v42, 0
    %v86 = vsel %vm60, %v43, 0
    %v89 = vsel %vm60, %v44, 0
    %v92 = vsel %vm60, %v45, 0
    %v95 = vsel %vm60, %v46, 0
    %v98 = vsel %vm60, %v47, 0
    %v101 = vsel %vm60, %v48, 0
    %v104 = vsel %vm60, %v49, 0
    %v107 = vsel %vm60, %v50, 0
    %109 = vmatprep.subr.mxu0 0.0
    %110 = vmatpush1.msra.mxu0 0.0
    %111 = vmatprep.subr.mxu0 0.0
    %112 = vmatpush1.msra.mxu0 0.0
    %113 = vmatprep.subr.mxu0 0.0
    %114 = vmatpush1.msra.mxu0 0.0
    %115 = vmatprep.subr.mxu0 0.0
    %116 = vmatpush1.msra.mxu0 0.0
    %117 = vmatprep.subr.mxu0 0.0
    %118 = vmatpush1.msra.mxu0 0.0
    %119 = vmatprep.subr.mxu0 0.0
    %120 = vmatpush1.msra.mxu0 0.0
    %121 = vmatprep.subr.mxu0 0.0
    %122 = vmatpush1.msra.mxu0 0.0
    %123 = vmatprep.subr.mxu0 0.0
    %124 = vmatpush1.msra.mxu0 0.0
    %125 = vmatprep.subr.mxu0 0.0
    %126 = vmatpush1.msra.mxu0 0.0
    %127 = vmatprep.subr.mxu0 0.0
    %128 = vmatpush1.msra.mxu0 0.0
    %129 = vmatprep.subr.mxu0 0.0
    %130 = vmatpush1.msra.mxu0 0.0
    %131 = vmatprep.subr.mxu0 0.0
    %132 = vmatpush1.msra.mxu0 0.0
    %133 = vmatprep.subr.mxu0 0.0
    %134 = vmatpush1.msra.mxu0 0.0
    %135 = vmatprep.subr.mxu0 0.0
    %136 = vmatpush1.msra.mxu0 0.0
    %137 = vmatprep.subr.mxu0 0.0
    %138 = vmatpush1.msra.mxu0 %v52
    %139 = vmatprep.subr.mxu0 0.0
    %140 = vmatpush1.msra.mxu0 %v51
    %141 = vmatprep.subr.mxu0 0.0
    %142 = vmatpush2.msra.mxu0 0.0
    %143 = vmatprep.subr.mxu0 0.0
    %144 = vmatpush2.msra.mxu0 0.0
    %145 = vmatprep.subr.mxu0 0.0
    %146 = vmatpush2.msra.mxu0 0.0
    %147 = vmatprep.subr.mxu0 0.0
    %148 = vmatpush2.msra.mxu0 0.0
    %149 = vmatprep.subr.mxu0 0.0
    %150 = vmatpush2.msra.mxu0 0.0
    %151 = vmatprep.subr.mxu0 0.0
    %152 = vmatpush2.msra.mxu0 0.0
    %153 = vmatprep.subr.mxu0 0.0
    %154 = vmatpush2.msra.mxu0 0.0
    %155 = vmatprep.subr.mxu0 0.0
    %156 = vmatpush2.msra.mxu0 0.0
    %157 = vmatprep.subr.mxu0 0.0
    %158 = vmatpush2.msra.mxu0 0.0
    %159 = vmatprep.subr.mxu0 0.0
    %160 = vmatpush2.msra.mxu0 0.0
    %161 = vmatprep.subr.mxu0 0.0
    %162 = vmatpush2.msra.mxu0 0.0
    %163 = vmatprep.subr.mxu0 0.0
    %164 = vmatpush2.msra.mxu0 0.0
    %165 = vmatprep.subr.mxu0 0.0
    %166 = vmatpush2.msra.mxu0 0.0
    %167 = vmatprep.subr.mxu0 0.0
    %168 = vmatpush2.msra.mxu0 0.0
    %169 = vmatprep.subr.mxu0 0.0
    %170 = vmatpush2.msra.mxu0 0.0
    %171 = vmatprep.subr.mxu0 0.0
    %172 = vmatpush2.msra.mxu0 0.0
    %173 = vmatprep.mubr.f32.mxu0 0.0
    %174 = vmatmul.mubr.f32.gmra.mxu0 %v62
    %v175 = vpop.f32.mrf.mxu0
    %v176 = vadd.f32 %v58, %v175
    %v177 = vpop.f32.mrf.mxu0
    %178 = vmatprep.mubr.f32.mxu0 0.0
    %179 = vmatmul.mubr.f32.gmra.mxu0 %v65
    %v180 = vpop.f32.mrf.mxu0
    %v181 = vadd.f32 %v58, %v180
    %v182 = vpop.f32.mrf.mxu0
    %183 = vmatprep.mubr.f32.mxu0 0.0
    %184 = vmatmul.mubr.f32.gmra.mxu0 %v68
    %v185 = vpop.f32.mrf.mxu0
    %v186 = vadd.f32 %v58, %v185
    %v187 = vpop.f32.mrf.mxu0
    %188 = vmatprep.mubr.f32.mxu0 0.0
    %189 = vmatmul.mubr.f32.gmra.mxu0 %v71
    %v190 = vpop.f32.mrf.mxu0
    %v191 = vadd.f32 %v58, %v190
    %v192 = vpop.f32.mrf.mxu0
    %193 = vmatprep.mubr.f32.mxu0 0.0
    %194 = vmatmul.mubr.f32.gmra.mxu0 %v74
    %v195 = vpop.f32.mrf.mxu0
    %v196 = vadd.f32 %v58, %v195
    %v197 = vpop.f32.mrf.mxu0
    %198 = vmatprep.mubr.f32.mxu0 0.0
    %199 = vmatmul.mubr.f32.gmra.mxu0 %v77
    %v200 = vpop.f32.mrf.mxu0
    %v201 = vadd.f32 %v58, %v200
    %v202 = vpop.f32.mrf.mxu0
    %203 = vmatprep.mubr.f32.mxu0 0.0
    %204 = vmatmul.mubr.f32.gmra.mxu0 %v80
    %v205 = vpop.f32.mrf.mxu0
    %v206 = vadd.f32 %v58, %v205
    %v207 = vpop.f32.mrf.mxu0
    %208 = vmatprep.mubr.f32.mxu0 0.0
    %209 = vmatmul.mubr.f32.gmra.mxu0 %v83
    %v210 = vpop.f32.mrf.mxu0
    %v211 = vadd.f32 %v58, %v210
    %v212 = vpop.f32.mrf.mxu0
    %213 = vmatprep.mubr.f32.mxu0 0.0
    %214 = vmatmul.mubr.f32.gmra.mxu0 %v86
    %v215 = vpop.f32.mrf.mxu0
    %v216 = vadd.f32 %v58, %v215
    %v217 = vpop.f32.mrf.mxu0
    %218 = vmatprep.mubr.f32.mxu0 0.0
    %219 = vmatmul.mubr.f32.gmra.mxu0 %v89
    %v220 = vpop.f32.mrf.mxu0
    %v221 = vadd.f32 %v58, %v220
    %v222 = vpop.f32.mrf.mxu0
    %223 = vmatprep.mubr.f32.mxu0 0.0
    %224 = vmatmul.mubr.f32.gmra.mxu0 %v92
    %v225 = vpop.f32.mrf.mxu0
    %v226 = vadd.f32 %v58, %v225
    %v227 = vpop.f32.mrf.mxu0
    %228 = vmatprep.mubr.f32.mxu0 0.0
    %229 = vmatmul.mubr.f32.gmra.mxu0 %v95
    %v230 = vpop.f32.mrf.mxu0
    %v231 = vadd.f32 %v58, %v230
    %v232 = vpop.f32.mrf.mxu0
    %233 = vmatprep.mubr.f32.mxu0 0.0
    %234 = vmatmul.mubr.f32.gmra.mxu0 %v98
    %v235 = vpop.f32.mrf.mxu0
    %v236 = vadd.f32 %v58, %v235
    %v237 = vpop.f32.mrf.mxu0
    %238 = vmatprep.mubr.f32.mxu0 0.0
    %239 = vmatmul.mubr.f32.gmra.mxu0 %v101
    %v240 = vpop.f32.mrf.mxu0
    %v241 = vadd.f32 %v58, %v240
    %v242 = vpop.f32.mrf.mxu0
    %243 = vmatprep.mubr.f32.mxu0 0.0
    %244 = vmatmul.mubr.f32.gmra.mxu0 %v104
    %v245 = vpop.f32.mrf.mxu0
    %v246 = vadd.f32 %v58, %v245
    %v247 = vpop.f32.mrf.mxu0
    %248 = vmatprep.mubr.f32.mxu0 0.0
    %249 = vmatmul.mubr.f32.gmra.mxu0 %v107
    %v250 = vpop.f32.mrf.mxu0
    %v251 = vadd.f32 %v58, %v250
    %v252 = vpop.f32.mrf.mxu0
    %253 = vdwg.mxu0
    %v254 = vtanh.pop %v176
    %v255 = vtanh.pop %v181
    %v256 = vtanh.pop %v186
    %v257 = vtanh.pop %v191
    %v258 = vtanh.pop %v196
    %v259 = vtanh.pop %v201
    %v260 = vtanh.pop %v206
    %v261 = vtanh.pop %v211
    %v262 = vtanh.pop %v216
    %v263 = vtanh.pop %v221
    %v264 = vtanh.pop %v226
    %v265 = vtanh.pop %v231
    %v266 = vtanh.pop %v236
    %v267 = vtanh.pop %v241
    %v268 = vtanh.pop %v246
    %v269 = vtanh.pop %v251
    %v270 = vld [vmem:[%s3] sm:$0xff]
    %v271 = vld [vmem:[%s3 + $0x8] sm:$0xff]
    %v272 = vld [vmem:[%s3 + $0x10] sm:$0xff]
    %v273 = vld [vmem:[%s3 + $0x18] sm:$0xff]
    %v274 = vld [vmem:[%s4] sm:$0x1]
    %v276 = vlaneseq
    %v277 = vshrl.u32 %v276, 7
    %v278 = vsub.s32 0, %v277
    %v279 = vrot.slane %v274, %v278
    %vm281 = vcmask 261120
    %v283 = vsel %vm281, %v254, 0
    %v286 = vsel %vm281, %v255, 0
    %v289 = vsel %vm281, %v256, 0
    %v292 = vsel %vm281, %v257, 0
    %v295 = vsel %vm281, %v258, 0
    %v298 = vsel %vm281, %v259, 0
    %v301 = vsel %vm281, %v260, 0
    %v304 = vsel %vm281, %v261, 0
    %v307 = vsel %vm281, %v262, 0
    %v310 = vsel %vm281, %v263, 0
    %v313 = vsel %vm281, %v264, 0
    %v316 = vsel %vm281, %v265, 0
    %v319 = vsel %vm281, %v266, 0
    %v322 = vsel %vm281, %v267, 0
    %v325 = vsel %vm281, %v268, 0
    %v328 = vsel %vm281, %v269, 0
    %330 = vmatprep.subr.mxu0 0.0
    %331 = vmatpush1.msra.mxu0 0.0
    %332 = vmatprep.subr.mxu0 0.0
    %333 = vmatpush1.msra.mxu0 0.0
    %334 = vmatprep.subr.mxu0 0.0
    %335 = vmatpush1.msra.mxu0 0.0
    %336 = vmatprep.subr.mxu0 0.0
    %337 = vmatpush1.msra.mxu0 0.0
    %338 = vmatprep.subr.mxu0 0.0
    %339 = vmatpush1.msra.mxu0 0.0
    %340 = vmatprep.subr.mxu0 0.0
    %341 = vmatpush1.msra.mxu0 0.0
    %342 = vmatprep.subr.mxu0 0.0
    %343 = vmatpush1.msra.mxu0 0.0
    %344 = vmatprep.subr.mxu0 0.0
    %345 = vmatpush1.msra.mxu0 0.0
    %346 = vmatprep.subr.mxu0 0.0
    %347 = vmatpush1.msra.mxu0 0.0
    %348 = vmatprep.subr.mxu0 0.0
    %349 = vmatpush1.msra.mxu0 0.0
    %350 = vmatprep.subr.mxu0 0.0
    %351 = vmatpush1.msra.mxu0 0.0
    %352 = vmatprep.subr.mxu0 0.0
    %353 = vmatpush1.msra.mxu0 0.0
    %354 = vmatprep.subr.mxu0 0.0
    %355 = vmatpush1.msra.mxu0 %v273
    %356 = vmatprep.subr.mxu0 0.0
    %357 = vmatpush1.msra.mxu0 %v272
    %358 = vmatprep.subr.mxu0 0.0
    %359 = vmatpush1.msra.mxu0 %v271
    %360 = vmatprep.subr.mxu0 0.0
    %361 = vmatpush1.msra.mxu0 %v270
    %362 = vmatprep.subr.mxu0 0.0
    %363 = vmatpush2.msra.mxu0 0.0
    %364 = vmatprep.subr.mxu0 0.0
    %365 = vmatpush2.msra.mxu0 0.0
    %366 = vmatprep.subr.mxu0 0.0
    %367 = vmatpush2.msra.mxu0 0.0
    %368 = vmatprep.subr.mxu0 0.0
    %369 = vmatpush2.msra.mxu0 0.0
    %370 = vmatprep.subr.mxu0 0.0
    %371 = vmatpush2.msra.mxu0 0.0
    %372 = vmatprep.subr.mxu0 0.0
    %373 = vmatpush2.msra.mxu0 0.0
    %374 = vmatprep.subr.mxu0 0.0
    %375 = vmatpush2.msra.mxu0 0.0
    %376 = vmatprep.subr.mxu0 0.0
    %377 = vmatpush2.msra.mxu0 0.0
    %378 = vmatprep.subr.mxu0 0.0
    %379 = vmatpush2.msra.mxu0 0.0
    %380 = vmatprep.subr.mxu0 0.0
    %381 = vmatpush2.msra.mxu0 0.0
    %382 = vmatprep.subr.mxu0 0.0
    %383 = vmatpush2.msra.mxu0 0.0
    %384 = vmatprep.subr.mxu0 0.0
    %385 = vmatpush2.msra.mxu0 0.0
    %386 = vmatprep.subr.mxu0 0.0
    %387 = vmatpush2.msra.mxu0 0.0
    %388 = vmatprep.subr.mxu0 0.0
    %389 = vmatpush2.msra.mxu0 0.0
    %390 = vmatprep.subr.mxu0 0.0
    %391 = vmatpush2.msra.mxu0 0.0
    %392 = vmatprep.subr.mxu0 0.0
    %393 = vmatpush2.msra.mxu0 0.0
    %394 = vmatprep.mubr.f32.mxu0 0.0
    %395 = vmatmul.mubr.f32.gmra.mxu0 %v283
    %v396 = vpop.f32.mrf.mxu0
    %v397 = vadd.f32 %v279, %v396
    %v398 = vpop.f32.mrf.mxu0
    %399 = vmatprep.mubr.f32.mxu0 0.0
    %400 = vmatmul.mubr.f32.gmra.mxu0 %v286
    %v401 = vpop.f32.mrf.mxu0
    %v402 = vadd.f32 %v279, %v401
    %v403 = vpop.f32.mrf.mxu0
    %404 = vmatprep.mubr.f32.mxu0 0.0
    %405 = vmatmul.mubr.f32.gmra.mxu0 %v289
    %v406 = vpop.f32.mrf.mxu0
    %v407 = vadd.f32 %v279, %v406
    %v408 = vpop.f32.mrf.mxu0
    %409 = vmatprep.mubr.f32.mxu0 0.0
    %410 = vmatmul.mubr.f32.gmra.mxu0 %v292
    %v411 = vpop.f32.mrf.mxu0
    %v412 = vadd.f32 %v279, %v411
    %v413 = vpop.f32.mrf.mxu0
    %414 = vmatprep.mubr.f32.mxu0 0.0
    %415 = vmatmul.mubr.f32.gmra.mxu0 %v295
    %v416 = vpop.f32.mrf.mxu0
    %v417 = vadd.f32 %v279, %v416
    %v418 = vpop.f32.mrf.mxu0
    %419 = vmatprep.mubr.f32.mxu0 0.0
    %420 = vmatmul.mubr.f32.gmra.mxu0 %v298
    %v421 = vpop.f32.mrf.mxu0
    %v422 = vadd.f32 %v279, %v421
    %v423 = vpop.f32.mrf.mxu0
    %424 = vmatprep.mubr.f32.mxu0 0.0
    %425 = vmatmul.mubr.f32.gmra.mxu0 %v301
    %v426 = vpop.f32.mrf.mxu0
    %v427 = vadd.f32 %v279, %v426
    %v428 = vpop.f32.mrf.mxu0
    %429 = vmatprep.mubr.f32.mxu0 0.0
    %430 = vmatmul.mubr.f32.gmra.mxu0 %v304
    %v431 = vpop.f32.mrf.mxu0
    %v432 = vadd.f32 %v279, %v431
    %v433 = vpop.f32.mrf.mxu0
    %434 = vmatprep.mubr.f32.mxu0 0.0
    %435 = vmatmul.mubr.f32.gmra.mxu0 %v307
    %v436 = vpop.f32.mrf.mxu0
    %v437 = vadd.f32 %v279, %v436
    %v438 = vpop.f32.mrf.mxu0
    %439 = vmatprep.mubr.f32.mxu0 0.0
    %440 = vmatmul.mubr.f32.gmra.mxu0 %v310
    %v441 = vpop.f32.mrf.mxu0
    %v442 = vadd.f32 %v279, %v441
    %v443 = vpop.f32.mrf.mxu0
    %444 = vmatprep.mubr.f32.mxu0 0.0
    %445 = vmatmul.mubr.f32.gmra.mxu0 %v313
    %v446 = vpop.f32.mrf.mxu0
    %v447 = vadd.f32 %v279, %v446
    %v448 = vpop.f32.mrf.mxu0
    %449 = vmatprep.mubr.f32.mxu0 0.0
    %450 = vmatmul.mubr.f32.gmra.mxu0 %v316
    %v451 = vpop.f32.mrf.mxu0
    %v452 = vadd.f32 %v279, %v451
    %v453 = vpop.f32.mrf.mxu0
    %454 = vmatprep.mubr.f32.mxu0 0.0
    %455 = vmatmul.mubr.f32.gmra.mxu0 %v319
    %v456 = vpop.f32.mrf.mxu0
    %v457 = vadd.f32 %v279, %v456
    %v458 = vpop.f32.mrf.mxu0
    %459 = vmatprep.mubr.f32.mxu0 0.0
    %460 = vmatmul.mubr.f32.gmra.mxu0 %v322
    %v461 = vpop.f32.mrf.mxu0
    %v462 = vadd.f32 %v279, %v461
    %v463 = vpop.f32.mrf.mxu0
    %464 = vmatprep.mubr.f32.mxu0 0.0
    %465 = vmatmul.mubr.f32.gmra.mxu0 %v325
    %v466 = vpop.f32.mrf.mxu0
    %v467 = vadd.f32 %v279, %v466
    %v468 = vpop.f32.mrf.mxu0
    %469 = vmatprep.mubr.f32.mxu0 0.0
    %470 = vmatmul.mubr.f32.gmra.mxu0 %v328
    %v471 = vpop.f32.mrf.mxu0
    %v472 = vadd.f32 %v279, %v471
    %v473 = vpop.f32.mrf.mxu0
    %474 = vdwg.mxu0
    %v475 = vtanh.pop %v397
    %v476 = vtanh.pop %v402
    %v477 = vtanh.pop %v407
    %v478 = vtanh.pop %v412
    %v479 = vtanh.pop %v417
    %v480 = vtanh.pop %v422
    %v481 = vtanh.pop %v427
    %v482 = vtanh.pop %v432
    %v483 = vtanh.pop %v437
    %v484 = vtanh.pop %v442
    %v485 = vtanh.pop %v447
    %v486 = vtanh.pop %v452
    %v487 = vtanh.pop %v457
    %v488 = vtanh.pop %v462
    %v489 = vtanh.pop %v467
    %v490 = vtanh.pop %v472
    %v491 = vld [vmem:[%s5] sm:$0xff]
    %v492 = vld [vmem:[%s5 + $0x8] sm:$0xff]
    %v493 = vld [vmem:[%s5 + $0x10] sm:$0xff]
    %v494 = vld [vmem:[%s5 + $0x18] sm:$0xff]
    %v495 = vld [vmem:[%s6] sm:$0x1]
    %v497 = vlaneseq
    %v498 = vshrl.u32 %v497, 7
    %v499 = vsub.s32 0, %v498
    %v500 = vrot.slane %v495, %v499
    %v503 = vsel %vm281, %v475, 0
    %v506 = vsel %vm281, %v476, 0
    %v509 = vsel %vm281, %v477, 0
    %v512 = vsel %vm281, %v478, 0
    %v515 = vsel %vm281, %v479, 0
    %v518 = vsel %vm281, %v480, 0
    %v521 = vsel %vm281, %v481, 0
    %v524 = vsel %vm281, %v482, 0
    %v527 = vsel %vm281, %v483, 0
    %v530 = vsel %vm281, %v484, 0
    %v533 = vsel %vm281, %v485, 0
    %v536 = vsel %vm281, %v486, 0
    %v539 = vsel %vm281, %v487, 0
    %v542 = vsel %vm281, %v488, 0
    %v545 = vsel %vm281, %v489, 0
    %v548 = vsel %vm281, %v490, 0
    %550 = vmatprep.subr.mxu0 0.0
    %551 = vmatpush1.msra.mxu0 0.0
    %552 = vmatprep.subr.mxu0 0.0
    %553 = vmatpush1.msra.mxu0 0.0
    %554 = vmatprep.subr.mxu0 0.0
    %555 = vmatpush1.msra.mxu0 0.0
    %556 = vmatprep.subr.mxu0 0.0
    %557 = vmatpush1.msra.mxu0 0.0
    %558 = vmatprep.subr.mxu0 0.0
    %559 = vmatpush1.msra.mxu0 0.0
    %560 = vmatprep.subr.mxu0 0.0
    %561 = vmatpush1.msra.mxu0 0.0
    %562 = vmatprep.subr.mxu0 0.0
    %563 = vmatpush1.msra.mxu0 0.0
    %564 = vmatprep.subr.mxu0 0.0
    %565 = vmatpush1.msra.mxu0 0.0
    %566 = vmatprep.subr.mxu0 0.0
    %567 = vmatpush1.msra.mxu0 0.0
    %568 = vmatprep.subr.mxu0 0.0
    %569 = vmatpush1.msra.mxu0 0.0
    %570 = vmatprep.subr.mxu0 0.0
    %571 = vmatpush1.msra.mxu0 0.0
    %572 = vmatprep.subr.mxu0 0.0
    %573 = vmatpush1.msra.mxu0 0.0
    %574 = vmatprep.subr.mxu0 0.0
    %575 = vmatpush1.msra.mxu0 %v494
    %576 = vmatprep.subr.mxu0 0.0
    %577 = vmatpush1.msra.mxu0 %v493
    %578 = vmatprep.subr.mxu0 0.0
    %579 = vmatpush1.msra.mxu0 %v492
    %580 = vmatprep.subr.mxu0 0.0
    %581 = vmatpush1.msra.mxu0 %v491
    %582 = vmatprep.subr.mxu0 0.0
    %583 = vmatpush2.msra.mxu0 0.0
    %584 = vmatprep.subr.mxu0 0.0
    %585 = vmatpush2.msra.mxu0 0.0
    %586 = vmatprep.subr.mxu0 0.0
    %587 = vmatpush2.msra.mxu0 0.0
    %588 = vmatprep.subr.mxu0 0.0
    %589 = vmatpush2.msra.mxu0 0.0
    %590 = vmatprep.subr.mxu0 0.0
    %591 = vmatpush2.msra.mxu0 0.0
    %592 = vmatprep.subr.mxu0 0.0
    %593 = vmatpush2.msra.mxu0 0.0
    %594 = vmatprep.subr.mxu0 0.0
    %595 = vmatpush2.msra.mxu0 0.0
    %596 = vmatprep.subr.mxu0 0.0
    %597 = vmatpush2.msra.mxu0 0.0
    %598 = vmatprep.subr.mxu0 0.0
    %599 = vmatpush2.msra.mxu0 0.0
    %600 = vmatprep.subr.mxu0 0.0
    %601 = vmatpush2.msra.mxu0 0.0
    %602 = vmatprep.subr.mxu0 0.0
    %603 = vmatpush2.msra.mxu0 0.0
    %604 = vmatprep.subr.mxu0 0.0
    %605 = vmatpush2.msra.mxu0 0.0
    %606 = vmatprep.subr.mxu0 0.0
    %607 = vmatpush2.msra.mxu0 0.0
    %608 = vmatprep.subr.mxu0 0.0
    %609 = vmatpush2.msra.mxu0 0.0
    %610 = vmatprep.subr.mxu0 0.0
    %611 = vmatpush2.msra.mxu0 0.0
    %612 = vmatprep.subr.mxu0 0.0
    %613 = vmatpush2.msra.mxu0 0.0
    %614 = vmatprep.mubr.f32.mxu0 0.0
    %615 = vmatmul.mubr.f32.gmra.mxu0 %v503
    %v616 = vpop.f32.mrf.mxu0
    %v617 = vadd.f32 %v500, %v616
    %v618 = vpop.f32.mrf.mxu0
    %619 = vmatprep.mubr.f32.mxu0 0.0
    %620 = vmatmul.mubr.f32.gmra.mxu0 %v506
    %v621 = vpop.f32.mrf.mxu0
    %v622 = vadd.f32 %v500, %v621
    %v623 = vpop.f32.mrf.mxu0
    %624 = vmatprep.mubr.f32.mxu0 0.0
    %625 = vmatmul.mubr.f32.gmra.mxu0 %v509
    %v626 = vpop.f32.mrf.mxu0
    %v627 = vadd.f32 %v500, %v626
    %v628 = vpop.f32.mrf.mxu0
    %629 = vmatprep.mubr.f32.mxu0 0.0
    %630 = vmatmul.mubr.f32.gmra.mxu0 %v512
    %v631 = vpop.f32.mrf.mxu0
    %v632 = vadd.f32 %v500, %v631
    %v633 = vpop.f32.mrf.mxu0
    %634 = vmatprep.mubr.f32.mxu0 0.0
    %635 = vmatmul.mubr.f32.gmra.mxu0 %v515
    %v636 = vpop.f32.mrf.mxu0
    %v637 = vadd.f32 %v500, %v636
    %v638 = vpop.f32.mrf.mxu0
    %639 = vmatprep.mubr.f32.mxu0 0.0
    %640 = vmatmul.mubr.f32.gmra.mxu0 %v518
    %v641 = vpop.f32.mrf.mxu0
    %v642 = vadd.f32 %v500, %v641
    %v643 = vpop.f32.mrf.mxu0
    %644 = vmatprep.mubr.f32.mxu0 0.0
    %645 = vmatmul.mubr.f32.gmra.mxu0 %v521
    %v646 = vpop.f32.mrf.mxu0
    %v647 = vadd.f32 %v500, %v646
    %v648 = vpop.f32.mrf.mxu0
    %649 = vmatprep.mubr.f32.mxu0 0.0
    %650 = vmatmul.mubr.f32.gmra.mxu0 %v524
    %v651 = vpop.f32.mrf.mxu0
    %v652 = vadd.f32 %v500, %v651
    %v653 = vpop.f32.mrf.mxu0
    %654 = vmatprep.mubr.f32.mxu0 0.0
    %655 = vmatmul.mubr.f32.gmra.mxu0 %v527
    %v656 = vpop.f32.mrf.mxu0
    %v657 = vadd.f32 %v500, %v656
    %v658 = vpop.f32.mrf.mxu0
    %659 = vmatprep.mubr.f32.mxu0 0.0
    %660 = vmatmul.mubr.f32.gmra.mxu0 %v530
    %v661 = vpop.f32.mrf.mxu0
    %v662 = vadd.f32 %v500, %v661
    %v663 = vpop.f32.mrf.mxu0
    %664 = vmatprep.mubr.f32.mxu0 0.0
    %665 = vmatmul.mubr.f32.gmra.mxu0 %v533
    %v666 = vpop.f32.mrf.mxu0
    %v667 = vadd.f32 %v500, %v666
    %v668 = vpop.f32.mrf.mxu0
    %669 = vmatprep.mubr.f32.mxu0 0.0
    %670 = vmatmul.mubr.f32.gmra.mxu0 %v536
    %v671 = vpop.f32.mrf.mxu0
    %v672 = vadd.f32 %v500, %v671
    %v673 = vpop.f32.mrf.mxu0
    %674 = vmatprep.mubr.f32.mxu0 0.0
    %675 = vmatmul.mubr.f32.gmra.mxu0 %v539
    %v676 = vpop.f32.mrf.mxu0
    %v677 = vadd.f32 %v500, %v676
    %v678 = vpop.f32.mrf.mxu0
    %679 = vmatprep.mubr.f32.mxu0 0.0
    %680 = vmatmul.mubr.f32.gmra.mxu0 %v542
    %v681 = vpop.f32.mrf.mxu0
    %v682 = vadd.f32 %v500, %v681
    %v683 = vpop.f32.mrf.mxu0
    %684 = vmatprep.mubr.f32.mxu0 0.0
    %685 = vmatmul.mubr.f32.gmra.mxu0 %v545
    %v686 = vpop.f32.mrf.mxu0
    %v687 = vadd.f32 %v500, %v686
    %v688 = vpop.f32.mrf.mxu0
    %689 = vmatprep.mubr.f32.mxu0 0.0
    %690 = vmatmul.mubr.f32.gmra.mxu0 %v548
    %v691 = vpop.f32.mrf.mxu0
    %v692 = vadd.f32 %v500, %v691
    %v693 = vpop.f32.mrf.mxu0
    %694 = vdwg.mxu0
    %v695 = vtanh.pop %v617
    %v696 = vtanh.pop %v622
    %v697 = vtanh.pop %v627
    %v698 = vtanh.pop %v632
    %v699 = vtanh.pop %v637
    %v700 = vtanh.pop %v642
    %v701 = vtanh.pop %v647
    %v702 = vtanh.pop %v652
    %v703 = vtanh.pop %v657
    %v704 = vtanh.pop %v662
    %v705 = vtanh.pop %v667
    %v706 = vtanh.pop %v672
    %v707 = vtanh.pop %v677
    %v708 = vtanh.pop %v682
    %v709 = vtanh.pop %v687
    %v710 = vtanh.pop %v692
    %v711 = vld [vmem:[%s7] sm:$0xff]
    %v712 = vld [vmem:[%s7 + $0x8] sm:$0xff]
    %v713 = vld [vmem:[%s7 + $0x10] sm:$0xff]
    %v714 = vld [vmem:[%s7 + $0x18] sm:$0xff]
    %v715 = vld [vmem:[#allocation2] sm:$0x1]
    %v717 = vlaneseq
    %v718 = vshrl.u32 %v717, 7
    %v719 = vsub.s32 0, %v718
    %v720 = vrot.slane %v715, %v719
    %v723 = vsel %vm281, %v695, 0
    %v726 = vsel %vm281, %v696, 0
    %v729 = vsel %vm281, %v697, 0
    %v732 = vsel %vm281, %v698, 0
    %v735 = vsel %vm281, %v699, 0
    %v738 = vsel %vm281, %v700, 0
    %v741 = vsel %vm281, %v701, 0
    %v744 = vsel %vm281, %v702, 0
    %v747 = vsel %vm281, %v703, 0
    %v750 = vsel %vm281, %v704, 0
    %v753 = vsel %vm281, %v705, 0
    %v756 = vsel %vm281, %v706, 0
    %v759 = vsel %vm281, %v707, 0
    %v762 = vsel %vm281, %v708, 0
    %v765 = vsel %vm281, %v709, 0
    %v768 = vsel %vm281, %v710, 0
    %770 = vmatprep.subr.mxu0 0.0
    %771 = vmatpush1.msra.mxu0 0.0
    %772 = vmatprep.subr.mxu0 0.0
    %773 = vmatpush1.msra.mxu0 0.0
    %774 = vmatprep.subr.mxu0 0.0
    %775 = vmatpush1.msra.mxu0 0.0
    %776 = vmatprep.subr.mxu0 0.0
    %777 = vmatpush1.msra.mxu0 0.0
    %778 = vmatprep.subr.mxu0 0.0
    %779 = vmatpush1.msra.mxu0 0.0
    %780 = vmatprep.subr.mxu0 0.0
    %781 = vmatpush1.msra.mxu0 0.0
    %782 = vmatprep.subr.mxu0 0.0
    %783 = vmatpush1.msra.mxu0 0.0
    %784 = vmatprep.subr.mxu0 0.0
    %785 = vmatpush1.msra.mxu0 0.0
    %786 = vmatprep.subr.mxu0 0.0
    %787 = vmatpush1.msra.mxu0 0.0
    %788 = vmatprep.subr.mxu0 0.0
    %789 = vmatpush1.msra.mxu0 0.0
    %790 = vmatprep.subr.mxu0 0.0
    %791 = vmatpush1.msra.mxu0 0.0
    %792 = vmatprep.subr.mxu0 0.0
    %793 = vmatpush1.msra.mxu0 0.0
    %794 = vmatprep.subr.mxu0 0.0
    %795 = vmatpush1.msra.mxu0 %v714
    %796 = vmatprep.subr.mxu0 0.0
    %797 = vmatpush1.msra.mxu0 %v713
    %798 = vmatprep.subr.mxu0 0.0
    %799 = vmatpush1.msra.mxu0 %v712
    %800 = vmatprep.subr.mxu0 0.0
    %801 = vmatpush1.msra.mxu0 %v711
    %802 = vmatprep.subr.mxu0 0.0
    %803 = vmatpush2.msra.mxu0 0.0
    %804 = vmatprep.subr.mxu0 0.0
    %805 = vmatpush2.msra.mxu0 0.0
    %806 = vmatprep.subr.mxu0 0.0
    %807 = vmatpush2.msra.mxu0 0.0
    %808 = vmatprep.subr.mxu0 0.0
    %809 = vmatpush2.msra.mxu0 0.0
    %810 = vmatprep.subr.mxu0 0.0
    %811 = vmatpush2.msra.mxu0 0.0
    %812 = vmatprep.subr.mxu0 0.0
    %813 = vmatpush2.msra.mxu0 0.0
    %814 = vmatprep.subr.mxu0 0.0
    %815 = vmatpush2.msra.mxu0 0.0
    %816 = vmatprep.subr.mxu0 0.0
    %817 = vmatpush2.msra.mxu0 0.0
    %818 = vmatprep.subr.mxu0 0.0
    %819 = vmatpush2.msra.mxu0 0.0
    %820 = vmatprep.subr.mxu0 0.0
    %821 = vmatpush2.msra.mxu0 0.0
    %822 = vmatprep.subr.mxu0 0.0
    %823 = vmatpush2.msra.mxu0 0.0
    %824 = vmatprep.subr.mxu0 0.0
    %825 = vmatpush2.msra.mxu0 0.0
    %826 = vmatprep.subr.mxu0 0.0
    %827 = vmatpush2.msra.mxu0 0.0
    %828 = vmatprep.subr.mxu0 0.0
    %829 = vmatpush2.msra.mxu0 0.0
    %830 = vmatprep.subr.mxu0 0.0
    %831 = vmatpush2.msra.mxu0 0.0
    %832 = vmatprep.subr.mxu0 0.0
    %833 = vmatpush2.msra.mxu0 0.0
    %834 = vmatprep.mubr.f32.mxu0 0.0
    %835 = vmatmul.mubr.f32.gmra.mxu0 %v723
    %v836 = vpop.f32.mrf.mxu0
    %v837 = vadd.f32 %v720, %v836
    %v838 = vpop.f32.mrf.mxu0
    %839 = vmatprep.mubr.f32.mxu0 0.0
    %840 = vmatmul.mubr.f32.gmra.mxu0 %v726
    %v841 = vpop.f32.mrf.mxu0
    %v842 = vadd.f32 %v720, %v841
    %v843 = vpop.f32.mrf.mxu0
    %844 = vmatprep.mubr.f32.mxu0 0.0
    %845 = vmatmul.mubr.f32.gmra.mxu0 %v729
    %v846 = vpop.f32.mrf.mxu0
    %v847 = vadd.f32 %v720, %v846
    %v848 = vpop.f32.mrf.mxu0
    %849 = vmatprep.mubr.f32.mxu0 0.0
    %850 = vmatmul.mubr.f32.gmra.mxu0 %v732
    %v851 = vpop.f32.mrf.mxu0
    %v852 = vadd.f32 %v720, %v851
    %v853 = vpop.f32.mrf.mxu0
    %854 = vmatprep.mubr.f32.mxu0 0.0
    %855 = vmatmul.mubr.f32.gmra.mxu0 %v735
    %v856 = vpop.f32.mrf.mxu0
    %v857 = vadd.f32 %v720, %v856
    %v858 = vpop.f32.mrf.mxu0
    %859 = vmatprep.mubr.f32.mxu0 0.0
    %860 = vmatmul.mubr.f32.gmra.mxu0 %v738
    %v861 = vpop.f32.mrf.mxu0
    %v862 = vadd.f32 %v720, %v861
    %v863 = vpop.f32.mrf.mxu0
    %864 = vmatprep.mubr.f32.mxu0 0.0
    %865 = vmatmul.mubr.f32.gmra.mxu0 %v741
    %v866 = vpop.f32.mrf.mxu0
    %v867 = vadd.f32 %v720, %v866
    %v868 = vpop.f32.mrf.mxu0
    %869 = vmatprep.mubr.f32.mxu0 0.0
    %870 = vmatmul.mubr.f32.gmra.mxu0 %v744
    %v871 = vpop.f32.mrf.mxu0
    %v872 = vadd.f32 %v720, %v871
    %v873 = vpop.f32.mrf.mxu0
    %874 = vmatprep.mubr.f32.mxu0 0.0
    %875 = vmatmul.mubr.f32.gmra.mxu0 %v747
    %v876 = vpop.f32.mrf.mxu0
    %v877 = vadd.f32 %v720, %v876
    %v878 = vpop.f32.mrf.mxu0
    %879 = vmatprep.mubr.f32.mxu0 0.0
    %880 = vmatmul.mubr.f32.gmra.mxu0 %v750
    %v881 = vpop.f32.mrf.mxu0
    %v882 = vadd.f32 %v720, %v881
    %v883 = vpop.f32.mrf.mxu0
    %884 = vmatprep.mubr.f32.mxu0 0.0
    %885 = vmatmul.mubr.f32.gmra.mxu0 %v753
    %v886 = vpop.f32.mrf.mxu0
    %v887 = vadd.f32 %v720, %v886
    %v888 = vpop.f32.mrf.mxu0
    %889 = vmatprep.mubr.f32.mxu0 0.0
    %890 = vmatmul.mubr.f32.gmra.mxu0 %v756
    %v891 = vpop.f32.mrf.mxu0
    %v892 = vadd.f32 %v720, %v891
    %v893 = vpop.f32.mrf.mxu0
    %894 = vmatprep.mubr.f32.mxu0 0.0
    %895 = vmatmul.mubr.f32.gmra.mxu0 %v759
    %v896 = vpop.f32.mrf.mxu0
    %v897 = vadd.f32 %v720, %v896
    %v898 = vpop.f32.mrf.mxu0
    %899 = vmatprep.mubr.f32.mxu0 0.0
    %900 = vmatmul.mubr.f32.gmra.mxu0 %v762
    %v901 = vpop.f32.mrf.mxu0
    %v902 = vadd.f32 %v720, %v901
    %v903 = vpop.f32.mrf.mxu0
    %904 = vmatprep.mubr.f32.mxu0 0.0
    %905 = vmatmul.mubr.f32.gmra.mxu0 %v765
    %v906 = vpop.f32.mrf.mxu0
    %v907 = vadd.f32 %v720, %v906
    %v908 = vpop.f32.mrf.mxu0
    %909 = vmatprep.mubr.f32.mxu0 0.0
    %910 = vmatmul.mubr.f32.gmra.mxu0 %v768
    %v911 = vpop.f32.mrf.mxu0
    %v912 = vadd.f32 %v720, %v911
    %v913 = vpop.f32.mrf.mxu0
    %914 = vdwg.mxu0
    %931 = vset.pattern.permute.xlu0 0
    %932 = vperm.xlu0 %931, %v837
    %v933 = vpop.permute.xlu0 %932
    %934 = vset.pattern.permute.xlu0 0
    %935 = vperm.xlu0 %934, %v842
    %v936 = vpop.permute.xlu0 %935
    %937 = vset.pattern.permute.xlu0 0
    %938 = vperm.xlu0 %937, %v847
    %v939 = vpop.permute.xlu0 %938
    %940 = vset.pattern.permute.xlu0 0
    %941 = vperm.xlu0 %940, %v852
    %v942 = vpop.permute.xlu0 %941
    %943 = vset.pattern.permute.xlu0 0
    %944 = vperm.xlu0 %943, %v857
    %v945 = vpop.permute.xlu0 %944
    %946 = vset.pattern.permute.xlu0 0
    %947 = vperm.xlu0 %946, %v862
    %v948 = vpop.permute.xlu0 %947
    %949 = vset.pattern.permute.xlu0 0
    %950 = vperm.xlu0 %949, %v867
    %v951 = vpop.permute.xlu0 %950
    %952 = vset.pattern.permute.xlu0 0
    %953 = vperm.xlu0 %952, %v872
    %v954 = vpop.permute.xlu0 %953
    %955 = vset.pattern.permute.xlu0 0
    %956 = vperm.xlu0 %955, %v877
    %v957 = vpop.permute.xlu0 %956
    %958 = vset.pattern.permute.xlu0 0
    %959 = vperm.xlu0 %958, %v882
    %v960 = vpop.permute.xlu0 %959
    %961 = vset.pattern.permute.xlu0 0
    %962 = vperm.xlu0 %961, %v887
    %v963 = vpop.permute.xlu0 %962
    %964 = vset.pattern.permute.xlu0 0
    %965 = vperm.xlu0 %964, %v892
    %v966 = vpop.permute.xlu0 %965
    %967 = vset.pattern.permute.xlu0 0
    %968 = vperm.xlu0 %967, %v897
    %v969 = vpop.permute.xlu0 %968
    %970 = vset.pattern.permute.xlu0 0
    %971 = vperm.xlu0 %970, %v902
    %v972 = vpop.permute.xlu0 %971
    %973 = vset.pattern.permute.xlu0 0
    %974 = vperm.xlu0 %973, %v907
    %v975 = vpop.permute.xlu0 %974
    %976 = vset.pattern.permute.xlu0 0
    %977 = vperm.xlu0 %976, %v912
    %v978 = vpop.permute.xlu0 %977
    %v979 = vlaneseq
    %v980 = vand.u32 %v979, 127
    %v981 = vlaneseq
    %v982 = vshrl.u32 %v981, 7
    %v983 = vsub.s32 %v980, %v982
    %v984 = vrot.slane %v933, %v983
    %v985 = vadd.s32 %v980, 4294967288
    %v986 = vlaneseq
    %v987 = vshrl.u32 %v986, 7
    %v988 = vsub.s32 %v985, %v987
    %v989 = vrot.slane %v936, %v988
    %vm990 = vcmask 130112
    %v991 = vsel %vm990, %v989, %v984
    %v992 = vadd.s32 %v980, 4294967280
    %v993 = vlaneseq
    %v994 = vshrl.u32 %v993, 7
    %v995 = vsub.s32 %v992, %v994
    %v996 = vrot.slane %v939, %v995
    %vm997 = vcmask 195712
    %v998 = vsel %vm997, %v996, %v991
    %v999 = vadd.s32 %v980, 4294967272
    %v1000 = vlaneseq
    %v1001 = vshrl.u32 %v1000, 7
    %v1002 = vsub.s32 %v999, %v1001
    %v1003 = vrot.slane %v942, %v1002
    %vm1004 = vcmask 261312
    %v1005 = vsel %vm1004, %v1003, %v998
    %v1006 = vadd.s32 %v980, 4294967264
    %v1007 = vlaneseq
    %v1008 = vshrl.u32 %v1007, 7
    %v1009 = vsub.s32 %v1006, %v1008
    %v1010 = vrot.slane %v945, %v1009
    %vm1011 = vcmask 326912
    %v1012 = vsel %vm1011, %v1010, %v1005
    %v1013 = vadd.s32 %v980, 4294967256
    %v1014 = vlaneseq
    %v1015 = vshrl.u32 %v1014, 7
    %v1016 = vsub.s32 %v1013, %v1015
    %v1017 = vrot.slane %v948, %v1016
    %vm1018 = vcmask 392512
    %v1019 = vsel %vm1018, %v1017, %v1012
    %v1020 = vadd.s32 %v980, 4294967248
    %v1021 = vlaneseq
    %v1022 = vshrl.u32 %v1021, 7
    %v1023 = vsub.s32 %v1020, %v1022
    %v1024 = vrot.slane %v951, %v1023
    %vm1025 = vcmask 458112
    %v1026 = vsel %vm1025, %v1024, %v1019
    %v1027 = vadd.s32 %v980, 4294967240
    %v1028 = vlaneseq
    %v1029 = vshrl.u32 %v1028, 7
    %v1030 = vsub.s32 %v1027, %v1029
    %v1031 = vrot.slane %v954, %v1030
    %vm1032 = vcmask 523712
    %v1033 = vsel %vm1032, %v1031, %v1026
    %v1034 = vadd.s32 %v980, 4294967232
    %v1035 = vlaneseq
    %v1036 = vshrl.u32 %v1035, 7
    %v1037 = vsub.s32 %v1034, %v1036
    %v1038 = vrot.slane %v957, %v1037
    %vm1039 = vcmask 589312
    %v1040 = vsel %vm1039, %v1038, %v1033
    %v1041 = vadd.s32 %v980, 4294967224
    %v1042 = vlaneseq
    %v1043 = vshrl.u32 %v1042, 7
    %v1044 = vsub.s32 %v1041, %v1043
    %v1045 = vrot.slane %v960, %v1044
    %vm1046 = vcmask 654912
    %v1047 = vsel %vm1046, %v1045, %v1040
    %v1048 = vadd.s32 %v980, 4294967216
    %v1049 = vlaneseq
    %v1050 = vshrl.u32 %v1049, 7
    %v1051 = vsub.s32 %v1048, %v1050
    %v1052 = vrot.slane %v963, %v1051
    %vm1053 = vcmask 720512
    %v1054 = vsel %vm1053, %v1052, %v1047
    %v1055 = vadd.s32 %v980, 4294967208
    %v1056 = vlaneseq
    %v1057 = vshrl.u32 %v1056, 7
    %v1058 = vsub.s32 %v1055, %v1057
    %v1059 = vrot.slane %v966, %v1058
    %vm1060 = vcmask 786112
    %v1061 = vsel %vm1060, %v1059, %v1054
    %v1062 = vadd.s32 %v980, 4294967200
    %v1063 = vlaneseq
    %v1064 = vshrl.u32 %v1063, 7
    %v1065 = vsub.s32 %v1062, %v1064
    %v1066 = vrot.slane %v969, %v1065
    %vm1067 = vcmask 851712
    %v1068 = vsel %vm1067, %v1066, %v1061
    %v1069 = vadd.s32 %v980, 4294967192
    %v1070 = vlaneseq
    %v1071 = vshrl.u32 %v1070, 7
    %v1072 = vsub.s32 %v1069, %v1071
    %v1073 = vrot.slane %v972, %v1072
    %vm1074 = vcmask 917312
    %v1075 = vsel %vm1074, %v1073, %v1068
    %v1076 = vadd.s32 %v980, 4294967184
    %v1077 = vlaneseq
    %v1078 = vshrl.u32 %v1077, 7
    %v1079 = vsub.s32 %v1076, %v1078
    %v1080 = vrot.slane %v975, %v1079
    %vm1081 = vcmask 982912
    %v1082 = vsel %vm1081, %v1080, %v1075
    %v1083 = vadd.s32 %v980, 4294967176
    %v1084 = vlaneseq
    %v1085 = vshrl.u32 %v1084, 7
    %v1086 = vsub.s32 %v1083, %v1085
    %v1087 = vrot.slane %v978, %v1086
    %vm1088 = vcmask 1048512
    %v1089 = vsel %vm1088, %v1087, %v1082
    %1091 = vst [vmem:[#allocation3] sm:$0x1] %v1089
    // Predicated region
    $region38: #{tpu_custom_call.1} parent=1 // pred_check
      _
    $region39: #{tpu_custom_call.1} parent=1 // pred_check_branch
      %1093 = sbr.rel (0) target = $region41
    $region40: #{tpu_custom_call.1} parent=1 // pred_region
      %s1095 = ssub.s32 16, 16
      %1096 = vsyncadd [#allocation4], %s1095
      %s1098 = sshll.u32 [#allocation3], 4
      %s1099 = int_to_ptr.vmem [resolvable:$true] %s1098
      %1101 = dma.vmem_to_hbm [thread:$0]  %s1099, 16, %s9, [#allocation4]
    $region41: #{tpu_custom_call.1} parent=1 // pred_fallthru
      _
    // Predicated region
    $region42: #{tpu_custom_call.1} parent=1 // pred_check
      _
    $region43: #{tpu_custom_call.1} parent=1 // pred_check_branch
      %1103 = sbr.rel (0) target = $region45
    $region44: #{tpu_custom_call.1} parent=1 // pred_region
      %1104 = dma.done [#allocation4], 16
    $region45: #{tpu_custom_call.1} parent=1 // pred_fallthru
      _
    %1105 = vsyncpa [#allocation4], 1

// kernel: tpu_custom_call.1
$region0: #{tpu_custom_call.1}
  #allocation0 [shape = 'u32[]', space=smem, size = 0x4, offset = 0x4, fixed_abs, tag = 'smem constant byte address 0x4 - core index']
  #allocation1 [shape = 'u32[144,128]{1,0:T(1,128)}', space=vmem, size = 0x12000, scoped, tag = 'internal scratch']
  #allocation2 [shape = 'f32[1,1]{1,0:T(1,128)S(1)}', space=vmem, size = 0x200, scoped, tag = 'scoped memory for tpu_custom_call.1']
  %s0 = inlined_call_operand.vmem [shape: f32[128,16], index: 0, kind: input, shape index: {}]
  %s1 = inlined_call_operand.vmem [shape: f32[16,32], index: 1, kind: input, shape index: {}]
  %s2 = inlined_call_operand.vmem [shape: f32[1,32], index: 2, kind: input, shape index: {}]
  %s3 = inlined_call_operand.vmem [shape: f32[32,32], index: 3, kind: input, shape index: {}]
  %s4 = inlined_call_operand.vmem [shape: f32[1,32], index: 4, kind: input, shape index: {}]
  %s5 = inlined_call_operand.vmem [shape: f32[32,32], index: 5, kind: input, shape index: {}]
  %s6 = inlined_call_operand.vmem [shape: f32[1,32], index: 6, kind: input, shape index: {}]
  %s7 = inlined_call_operand.vmem [shape: f32[32,1], index: 7, kind: input, shape index: {}]
  %s8 = inlined_call_operand.<no memory space> [shape: f32[1,1], index: 8, kind: input, shape index: {}]
  %s9 = inlined_call_operand.hbm [shape: f32[1,128], index: 9, kind: output, shape index: {}]
  %s10 = sld [smem:[#allocation0]]
  $region46: #{tpu_custom_call.1} parent=0
    _
  %s12 = ssub.s32 1, %s10
  %s13 = scalar_select 0, %s12, %s10
  %v14 = vstv %s8
  %15 = vst [vmem:[#allocation2] sm:$0x1] %v14
  $region1: #{tpu_custom_call.1} parent=0
    #allocation3 [shape = 'u8[512]{0}', space=vmem, size = 0x400, scoped, tag = 'output window, operand 0, single buffered']
    #allocation4 [shape = 's32[1]{0}', space=sflag, size = 0x4, scoped, tag = 'scoped memory for tpu_custom_call.1']
    %16 = vsyncpa [#allocation4], 0
    // Predicated region
    $region2: #{tpu_custom_call.1} parent=1 // pred_check
      _
    $region3: #{tpu_custom_call.1} parent=1 // pred_check_branch
      %18 = sbr.rel (0) target = $region5
    $region4: #{tpu_custom_call.1} parent=1 // pred_region
      _
    $region5: #{tpu_custom_call.1} parent=1 // pred_fallthru
      _
    // Predicated region
    $region6: #{tpu_custom_call.1} parent=1 // pred_check
      _
    $region7: #{tpu_custom_call.1} parent=1 // pred_check_branch
      %20 = sbr.rel (0) target = $region9
    $region8: #{tpu_custom_call.1} parent=1 // pred_region
      _
    $region9: #{tpu_custom_call.1} parent=1 // pred_fallthru
      _
    // Predicated region
    $region10: #{tpu_custom_call.1} parent=1 // pred_check
      _
    $region11: #{tpu_custom_call.1} parent=1 // pred_check_branch
      %22 = sbr.rel (0) target = $region13
    $region12: #{tpu_custom_call.1} parent=1 // pred_region
      _
    $region13: #{tpu_custom_call.1} parent=1 // pred_fallthru
      _
    // Predicated region
    $region14: #{tpu_custom_call.1} parent=1 // pred_check
      _
    $region15: #{tpu_custom_call.1} parent=1 // pred_check_branch
      %24 = sbr.rel (0) target = $region17
    $region16: #{tpu_custom_call.1} parent=1 // pred_region
      _
    $region17: #{tpu_custom_call.1} parent=1 // pred_fallthru
      _
    // Predicated region
    $region18: #{tpu_custom_call.1} parent=1 // pred_check
      _
    $region19: #{tpu_custom_call.1} parent=1 // pred_check_branch
      %26 = sbr.rel (0) target = $region21
    $region20: #{tpu_custom_call.1} parent=1 // pred_region
      _
    $region21: #{tpu_custom_call.1} parent=1 // pred_fallthru
      _
    // Predicated region
    $region22: #{tpu_custom_call.1} parent=1 // pred_check
      _
    $region23: #{tpu_custom_call.1} parent=1 // pred_check_branch
      %28 = sbr.rel (0) target = $region25
    $region24: #{tpu_custom_call.1} parent=1 // pred_region
      _
    $region25: #{tpu_custom_call.1} parent=1 // pred_fallthru
      _
    // Predicated region
    $region26: #{tpu_custom_call.1} parent=1 // pred_check
      _
    $region27: #{tpu_custom_call.1} parent=1 // pred_check_branch
      %30 = sbr.rel (0) target = $region29
    $region28: #{tpu_custom_call.1} parent=1 // pred_region
      _
    $region29: #{tpu_custom_call.1} parent=1 // pred_fallthru
      _
    // Predicated region
    $region30: #{tpu_custom_call.1} parent=1 // pred_check
      _
    $region31: #{tpu_custom_call.1} parent=1 // pred_check_branch
      %32 = sbr.rel (0) target = $region33
    $region32: #{tpu_custom_call.1} parent=1 // pred_region
      _
    $region33: #{tpu_custom_call.1} parent=1 // pred_fallthru
      _
    // Predicated region
    $region34: #{tpu_custom_call.1} parent=1 // pred_check
      _
    $region35: #{tpu_custom_call.1} parent=1 // pred_check_branch
      %34 = sbr.rel (0) target = $region37
    $region36: #{tpu_custom_call.1} parent=1 // pred_region
      _
    $region37: #{tpu_custom_call.1} parent=1 // pred_fallthru
      _
    %v35 = vld [vmem:[%s0] sm:$0xff]
    %v36 = vld [vmem:[%s0 + $0x8] sm:$0xff]
    %v37 = vld [vmem:[%s0 + $0x10] sm:$0xff]
    %v38 = vld [vmem:[%s0 + $0x18] sm:$0xff]
    %v39 = vld [vmem:[%s0 + $0x20] sm:$0xff]
    %v40 = vld [vmem:[%s0 + $0x28] sm:$0xff]
    %v41 = vld [vmem:[%s0 + $0x30] sm:$0xff]
    %v42 = vld [vmem:[%s0 + $0x38] sm:$0xff]
    %v43 = vld [vmem:[%s0 + $0x40] sm:$0xff]
    %v44 = vld [vmem:[%s0 + $0x48] sm:$0xff]
    %v45 = vld [vmem:[%s0 + $0x50] sm:$0xff]
    %v46 = vld [vmem:[%s0 + $0x58] sm:$0xff]
    %v47 = vld [vmem:[%s0 + $0x60] sm:$0xff]
    %v48 = vld [vmem:[%s0 + $0x68] sm:$0xff]
    %v49 = vld [vmem:[%s0 + $0x70] sm:$0xff]
    %v50 = vld [vmem:[%s0 + $0x78] sm:$0xff]
    %v51 = vld [vmem:[%s1] sm:$0xff]
    %v52 = vld [vmem:[%s1 + $0x8] sm:$0xff]
    %v53 = vld [vmem:[%s2] sm:$0x1]
    %v55 = vlaneseq
    %v56 = vshrl.u32 %v55, 7
    %v57 = vsub.s32 0, %v56
    %v58 = vrot.slane %v53, %v57
    %vm60 = vcmask 130048
    %v62 = vsel %vm60, %v35, 0
    %v65 = vsel %vm60, %v36, 0
    %v68 = vsel %vm60, %v37, 0
    %v71 = vsel %vm60, %v38, 0
    %v74 = vsel %vm60, %v39, 0
    %v77 = vsel %vm60, %v40, 0
    %v80 = vsel %vm60, %v41, 0
    %v83 = vsel %vm60, %v42, 0
    %v86 = vsel %vm60, %v43, 0
    %v89 = vsel %vm60, %v44, 0
    %v92 = vsel %vm60, %v45, 0
    %v95 = vsel %vm60, %v46, 0
    %v98 = vsel %vm60, %v47, 0
    %v101 = vsel %vm60, %v48, 0
    %v104 = vsel %vm60, %v49, 0
    %v107 = vsel %vm60, %v50, 0
    %109 = vmatprep.subr.mxu0 0.0
    %110 = vmatpush1.msra.mxu0 0.0
    %111 = vmatprep.subr.mxu0 0.0
    %112 = vmatpush1.msra.mxu0 0.0
    %113 = vmatprep.subr.mxu0 0.0
    %114 = vmatpush1.msra.mxu0 0.0
    %115 = vmatprep.subr.mxu0 0.0
    %116 = vmatpush1.msra.mxu0 0.0
    %117 = vmatprep.subr.mxu0 0.0
    %118 = vmatpush1.msra.mxu0 0.0
    %119 = vmatprep.subr.mxu0 0.0
    %120 = vmatpush1.msra.mxu0 0.0
    %121 = vmatprep.subr.mxu0 0.0
    %122 = vmatpush1.msra.mxu0 0.0
    %123 = vmatprep.subr.mxu0 0.0
    %124 = vmatpush1.msra.mxu0 0.0
    %125 = vmatprep.subr.mxu0 0.0
    %126 = vmatpush1.msra.mxu0 0.0
    %127 = vmatprep.subr.mxu0 0.0
    %128 = vmatpush1.msra.mxu0 0.0
    %129 = vmatprep.subr.mxu0 0.0
    %130 = vmatpush1.msra.mxu0 0.0
    %131 = vmatprep.subr.mxu0 0.0
    %132 = vmatpush1.msra.mxu0 0.0
    %133 = vmatprep.subr.mxu0 0.0
    %134 = vmatpush1.msra.mxu0 0.0
    %135 = vmatprep.subr.mxu0 0.0
    %136 = vmatpush1.msra.mxu0 0.0
    %137 = vmatprep.subr.mxu0 0.0
    %138 = vmatpush1.msra.mxu0 %v52
    %139 = vmatprep.subr.mxu0 0.0
    %140 = vmatpush1.msra.mxu0 %v51
    %141 = vmatprep.subr.mxu0 0.0
    %142 = vmatpush2.msra.mxu0 0.0
    %143 = vmatprep.subr.mxu0 0.0
    %144 = vmatpush2.msra.mxu0 0.0
    %145 = vmatprep.subr.mxu0 0.0
    %146 = vmatpush2.msra.mxu0 0.0
    %147 = vmatprep.subr.mxu0 0.0
    %148 = vmatpush2.msra.mxu0 0.0
    %149 = vmatprep.subr.mxu0 0.0
    %150 = vmatpush2.msra.mxu0 0.0
    %151 = vmatprep.subr.mxu0 0.0
    %152 = vmatpush2.msra.mxu0 0.0
    %153 = vmatprep.subr.mxu0 0.0
    %154 = vmatpush2.msra.mxu0 0.0
    %155 = vmatprep.subr.mxu0 0.0
    %156 = vmatpush2.msra.mxu0 0.0
    %157 = vmatprep.subr.mxu0 0.0
    %158 = vmatpush2.msra.mxu0 0.0
    %159 = vmatprep.subr.mxu0 0.0
    %160 = vmatpush2.msra.mxu0 0.0
    %161 = vmatprep.subr.mxu0 0.0
    %162 = vmatpush2.msra.mxu0 0.0
    %163 = vmatprep.subr.mxu0 0.0
    %164 = vmatpush2.msra.mxu0 0.0
    %165 = vmatprep.subr.mxu0 0.0
    %166 = vmatpush2.msra.mxu0 0.0
    %167 = vmatprep.subr.mxu0 0.0
    %168 = vmatpush2.msra.mxu0 0.0
    %169 = vmatprep.subr.mxu0 0.0
    %170 = vmatpush2.msra.mxu0 0.0
    %171 = vmatprep.subr.mxu0 0.0
    %172 = vmatpush2.msra.mxu0 0.0
    %173 = vmatprep.mubr.f32.mxu0 0.0
    %174 = vmatmul.mubr.f32.gmra.mxu0 %v62
    %v175 = vpop.f32.mrf.mxu0
    %v176 = vadd.f32 %v58, %v175
    %v177 = vpop.f32.mrf.mxu0
    %178 = vmatprep.mubr.f32.mxu0 0.0
    %179 = vmatmul.mubr.f32.gmra.mxu0 %v65
    %v180 = vpop.f32.mrf.mxu0
    %v181 = vadd.f32 %v58, %v180
    %v182 = vpop.f32.mrf.mxu0
    %183 = vmatprep.mubr.f32.mxu0 0.0
    %184 = vmatmul.mubr.f32.gmra.mxu0 %v68
    %v185 = vpop.f32.mrf.mxu0
    %v186 = vadd.f32 %v58, %v185
    %v187 = vpop.f32.mrf.mxu0
    %188 = vmatprep.mubr.f32.mxu0 0.0
    %189 = vmatmul.mubr.f32.gmra.mxu0 %v71
    %v190 = vpop.f32.mrf.mxu0
    %v191 = vadd.f32 %v58, %v190
    %v192 = vpop.f32.mrf.mxu0
    %193 = vmatprep.mubr.f32.mxu0 0.0
    %194 = vmatmul.mubr.f32.gmra.mxu0 %v74
    %v195 = vpop.f32.mrf.mxu0
    %v196 = vadd.f32 %v58, %v195
    %v197 = vpop.f32.mrf.mxu0
    %198 = vmatprep.mubr.f32.mxu0 0.0
    %199 = vmatmul.mubr.f32.gmra.mxu0 %v77
    %v200 = vpop.f32.mrf.mxu0
    %v201 = vadd.f32 %v58, %v200
    %v202 = vpop.f32.mrf.mxu0
    %203 = vmatprep.mubr.f32.mxu0 0.0
    %204 = vmatmul.mubr.f32.gmra.mxu0 %v80
    %v205 = vpop.f32.mrf.mxu0
    %v206 = vadd.f32 %v58, %v205
    %v207 = vpop.f32.mrf.mxu0
    %208 = vmatprep.mubr.f32.mxu0 0.0
    %209 = vmatmul.mubr.f32.gmra.mxu0 %v83
    %v210 = vpop.f32.mrf.mxu0
    %v211 = vadd.f32 %v58, %v210
    %v212 = vpop.f32.mrf.mxu0
    %213 = vmatprep.mubr.f32.mxu0 0.0
    %214 = vmatmul.mubr.f32.gmra.mxu0 %v86
    %v215 = vpop.f32.mrf.mxu0
    %v216 = vadd.f32 %v58, %v215
    %v217 = vpop.f32.mrf.mxu0
    %218 = vmatprep.mubr.f32.mxu0 0.0
    %219 = vmatmul.mubr.f32.gmra.mxu0 %v89
    %v220 = vpop.f32.mrf.mxu0
    %v221 = vadd.f32 %v58, %v220
    %v222 = vpop.f32.mrf.mxu0
    %223 = vmatprep.mubr.f32.mxu0 0.0
    %224 = vmatmul.mubr.f32.gmra.mxu0 %v92
    %v225 = vpop.f32.mrf.mxu0
    %v226 = vadd.f32 %v58, %v225
    %v227 = vpop.f32.mrf.mxu0
    %228 = vmatprep.mubr.f32.mxu0 0.0
    %229 = vmatmul.mubr.f32.gmra.mxu0 %v95
    %v230 = vpop.f32.mrf.mxu0
    %v231 = vadd.f32 %v58, %v230
    %v232 = vpop.f32.mrf.mxu0
    %233 = vmatprep.mubr.f32.mxu0 0.0
    %234 = vmatmul.mubr.f32.gmra.mxu0 %v98
    %v235 = vpop.f32.mrf.mxu0
    %v236 = vadd.f32 %v58, %v235
    %v237 = vpop.f32.mrf.mxu0
    %238 = vmatprep.mubr.f32.mxu0 0.0
    %239 = vmatmul.mubr.f32.gmra.mxu0 %v101
    %v240 = vpop.f32.mrf.mxu0
    %v241 = vadd.f32 %v58, %v240
    %v242 = vpop.f32.mrf.mxu0
    %243 = vmatprep.mubr.f32.mxu0 0.0
    %244 = vmatmul.mubr.f32.gmra.mxu0 %v104
    %v245 = vpop.f32.mrf.mxu0
    %v246 = vadd.f32 %v58, %v245
    %v247 = vpop.f32.mrf.mxu0
    %248 = vmatprep.mubr.f32.mxu0 0.0
    %249 = vmatmul.mubr.f32.gmra.mxu0 %v107
    %v250 = vpop.f32.mrf.mxu0
    %v251 = vadd.f32 %v58, %v250
    %v252 = vpop.f32.mrf.mxu0
    %253 = vdwg.mxu0
    %v254 = vtanh.pop %v176
    %v255 = vtanh.pop %v181
    %v256 = vtanh.pop %v186
    %v257 = vtanh.pop %v191
    %v258 = vtanh.pop %v196
    %v259 = vtanh.pop %v201
    %v260 = vtanh.pop %v206
    %v261 = vtanh.pop %v211
    %v262 = vtanh.pop %v216
    %v263 = vtanh.pop %v221
    %v264 = vtanh.pop %v226
    %v265 = vtanh.pop %v231
    %v266 = vtanh.pop %v236
    %v267 = vtanh.pop %v241
    %v268 = vtanh.pop %v246
    %v269 = vtanh.pop %v251
    %v270 = vld [vmem:[%s3] sm:$0xff]
    %v271 = vld [vmem:[%s3 + $0x8] sm:$0xff]
    %v272 = vld [vmem:[%s3 + $0x10] sm:$0xff]
    %v273 = vld [vmem:[%s3 + $0x18] sm:$0xff]
    %v274 = vld [vmem:[%s4] sm:$0x1]
    %v276 = vlaneseq
    %v277 = vshrl.u32 %v276, 7
    %v278 = vsub.s32 0, %v277
    %v279 = vrot.slane %v274, %v278
    %vm281 = vcmask 261120
    %v283 = vsel %vm281, %v254, 0
    %v286 = vsel %vm281, %v255, 0
    %v289 = vsel %vm281, %v256, 0
    %v292 = vsel %vm281, %v257, 0
    %v295 = vsel %vm281, %v258, 0
    %v298 = vsel %vm281, %v259, 0
    %v301 = vsel %vm281, %v260, 0
    %v304 = vsel %vm281, %v261, 0
    %v307 = vsel %vm281, %v262, 0
    %v310 = vsel %vm281, %v263, 0
    %v313 = vsel %vm281, %v264, 0
    %v316 = vsel %vm281, %v265, 0
    %v319 = vsel %vm281, %v266, 0
    %v322 = vsel %vm281, %v267, 0
    %v325 = vsel %vm281, %v268, 0
    %v328 = vsel %vm281, %v269, 0
    %330 = vmatprep.subr.mxu0 0.0
    %331 = vmatpush1.msra.mxu0 0.0
    %332 = vmatprep.subr.mxu0 0.0
    %333 = vmatpush1.msra.mxu0 0.0
    %334 = vmatprep.subr.mxu0 0.0
    %335 = vmatpush1.msra.mxu0 0.0
    %336 = vmatprep.subr.mxu0 0.0
    %337 = vmatpush1.msra.mxu0 0.0
    %338 = vmatprep.subr.mxu0 0.0
    %339 = vmatpush1.msra.mxu0 0.0
    %340 = vmatprep.subr.mxu0 0.0
    %341 = vmatpush1.msra.mxu0 0.0
    %342 = vmatprep.subr.mxu0 0.0
    %343 = vmatpush1.msra.mxu0 0.0
    %344 = vmatprep.subr.mxu0 0.0
    %345 = vmatpush1.msra.mxu0 0.0
    %346 = vmatprep.subr.mxu0 0.0
    %347 = vmatpush1.msra.mxu0 0.0
    %348 = vmatprep.subr.mxu0 0.0
    %349 = vmatpush1.msra.mxu0 0.0
    %350 = vmatprep.subr.mxu0 0.0
    %351 = vmatpush1.msra.mxu0 0.0
    %352 = vmatprep.subr.mxu0 0.0
    %353 = vmatpush1.msra.mxu0 0.0
    %354 = vmatprep.subr.mxu0 0.0
    %355 = vmatpush1.msra.mxu0 %v273
    %356 = vmatprep.subr.mxu0 0.0
    %357 = vmatpush1.msra.mxu0 %v272
    %358 = vmatprep.subr.mxu0 0.0
    %359 = vmatpush1.msra.mxu0 %v271
    %360 = vmatprep.subr.mxu0 0.0
    %361 = vmatpush1.msra.mxu0 %v270
    %362 = vmatprep.subr.mxu0 0.0
    %363 = vmatpush2.msra.mxu0 0.0
    %364 = vmatprep.subr.mxu0 0.0
    %365 = vmatpush2.msra.mxu0 0.0
    %366 = vmatprep.subr.mxu0 0.0
    %367 = vmatpush2.msra.mxu0 0.0
    %368 = vmatprep.subr.mxu0 0.0
    %369 = vmatpush2.msra.mxu0 0.0
    %370 = vmatprep.subr.mxu0 0.0
    %371 = vmatpush2.msra.mxu0 0.0
    %372 = vmatprep.subr.mxu0 0.0
    %373 = vmatpush2.msra.mxu0 0.0
    %374 = vmatprep.subr.mxu0 0.0
    %375 = vmatpush2.msra.mxu0 0.0
    %376 = vmatprep.subr.mxu0 0.0
    %377 = vmatpush2.msra.mxu0 0.0
    %378 = vmatprep.subr.mxu0 0.0
    %379 = vmatpush2.msra.mxu0 0.0
    %380 = vmatprep.subr.mxu0 0.0
    %381 = vmatpush2.msra.mxu0 0.0
    %382 = vmatprep.subr.mxu0 0.0
    %383 = vmatpush2.msra.mxu0 0.0
    %384 = vmatprep.subr.mxu0 0.0
    %385 = vmatpush2.msra.mxu0 0.0
    %386 = vmatprep.subr.mxu0 0.0
    %387 = vmatpush2.msra.mxu0 0.0
    %388 = vmatprep.subr.mxu0 0.0
    %389 = vmatpush2.msra.mxu0 0.0
    %390 = vmatprep.subr.mxu0 0.0
    %391 = vmatpush2.msra.mxu0 0.0
    %392 = vmatprep.subr.mxu0 0.0
    %393 = vmatpush2.msra.mxu0 0.0
    %394 = vmatprep.mubr.f32.mxu0 0.0
    %395 = vmatmul.mubr.f32.gmra.mxu0 %v283
    %v396 = vpop.f32.mrf.mxu0
    %v397 = vadd.f32 %v279, %v396
    %v398 = vpop.f32.mrf.mxu0
    %399 = vmatprep.mubr.f32.mxu0 0.0
    %400 = vmatmul.mubr.f32.gmra.mxu0 %v286
    %v401 = vpop.f32.mrf.mxu0
    %v402 = vadd.f32 %v279, %v401
    %v403 = vpop.f32.mrf.mxu0
    %404 = vmatprep.mubr.f32.mxu0 0.0
    %405 = vmatmul.mubr.f32.gmra.mxu0 %v289
    %v406 = vpop.f32.mrf.mxu0
    %v407 = vadd.f32 %v279, %v406
    %v408 = vpop.f32.mrf.mxu0
    %409 = vmatprep.mubr.f32.mxu0 0.0
    %410 = vmatmul.mubr.f32.gmra.mxu0 %v292
    %v411 = vpop.f32.mrf.mxu0
    %v412 = vadd.f32 %v279, %v411
    %v413 = vpop.f32.mrf.mxu0
    %414 = vmatprep.mubr.f32.mxu0 0.0
    %415 = vmatmul.mubr.f32.gmra.mxu0 %v295
    %v416 = vpop.f32.mrf.mxu0
    %v417 = vadd.f32 %v279, %v416
    %v418 = vpop.f32.mrf.mxu0
    %419 = vmatprep.mubr.f32.mxu0 0.0
    %420 = vmatmul.mubr.f32.gmra.mxu0 %v298
    %v421 = vpop.f32.mrf.mxu0
    %v422 = vadd.f32 %v279, %v421
    %v423 = vpop.f32.mrf.mxu0
    %424 = vmatprep.mubr.f32.mxu0 0.0
    %425 = vmatmul.mubr.f32.gmra.mxu0 %v301
    %v426 = vpop.f32.mrf.mxu0
    %v427 = vadd.f32 %v279, %v426
    %v428 = vpop.f32.mrf.mxu0
    %429 = vmatprep.mubr.f32.mxu0 0.0
    %430 = vmatmul.mubr.f32.gmra.mxu0 %v304
    %v431 = vpop.f32.mrf.mxu0
    %v432 = vadd.f32 %v279, %v431
    %v433 = vpop.f32.mrf.mxu0
    %434 = vmatprep.mubr.f32.mxu0 0.0
    %435 = vmatmul.mubr.f32.gmra.mxu0 %v307
    %v436 = vpop.f32.mrf.mxu0
    %v437 = vadd.f32 %v279, %v436
    %v438 = vpop.f32.mrf.mxu0
    %439 = vmatprep.mubr.f32.mxu0 0.0
    %440 = vmatmul.mubr.f32.gmra.mxu0 %v310
    %v441 = vpop.f32.mrf.mxu0
    %v442 = vadd.f32 %v279, %v441
    %v443 = vpop.f32.mrf.mxu0
    %444 = vmatprep.mubr.f32.mxu0 0.0
    %445 = vmatmul.mubr.f32.gmra.mxu0 %v313
    %v446 = vpop.f32.mrf.mxu0
    %v447 = vadd.f32 %v279, %v446
    %v448 = vpop.f32.mrf.mxu0
    %449 = vmatprep.mubr.f32.mxu0 0.0
    %450 = vmatmul.mubr.f32.gmra.mxu0 %v316
    %v451 = vpop.f32.mrf.mxu0
    %v452 = vadd.f32 %v279, %v451
    %v453 = vpop.f32.mrf.mxu0
    %454 = vmatprep.mubr.f32.mxu0 0.0
    %455 = vmatmul.mubr.f32.gmra.mxu0 %v319
    %v456 = vpop.f32.mrf.mxu0
    %v457 = vadd.f32 %v279, %v456
    %v458 = vpop.f32.mrf.mxu0
    %459 = vmatprep.mubr.f32.mxu0 0.0
    %460 = vmatmul.mubr.f32.gmra.mxu0 %v322
    %v461 = vpop.f32.mrf.mxu0
    %v462 = vadd.f32 %v279, %v461
    %v463 = vpop.f32.mrf.mxu0
    %464 = vmatprep.mubr.f32.mxu0 0.0
    %465 = vmatmul.mubr.f32.gmra.mxu0 %v325
    %v466 = vpop.f32.mrf.mxu0
    %v467 = vadd.f32 %v279, %v466
    %v468 = vpop.f32.mrf.mxu0
    %469 = vmatprep.mubr.f32.mxu0 0.0
    %470 = vmatmul.mubr.f32.gmra.mxu0 %v328
    %v471 = vpop.f32.mrf.mxu0
    %v472 = vadd.f32 %v279, %v471
    %v473 = vpop.f32.mrf.mxu0
    %474 = vdwg.mxu0
    %v475 = vtanh.pop %v397
    %v476 = vtanh.pop %v402
    %v477 = vtanh.pop %v407
    %v478 = vtanh.pop %v412
    %v479 = vtanh.pop %v417
    %v480 = vtanh.pop %v422
    %v481 = vtanh.pop %v427
    %v482 = vtanh.pop %v432
    %v483 = vtanh.pop %v437
    %v484 = vtanh.pop %v442
    %v485 = vtanh.pop %v447
    %v486 = vtanh.pop %v452
    %v487 = vtanh.pop %v457
    %v488 = vtanh.pop %v462
    %v489 = vtanh.pop %v467
    %v490 = vtanh.pop %v472
    %v491 = vld [vmem:[%s5] sm:$0xff]
    %v492 = vld [vmem:[%s5 + $0x8] sm:$0xff]
    %v493 = vld [vmem:[%s5 + $0x10] sm:$0xff]
    %v494 = vld [vmem:[%s5 + $0x18] sm:$0xff]
    %v495 = vld [vmem:[%s6] sm:$0x1]
    %v497 = vlaneseq
    %v498 = vshrl.u32 %v497, 7
    %v499 = vsub.s32 0, %v498
    %v500 = vrot.slane %v495, %v499
    %v503 = vsel %vm281, %v475, 0
    %v506 = vsel %vm281, %v476, 0
    %v509 = vsel %vm281, %v477, 0
    %v512 = vsel %vm281, %v478, 0
    %v515 = vsel %vm281, %v479, 0
    %v518 = vsel %vm281, %v480, 0
    %v521 = vsel %vm281, %v481, 0
    %v524 = vsel %vm281, %v482, 0
    %v527 = vsel %vm281, %v483, 0
    %v530 = vsel %vm281, %v484, 0
    %v533 = vsel %vm281, %v485, 0
    %v536 = vsel %vm281, %v486, 0
    %v539 = vsel %vm281, %v487, 0
    %v542 = vsel %vm281, %v488, 0
    %v545 = vsel %vm281, %v489, 0
    %v548 = vsel %vm281, %v490, 0
    %550 = vmatprep.subr.mxu0 0.0
    %551 = vmatpush1.msra.mxu0 0.0
    %552 = vmatprep.subr.mxu0 0.0
    %553 = vmatpush1.msra.mxu0 0.0
    %554 = vmatprep.subr.mxu0 0.0
    %555 = vmatpush1.msra.mxu0 0.0
    %556 = vmatprep.subr.mxu0 0.0
    %557 = vmatpush1.msra.mxu0 0.0
    %558 = vmatprep.subr.mxu0 0.0
    %559 = vmatpush1.msra.mxu0 0.0
    %560 = vmatprep.subr.mxu0 0.0
    %561 = vmatpush1.msra.mxu0 0.0
    %562 = vmatprep.subr.mxu0 0.0
    %563 = vmatpush1.msra.mxu0 0.0
    %564 = vmatprep.subr.mxu0 0.0
    %565 = vmatpush1.msra.mxu0 0.0
    %566 = vmatprep.subr.mxu0 0.0
    %567 = vmatpush1.msra.mxu0 0.0
    %568 = vmatprep.subr.mxu0 0.0
    %569 = vmatpush1.msra.mxu0 0.0
    %570 = vmatprep.subr.mxu0 0.0
    %571 = vmatpush1.msra.mxu0 0.0
    %572 = vmatprep.subr.mxu0 0.0
    %573 = vmatpush1.msra.mxu0 0.0
    %574 = vmatprep.subr.mxu0 0.0
    %575 = vmatpush1.msra.mxu0 %v494
    %576 = vmatprep.subr.mxu0 0.0
    %577 = vmatpush1.msra.mxu0 %v493
    %578 = vmatprep.subr.mxu0 0.0
    %579 = vmatpush1.msra.mxu0 %v492
    %580 = vmatprep.subr.mxu0 0.0
    %581 = vmatpush1.msra.mxu0 %v491
    %582 = vmatprep.subr.mxu0 0.0
    %583 = vmatpush2.msra.mxu0 0.0
    %584 = vmatprep.subr.mxu0 0.0
    %585 = vmatpush2.msra.mxu0 0.0
    %586 = vmatprep.subr.mxu0 0.0
    %587 = vmatpush2.msra.mxu0 0.0
    %588 = vmatprep.subr.mxu0 0.0
    %589 = vmatpush2.msra.mxu0 0.0
    %590 = vmatprep.subr.mxu0 0.0
    %591 = vmatpush2.msra.mxu0 0.0
    %592 = vmatprep.subr.mxu0 0.0
    %593 = vmatpush2.msra.mxu0 0.0
    %594 = vmatprep.subr.mxu0 0.0
    %595 = vmatpush2.msra.mxu0 0.0
    %596 = vmatprep.subr.mxu0 0.0
    %597 = vmatpush2.msra.mxu0 0.0
    %598 = vmatprep.subr.mxu0 0.0
    %599 = vmatpush2.msra.mxu0 0.0
    %600 = vmatprep.subr.mxu0 0.0
    %601 = vmatpush2.msra.mxu0 0.0
    %602 = vmatprep.subr.mxu0 0.0
    %603 = vmatpush2.msra.mxu0 0.0
    %604 = vmatprep.subr.mxu0 0.0
    %605 = vmatpush2.msra.mxu0 0.0
    %606 = vmatprep.subr.mxu0 0.0
    %607 = vmatpush2.msra.mxu0 0.0
    %608 = vmatprep.subr.mxu0 0.0
    %609 = vmatpush2.msra.mxu0 0.0
    %610 = vmatprep.subr.mxu0 0.0
    %611 = vmatpush2.msra.mxu0 0.0
    %612 = vmatprep.subr.mxu0 0.0
    %613 = vmatpush2.msra.mxu0 0.0
    %614 = vmatprep.mubr.f32.mxu0 0.0
    %615 = vmatmul.mubr.f32.gmra.mxu0 %v503
    %v616 = vpop.f32.mrf.mxu0
    %v617 = vadd.f32 %v500, %v616
    %v618 = vpop.f32.mrf.mxu0
    %619 = vmatprep.mubr.f32.mxu0 0.0
    %620 = vmatmul.mubr.f32.gmra.mxu0 %v506
    %v621 = vpop.f32.mrf.mxu0
    %v622 = vadd.f32 %v500, %v621
    %v623 = vpop.f32.mrf.mxu0
    %624 = vmatprep.mubr.f32.mxu0 0.0
    %625 = vmatmul.mubr.f32.gmra.mxu0 %v509
    %v626 = vpop.f32.mrf.mxu0
    %v627 = vadd.f32 %v500, %v626
    %v628 = vpop.f32.mrf.mxu0
    %629 = vmatprep.mubr.f32.mxu0 0.0
    %630 = vmatmul.mubr.f32.gmra.mxu0 %v512
    %v631 = vpop.f32.mrf.mxu0
    %v632 = vadd.f32 %v500, %v631
    %v633 = vpop.f32.mrf.mxu0
    %634 = vmatprep.mubr.f32.mxu0 0.0
    %635 = vmatmul.mubr.f32.gmra.mxu0 %v515
    %v636 = vpop.f32.mrf.mxu0
    %v637 = vadd.f32 %v500, %v636
    %v638 = vpop.f32.mrf.mxu0
    %639 = vmatprep.mubr.f32.mxu0 0.0
    %640 = vmatmul.mubr.f32.gmra.mxu0 %v518
    %v641 = vpop.f32.mrf.mxu0
    %v642 = vadd.f32 %v500, %v641
    %v643 = vpop.f32.mrf.mxu0
    %644 = vmatprep.mubr.f32.mxu0 0.0
    %645 = vmatmul.mubr.f32.gmra.mxu0 %v521
    %v646 = vpop.f32.mrf.mxu0
    %v647 = vadd.f32 %v500, %v646
    %v648 = vpop.f32.mrf.mxu0
    %649 = vmatprep.mubr.f32.mxu0 0.0
    %650 = vmatmul.mubr.f32.gmra.mxu0 %v524
    %v651 = vpop.f32.mrf.mxu0
    %v652 = vadd.f32 %v500, %v651
    %v653 = vpop.f32.mrf.mxu0
    %654 = vmatprep.mubr.f32.mxu0 0.0
    %655 = vmatmul.mubr.f32.gmra.mxu0 %v527
    %v656 = vpop.f32.mrf.mxu0
    %v657 = vadd.f32 %v500, %v656
    %v658 = vpop.f32.mrf.mxu0
    %659 = vmatprep.mubr.f32.mxu0 0.0
    %660 = vmatmul.mubr.f32.gmra.mxu0 %v530
    %v661 = vpop.f32.mrf.mxu0
    %v662 = vadd.f32 %v500, %v661
    %v663 = vpop.f32.mrf.mxu0
    %664 = vmatprep.mubr.f32.mxu0 0.0
    %665 = vmatmul.mubr.f32.gmra.mxu0 %v533
    %v666 = vpop.f32.mrf.mxu0
    %v667 = vadd.f32 %v500, %v666
    %v668 = vpop.f32.mrf.mxu0
    %669 = vmatprep.mubr.f32.mxu0 0.0
    %670 = vmatmul.mubr.f32.gmra.mxu0 %v536
    %v671 = vpop.f32.mrf.mxu0
    %v672 = vadd.f32 %v500, %v671
    %v673 = vpop.f32.mrf.mxu0
    %674 = vmatprep.mubr.f32.mxu0 0.0
    %675 = vmatmul.mubr.f32.gmra.mxu0 %v539
    %v676 = vpop.f32.mrf.mxu0
    %v677 = vadd.f32 %v500, %v676
    %v678 = vpop.f32.mrf.mxu0
    %679 = vmatprep.mubr.f32.mxu0 0.0
    %680 = vmatmul.mubr.f32.gmra.mxu0 %v542
    %v681 = vpop.f32.mrf.mxu0
    %v682 = vadd.f32 %v500, %v681
    %v683 = vpop.f32.mrf.mxu0
    %684 = vmatprep.mubr.f32.mxu0 0.0
    %685 = vmatmul.mubr.f32.gmra.mxu0 %v545
    %v686 = vpop.f32.mrf.mxu0
    %v687 = vadd.f32 %v500, %v686
    %v688 = vpop.f32.mrf.mxu0
    %689 = vmatprep.mubr.f32.mxu0 0.0
    %690 = vmatmul.mubr.f32.gmra.mxu0 %v548
    %v691 = vpop.f32.mrf.mxu0
    %v692 = vadd.f32 %v500, %v691
    %v693 = vpop.f32.mrf.mxu0
    %694 = vdwg.mxu0
    %v695 = vtanh.pop %v617
    %v696 = vtanh.pop %v622
    %v697 = vtanh.pop %v627
    %v698 = vtanh.pop %v632
    %v699 = vtanh.pop %v637
    %v700 = vtanh.pop %v642
    %v701 = vtanh.pop %v647
    %v702 = vtanh.pop %v652
    %v703 = vtanh.pop %v657
    %v704 = vtanh.pop %v662
    %v705 = vtanh.pop %v667
    %v706 = vtanh.pop %v672
    %v707 = vtanh.pop %v677
    %v708 = vtanh.pop %v682
    %v709 = vtanh.pop %v687
    %v710 = vtanh.pop %v692
    %v711 = vld [vmem:[%s7] sm:$0xff]
    %v712 = vld [vmem:[%s7 + $0x8] sm:$0xff]
    %v713 = vld [vmem:[%s7 + $0x10] sm:$0xff]
    %v714 = vld [vmem:[%s7 + $0x18] sm:$0xff]
    %v715 = vld [vmem:[#allocation2] sm:$0x1]
    %v717 = vlaneseq
    %v718 = vshrl.u32 %v717, 7
    %v719 = vsub.s32 0, %v718
    %v720 = vrot.slane %v715, %v719
    %v723 = vsel %vm281, %v695, 0
    %v726 = vsel %vm281, %v696, 0
    %v729 = vsel %vm281, %v697, 0
    %v732 = vsel %vm281, %v698, 0
    %v735 = vsel %vm281, %v699, 0
    %v738 = vsel %vm281, %v700, 0
    %v741 = vsel %vm281, %v701, 0
    %v744 = vsel %vm281, %v702, 0
    %v747 = vsel %vm281, %v703, 0
    %v750 = vsel %vm281, %v704, 0
    %v753 = vsel %vm281, %v705, 0
    %v756 = vsel %vm281, %v706, 0
    %v759 = vsel %vm281, %v707, 0
    %v762 = vsel %vm281, %v708, 0
    %v765 = vsel %vm281, %v709, 0
    %v768 = vsel %vm281, %v710, 0
    %770 = vmatprep.subr.mxu0 0.0
    %771 = vmatpush1.msra.mxu0 0.0
    %772 = vmatprep.subr.mxu0 0.0
    %773 = vmatpush1.msra.mxu0 0.0
    %774 = vmatprep.subr.mxu0 0.0
    %775 = vmatpush1.msra.mxu0 0.0
    %776 = vmatprep.subr.mxu0 0.0
    %777 = vmatpush1.msra.mxu0 0.0
    %778 = vmatprep.subr.mxu0 0.0
    %779 = vmatpush1.msra.mxu0 0.0
    %780 = vmatprep.subr.mxu0 0.0
    %781 = vmatpush1.msra.mxu0 0.0
    %782 = vmatprep.subr.mxu0 0.0
    %783 = vmatpush1.msra.mxu0 0.0
    %784 = vmatprep.subr.mxu0 0.0
    %785 = vmatpush1.msra.mxu0 0.0
    %786 = vmatprep.subr.mxu0 0.0
    %787 = vmatpush1.msra.mxu0 0.0
    %788 = vmatprep.subr.mxu0 0.0
    %789 = vmatpush1.msra.mxu0 0.0
    %790 = vmatprep.subr.mxu0 0.0
    %791 = vmatpush1.msra.mxu0 0.0
    %792 = vmatprep.subr.mxu0 0.0
    %793 = vmatpush1.msra.mxu0 0.0
    %794 = vmatprep.subr.mxu0 0.0
    %795 = vmatpush1.msra.mxu0 %v714
    %796 = vmatprep.subr.mxu0 0.0
    %797 = vmatpush1.msra.mxu0 %v713
    %798 = vmatprep.subr.mxu0 0.0
    %799 = vmatpush1.msra.mxu0 %v712
    %800 = vmatprep.subr.mxu0 0.0
    %801 = vmatpush1.msra.mxu0 %v711
    %802 = vmatprep.subr.mxu0 0.0
    %803 = vmatpush2.msra.mxu0 0.0
    %804 = vmatprep.subr.mxu0 0.0
    %805 = vmatpush2.msra.mxu0 0.0
    %806 = vmatprep.subr.mxu0 0.0
    %807 = vmatpush2.msra.mxu0 0.0
    %808 = vmatprep.subr.mxu0 0.0
    %809 = vmatpush2.msra.mxu0 0.0
    %810 = vmatprep.subr.mxu0 0.0
    %811 = vmatpush2.msra.mxu0 0.0
    %812 = vmatprep.subr.mxu0 0.0
    %813 = vmatpush2.msra.mxu0 0.0
    %814 = vmatprep.subr.mxu0 0.0
    %815 = vmatpush2.msra.mxu0 0.0
    %816 = vmatprep.subr.mxu0 0.0
    %817 = vmatpush2.msra.mxu0 0.0
    %818 = vmatprep.subr.mxu0 0.0
    %819 = vmatpush2.msra.mxu0 0.0
    %820 = vmatprep.subr.mxu0 0.0
    %821 = vmatpush2.msra.mxu0 0.0
    %822 = vmatprep.subr.mxu0 0.0
    %823 = vmatpush2.msra.mxu0 0.0
    %824 = vmatprep.subr.mxu0 0.0
    %825 = vmatpush2.msra.mxu0 0.0
    %826 = vmatprep.subr.mxu0 0.0
    %827 = vmatpush2.msra.mxu0 0.0
    %828 = vmatprep.subr.mxu0 0.0
    %829 = vmatpush2.msra.mxu0 0.0
    %830 = vmatprep.subr.mxu0 0.0
    %831 = vmatpush2.msra.mxu0 0.0
    %832 = vmatprep.subr.mxu0 0.0
    %833 = vmatpush2.msra.mxu0 0.0
    %834 = vmatprep.mubr.f32.mxu0 0.0
    %835 = vmatmul.mubr.f32.gmra.mxu0 %v723
    %v836 = vpop.f32.mrf.mxu0
    %v837 = vadd.f32 %v720, %v836
    %v838 = vpop.f32.mrf.mxu0
    %839 = vmatprep.mubr.f32.mxu0 0.0
    %840 = vmatmul.mubr.f32.gmra.mxu0 %v726
    %v841 = vpop.f32.mrf.mxu0
    %v842 = vadd.f32 %v720, %v841
    %v843 = vpop.f32.mrf.mxu0
    %844 = vmatprep.mubr.f32.mxu0 0.0
    %845 = vmatmul.mubr.f32.gmra.mxu0 %v729
    %v846 = vpop.f32.mrf.mxu0
    %v847 = vadd.f32 %v720, %v846
    %v848 = vpop.f32.mrf.mxu0
    %849 = vmatprep.mubr.f32.mxu0 0.0
    %850 = vmatmul.mubr.f32.gmra.mxu0 %v732
    %v851 = vpop.f32.mrf.mxu0
    %v852 = vadd.f32 %v720, %v851
    %v853 = vpop.f32.mrf.mxu0
    %854 = vmatprep.mubr.f32.mxu0 0.0
    %855 = vmatmul.mubr.f32.gmra.mxu0 %v735
    %v856 = vpop.f32.mrf.mxu0
    %v857 = vadd.f32 %v720, %v856
    %v858 = vpop.f32.mrf.mxu0
    %859 = vmatprep.mubr.f32.mxu0 0.0
    %860 = vmatmul.mubr.f32.gmra.mxu0 %v738
    %v861 = vpop.f32.mrf.mxu0
    %v862 = vadd.f32 %v720, %v861
    %v863 = vpop.f32.mrf.mxu0
    %864 = vmatprep.mubr.f32.mxu0 0.0
    %865 = vmatmul.mubr.f32.gmra.mxu0 %v741
    %v866 = vpop.f32.mrf.mxu0
    %v867 = vadd.f32 %v720, %v866
    %v868 = vpop.f32.mrf.mxu0
    %869 = vmatprep.mubr.f32.mxu0 0.0
    %870 = vmatmul.mubr.f32.gmra.mxu0 %v744
    %v871 = vpop.f32.mrf.mxu0
    %v872 = vadd.f32 %v720, %v871
    %v873 = vpop.f32.mrf.mxu0
    %874 = vmatprep.mubr.f32.mxu0 0.0
    %875 = vmatmul.mubr.f32.gmra.mxu0 %v747
    %v876 = vpop.f32.mrf.mxu0
    %v877 = vadd.f32 %v720, %v876
    %v878 = vpop.f32.mrf.mxu0
    %879 = vmatprep.mubr.f32.mxu0 0.0
    %880 = vmatmul.mubr.f32.gmra.mxu0 %v750
    %v881 = vpop.f32.mrf.mxu0
    %v882 = vadd.f32 %v720, %v881
    %v883 = vpop.f32.mrf.mxu0
    %884 = vmatprep.mubr.f32.mxu0 0.0
    %885 = vmatmul.mubr.f32.gmra.mxu0 %v753
    %v886 = vpop.f32.mrf.mxu0
    %v887 = vadd.f32 %v720, %v886
    %v888 = vpop.f32.mrf.mxu0
    %889 = vmatprep.mubr.f32.mxu0 0.0
    %890 = vmatmul.mubr.f32.gmra.mxu0 %v756
    %v891 = vpop.f32.mrf.mxu0
    %v892 = vadd.f32 %v720, %v891
    %v893 = vpop.f32.mrf.mxu0
    %894 = vmatprep.mubr.f32.mxu0 0.0
    %895 = vmatmul.mubr.f32.gmra.mxu0 %v759
    %v896 = vpop.f32.mrf.mxu0
    %v897 = vadd.f32 %v720, %v896
    %v898 = vpop.f32.mrf.mxu0
    %899 = vmatprep.mubr.f32.mxu0 0.0
    %900 = vmatmul.mubr.f32.gmra.mxu0 %v762
    %v901 = vpop.f32.mrf.mxu0
    %v902 = vadd.f32 %v720, %v901
    %v903 = vpop.f32.mrf.mxu0
    %904 = vmatprep.mubr.f32.mxu0 0.0
    %905 = vmatmul.mubr.f32.gmra.mxu0 %v765
    %v906 = vpop.f32.mrf.mxu0
    %v907 = vadd.f32 %v720, %v906
    %v908 = vpop.f32.mrf.mxu0
    %909 = vmatprep.mubr.f32.mxu0 0.0
    %910 = vmatmul.mubr.f32.gmra.mxu0 %v768
    %v911 = vpop.f32.mrf.mxu0
    %v912 = vadd.f32 %v720, %v911
    %v913 = vpop.f32.mrf.mxu0
    %914 = vdwg.mxu0
    %931 = vset.pattern.permute.xlu0 0
    %932 = vperm.xlu0 %931, %v837
    %v933 = vpop.permute.xlu0 %932
    %934 = vset.pattern.permute.xlu0 0
    %935 = vperm.xlu0 %934, %v842
    %v936 = vpop.permute.xlu0 %935
    %937 = vset.pattern.permute.xlu0 0
    %938 = vperm.xlu0 %937, %v847
    %v939 = vpop.permute.xlu0 %938
    %940 = vset.pattern.permute.xlu0 0
    %941 = vperm.xlu0 %940, %v852
    %v942 = vpop.permute.xlu0 %941
    %943 = vset.pattern.permute.xlu0 0
    %944 = vperm.xlu0 %943, %v857
    %v945 = vpop.permute.xlu0 %944
    %946 = vset.pattern.permute.xlu0 0
    %947 = vperm.xlu0 %946, %v862
    %v948 = vpop.permute.xlu0 %947
    %949 = vset.pattern.permute.xlu0 0
    %950 = vperm.xlu0 %949, %v867
    %v951 = vpop.permute.xlu0 %950
    %952 = vset.pattern.permute.xlu0 0
    %953 = vperm.xlu0 %952, %v872
    %v954 = vpop.permute.xlu0 %953
    %955 = vset.pattern.permute.xlu0 0
    %956 = vperm.xlu0 %955, %v877
    %v957 = vpop.permute.xlu0 %956
    %958 = vset.pattern.permute.xlu0 0
    %959 = vperm.xlu0 %958, %v882
    %v960 = vpop.permute.xlu0 %959
    %961 = vset.pattern.permute.xlu0 0
    %962 = vperm.xlu0 %961, %v887
    %v963 = vpop.permute.xlu0 %962
    %964 = vset.pattern.permute.xlu0 0
    %965 = vperm.xlu0 %964, %v892
    %v966 = vpop.permute.xlu0 %965
    %967 = vset.pattern.permute.xlu0 0
    %968 = vperm.xlu0 %967, %v897
    %v969 = vpop.permute.xlu0 %968
    %970 = vset.pattern.permute.xlu0 0
    %971 = vperm.xlu0 %970, %v902
    %v972 = vpop.permute.xlu0 %971
    %973 = vset.pattern.permute.xlu0 0
    %974 = vperm.xlu0 %973, %v907
    %v975 = vpop.permute.xlu0 %974
    %976 = vset.pattern.permute.xlu0 0
    %977 = vperm.xlu0 %976, %v912
    %v978 = vpop.permute.xlu0 %977
    %v979 = vlaneseq
    %v980 = vand.u32 %v979, 127
    %v981 = vlaneseq
    %v982 = vshrl.u32 %v981, 7
    %v983 = vsub.s32 %v980, %v982
    %v984 = vrot.slane %v933, %v983
    %v985 = vadd.s32 %v980, 4294967288
    %v986 = vlaneseq
    %v987 = vshrl.u32 %v986, 7
    %v988 = vsub.s32 %v985, %v987
    %v989 = vrot.slane %v936, %v988
    %vm990 = vcmask 130112
    %v991 = vsel %vm990, %v989, %v984
    %v992 = vadd.s32 %v980, 4294967280
    %v993 = vlaneseq
    %v994 = vshrl.u32 %v993, 7
    %v995 = vsub.s32 %v992, %v994
    %v996 = vrot.slane %v939, %v995
    %vm997 = vcmask 195712
    %v998 = vsel %vm997, %v996, %v991
    %v999 = vadd.s32 %v980, 4294967272
    %v1000 = vlaneseq
    %v1001 = vshrl.u32 %v1000, 7
    %v1002 = vsub.s32 %v999, %v1001
    %v1003 = vrot.slane %v942, %v1002
    %vm1004 = vcmask 261312
    %v1005 = vsel %vm1004, %v1003, %v998
    %v1006 = vadd.s32 %v980, 4294967264
    %v1007 = vlaneseq
    %v1008 = vshrl.u32 %v1007, 7
    %v1009 = vsub.s32 %v1006, %v1008
    %v1010 = vrot.slane %v945, %v1009
    %vm1011 = vcmask 326912
    %v1012 = vsel %vm1011, %v1010, %v1005
    %v1013 = vadd.s32 %v980, 4294967256
    %v1014 = vlaneseq
    %v1015 = vshrl.u32 %v1014, 7
    %v1016 = vsub.s32 %v1013, %v1015
    %v1017 = vrot.slane %v948, %v1016
    %vm1018 = vcmask 392512
    %v1019 = vsel %vm1018, %v1017, %v1012
    %v1020 = vadd.s32 %v980, 4294967248
    %v1021 = vlaneseq
    %v1022 = vshrl.u32 %v1021, 7
    %v1023 = vsub.s32 %v1020, %v1022
    %v1024 = vrot.slane %v951, %v1023
    %vm1025 = vcmask 458112
    %v1026 = vsel %vm1025, %v1024, %v1019
    %v1027 = vadd.s32 %v980, 4294967240
    %v1028 = vlaneseq
    %v1029 = vshrl.u32 %v1028, 7
    %v1030 = vsub.s32 %v1027, %v1029
    %v1031 = vrot.slane %v954, %v1030
    %vm1032 = vcmask 523712
    %v1033 = vsel %vm1032, %v1031, %v1026
    %v1034 = vadd.s32 %v980, 4294967232
    %v1035 = vlaneseq
    %v1036 = vshrl.u32 %v1035, 7
    %v1037 = vsub.s32 %v1034, %v1036
    %v1038 = vrot.slane %v957, %v1037
    %vm1039 = vcmask 589312
    %v1040 = vsel %vm1039, %v1038, %v1033
    %v1041 = vadd.s32 %v980, 4294967224
    %v1042 = vlaneseq
    %v1043 = vshrl.u32 %v1042, 7
    %v1044 = vsub.s32 %v1041, %v1043
    %v1045 = vrot.slane %v960, %v1044
    %vm1046 = vcmask 654912
    %v1047 = vsel %vm1046, %v1045, %v1040
    %v1048 = vadd.s32 %v980, 4294967216
    %v1049 = vlaneseq
    %v1050 = vshrl.u32 %v1049, 7
    %v1051 = vsub.s32 %v1048, %v1050
    %v1052 = vrot.slane %v963, %v1051
    %vm1053 = vcmask 720512
    %v1054 = vsel %vm1053, %v1052, %v1047
    %v1055 = vadd.s32 %v980, 4294967208
    %v1056 = vlaneseq
    %v1057 = vshrl.u32 %v1056, 7
    %v1058 = vsub.s32 %v1055, %v1057
    %v1059 = vrot.slane %v966, %v1058
    %vm1060 = vcmask 786112
    %v1061 = vsel %vm1060, %v1059, %v1054
    %v1062 = vadd.s32 %v980, 4294967200
    %v1063 = vlaneseq
    %v1064 = vshrl.u32 %v1063, 7
    %v1065 = vsub.s32 %v1062, %v1064
    %v1066 = vrot.slane %v969, %v1065
    %vm1067 = vcmask 851712
    %v1068 = vsel %vm1067, %v1066, %v1061
    %v1069 = vadd.s32 %v980, 4294967192
    %v1070 = vlaneseq
    %v1071 = vshrl.u32 %v1070, 7
    %v1072 = vsub.s32 %v1069, %v1071
    %v1073 = vrot.slane %v972, %v1072
    %vm1074 = vcmask 917312
    %v1075 = vsel %vm1074, %v1073, %v1068
    %v1076 = vadd.s32 %v980, 4294967184
    %v1077 = vlaneseq
    %v1078 = vshrl.u32 %v1077, 7
    %v1079 = vsub.s32 %v1076, %v1078
    %v1080 = vrot.slane %v975, %v1079
    %vm1081 = vcmask 982912
    %v1082 = vsel %vm1081, %v1080, %v1075
    %v1083 = vadd.s32 %v980, 4294967176
    %v1084 = vlaneseq
    %v1085 = vshrl.u32 %v1084, 7
    %v1086 = vsub.s32 %v1083, %v1085
    %v1087 = vrot.slane %v978, %v1086
    %vm1088 = vcmask 1048512
    %v1089 = vsel %vm1088, %v1087, %v1082
    %1091 = vst [vmem:[#allocation3] sm:$0x1] %v1089
    // Predicated region
    $region38: #{tpu_custom_call.1} parent=1 // pred_check
      _
    $region39: #{tpu_custom_call.1} parent=1 // pred_check_branch
      %1093 = sbr.rel (0) target = $region41
    $region40: #{tpu_custom_call.1} parent=1 // pred_region
      %s1095 = ssub.s32 16, 16
      %1096 = vsyncadd [#allocation4], %s1095
      %s1098 = sshll.u32 [#allocation3], 4
      %s1099 = int_to_ptr.vmem [resolvable:$true] %s1098
      %1101 = dma.vmem_to_hbm [thread:$0]  %s1099, 16, %s9, [#allocation4]
    $region41: #{tpu_custom_call.1} parent=1 // pred_fallthru
      _
    // Predicated region
    $region42: #{tpu_custom_call.1} parent=1 // pred_check
      _
    $region43: #{tpu_custom_call.1} parent=1 // pred_check_branch
      %1103 = sbr.rel (0) target = $region45
    $region44: #{tpu_custom_call.1} parent=1 // pred_region
      %1104 = dma.done [#allocation4], 16
    $region45: #{tpu_custom_call.1} parent=1 // pred_fallthru
      _
    %1105 = vsyncpa [#allocation4], 1

// kernel: tpu_custom_call.1
$region0: #{tpu_custom_call.1}
  #allocation0 [shape = 'u32[]', space=smem, size = 0x4, offset = 0x4, fixed_abs, tag = 'smem constant byte address 0x4 - core index']
  #allocation1 [shape = 'u32[144,128]{1,0:T(1,128)}', space=vmem, size = 0x12000, scoped, tag = 'internal scratch']
  #allocation2 [shape = 'f32[1,1]{1,0:T(1,128)S(1)}', space=vmem, size = 0x200, scoped, tag = 'scoped memory for tpu_custom_call.1']
  %s0 = inlined_call_operand.vmem [shape: f32[128,16], index: 0, kind: input, shape index: {}]
  %s1 = inlined_call_operand.vmem [shape: f32[16,32], index: 1, kind: input, shape index: {}]
  %s2 = inlined_call_operand.vmem [shape: f32[1,32], index: 2, kind: input, shape index: {}]
  %s3 = inlined_call_operand.vmem [shape: f32[32,32], index: 3, kind: input, shape index: {}]
  %s4 = inlined_call_operand.vmem [shape: f32[1,32], index: 4, kind: input, shape index: {}]
  %s5 = inlined_call_operand.vmem [shape: f32[32,32], index: 5, kind: input, shape index: {}]
  %s6 = inlined_call_operand.vmem [shape: f32[1,32], index: 6, kind: input, shape index: {}]
  %s7 = inlined_call_operand.vmem [shape: f32[32,1], index: 7, kind: input, shape index: {}]
  %s8 = inlined_call_operand.<no memory space> [shape: f32[1,1], index: 8, kind: input, shape index: {}]
  %s9 = inlined_call_operand.vmem [shape: f32[128,1], index: 9, kind: output, shape index: {}]
  %s10 = sld [smem:[#allocation0]]
  $region46: #{tpu_custom_call.1} parent=0
    _
  %s12 = ssub.s32 1, %s10
  %s13 = scalar_select 0, %s12, %s10
  %v14 = vstv %s8
  %15 = vst [vmem:[#allocation2] sm:$0x1] %v14
  // Predicated region
  $region2: #{tpu_custom_call.1} parent=0 // pred_check
    _
  $region3: #{tpu_custom_call.1} parent=0 // pred_check_branch
    %17 = sbr.rel (0) target = $region5
  $region4: #{tpu_custom_call.1} parent=0 // pred_region
    _
  $region5: #{tpu_custom_call.1} parent=0 // pred_fallthru
    _
  // Predicated region
  $region6: #{tpu_custom_call.1} parent=0 // pred_check
    _
  $region7: #{tpu_custom_call.1} parent=0 // pred_check_branch
    %19 = sbr.rel (0) target = $region9
  $region8: #{tpu_custom_call.1} parent=0 // pred_region
    _
  $region9: #{tpu_custom_call.1} parent=0 // pred_fallthru
    _
  // Predicated region
  $region10: #{tpu_custom_call.1} parent=0 // pred_check
    _
  $region11: #{tpu_custom_call.1} parent=0 // pred_check_branch
    %21 = sbr.rel (0) target = $region13
  $region12: #{tpu_custom_call.1} parent=0 // pred_region
    _
  $region13: #{tpu_custom_call.1} parent=0 // pred_fallthru
    _
  // Predicated region
  $region14: #{tpu_custom_call.1} parent=0 // pred_check
    _
  $region15: #{tpu_custom_call.1} parent=0 // pred_check_branch
    %23 = sbr.rel (0) target = $region17
  $region16: #{tpu_custom_call.1} parent=0 // pred_region
    _
  $region17: #{tpu_custom_call.1} parent=0 // pred_fallthru
    _
  // Predicated region
  $region18: #{tpu_custom_call.1} parent=0 // pred_check
    _
  $region19: #{tpu_custom_call.1} parent=0 // pred_check_branch
    %25 = sbr.rel (0) target = $region21
  $region20: #{tpu_custom_call.1} parent=0 // pred_region
    _
  $region21: #{tpu_custom_call.1} parent=0 // pred_fallthru
    _
  // Predicated region
  $region22: #{tpu_custom_call.1} parent=0 // pred_check
    _
  $region23: #{tpu_custom_call.1} parent=0 // pred_check_branch
    %27 = sbr.rel (0) target = $region25
  $region24: #{tpu_custom_call.1} parent=0 // pred_region
    _
  $region25: #{tpu_custom_call.1} parent=0 // pred_fallthru
    _
  // Predicated region
  $region26: #{tpu_custom_call.1} parent=0 // pred_check
    _
  $region27: #{tpu_custom_call.1} parent=0 // pred_check_branch
    %29 = sbr.rel (0) target = $region29
  $region28: #{tpu_custom_call.1} parent=0 // pred_region
    _
  $region29: #{tpu_custom_call.1} parent=0 // pred_fallthru
    _
  // Predicated region
  $region30: #{tpu_custom_call.1} parent=0 // pred_check
    _
  $region31: #{tpu_custom_call.1} parent=0 // pred_check_branch
    %31 = sbr.rel (0) target = $region33
  $region32: #{tpu_custom_call.1} parent=0 // pred_region
    _
  $region33: #{tpu_custom_call.1} parent=0 // pred_fallthru
    _
  // Predicated region
  $region34: #{tpu_custom_call.1} parent=0 // pred_check
    _
  $region35: #{tpu_custom_call.1} parent=0 // pred_check_branch
    %33 = sbr.rel (0) target = $region37
  $region36: #{tpu_custom_call.1} parent=0 // pred_region
    _
  $region37: #{tpu_custom_call.1} parent=0 // pred_fallthru
    _
  %v34 = vld [vmem:[%s0] sm:$0xff]
  %v35 = vld [vmem:[%s0 + $0x8] sm:$0xff]
  %v36 = vld [vmem:[%s0 + $0x10] sm:$0xff]
  %v37 = vld [vmem:[%s0 + $0x18] sm:$0xff]
  %v38 = vld [vmem:[%s0 + $0x20] sm:$0xff]
  %v39 = vld [vmem:[%s0 + $0x28] sm:$0xff]
  %v40 = vld [vmem:[%s0 + $0x30] sm:$0xff]
  %v41 = vld [vmem:[%s0 + $0x38] sm:$0xff]
  %v42 = vld [vmem:[%s0 + $0x40] sm:$0xff]
  %v43 = vld [vmem:[%s0 + $0x48] sm:$0xff]
  %v44 = vld [vmem:[%s0 + $0x50] sm:$0xff]
  %v45 = vld [vmem:[%s0 + $0x58] sm:$0xff]
  %v46 = vld [vmem:[%s0 + $0x60] sm:$0xff]
  %v47 = vld [vmem:[%s0 + $0x68] sm:$0xff]
  %v48 = vld [vmem:[%s0 + $0x70] sm:$0xff]
  %v49 = vld [vmem:[%s0 + $0x78] sm:$0xff]
  %v50 = vld [vmem:[%s1] sm:$0xff]
  %v51 = vld [vmem:[%s1 + $0x8] sm:$0xff]
  %v52 = vld [vmem:[%s2] sm:$0x1]
  %v54 = vlaneseq
  %v55 = vshrl.u32 %v54, 7
  %v56 = vsub.s32 0, %v55
  %v57 = vrot.slane %v52, %v56
  %vm59 = vcmask 130048
  %v61 = vsel %vm59, %v34, 0
  %v64 = vsel %vm59, %v35, 0
  %v67 = vsel %vm59, %v36, 0
  %v70 = vsel %vm59, %v37, 0
  %v73 = vsel %vm59, %v38, 0
  %v76 = vsel %vm59, %v39, 0
  %v79 = vsel %vm59, %v40, 0
  %v82 = vsel %vm59, %v41, 0
  %v85 = vsel %vm59, %v42, 0
  %v88 = vsel %vm59, %v43, 0
  %v91 = vsel %vm59, %v44, 0
  %v94 = vsel %vm59, %v45, 0
  %v97 = vsel %vm59, %v46, 0
  %v100 = vsel %vm59, %v47, 0
  %v103 = vsel %vm59, %v48, 0
  %v106 = vsel %vm59, %v49, 0
  %108 = vmatprep.subr.mxu0 0.0
  %109 = vmatpush1.msra.mxu0 0.0
  %110 = vmatprep.subr.mxu0 0.0
  %111 = vmatpush1.msra.mxu0 0.0
  %112 = vmatprep.subr.mxu0 0.0
  %113 = vmatpush1.msra.mxu0 0.0
  %114 = vmatprep.subr.mxu0 0.0
  %115 = vmatpush1.msra.mxu0 0.0
  %116 = vmatprep.subr.mxu0 0.0
  %117 = vmatpush1.msra.mxu0 0.0
  %118 = vmatprep.subr.mxu0 0.0
  %119 = vmatpush1.msra.mxu0 0.0
  %120 = vmatprep.subr.mxu0 0.0
  %121 = vmatpush1.msra.mxu0 0.0
  %122 = vmatprep.subr.mxu0 0.0
  %123 = vmatpush1.msra.mxu0 0.0
  %124 = vmatprep.subr.mxu0 0.0
  %125 = vmatpush1.msra.mxu0 0.0
  %126 = vmatprep.subr.mxu0 0.0
  %127 = vmatpush1.msra.mxu0 0.0
  %128 = vmatprep.subr.mxu0 0.0
  %129 = vmatpush1.msra.mxu0 0.0
  %130 = vmatprep.subr.mxu0 0.0
  %131 = vmatpush1.msra.mxu0 0.0
  %132 = vmatprep.subr.mxu0 0.0
  %133 = vmatpush1.msra.mxu0 0.0
  %134 = vmatprep.subr.mxu0 0.0
  %135 = vmatpush1.msra.mxu0 0.0
  %136 = vmatprep.subr.mxu0 0.0
  %137 = vmatpush1.msra.mxu0 %v51
  %138 = vmatprep.subr.mxu0 0.0
  %139 = vmatpush1.msra.mxu0 %v50
  %140 = vmatprep.subr.mxu0 0.0
  %141 = vmatpush2.msra.mxu0 0.0
  %142 = vmatprep.subr.mxu0 0.0
  %143 = vmatpush2.msra.mxu0 0.0
  %144 = vmatprep.subr.mxu0 0.0
  %145 = vmatpush2.msra.mxu0 0.0
  %146 = vmatprep.subr.mxu0 0.0
  %147 = vmatpush2.msra.mxu0 0.0
  %148 = vmatprep.subr.mxu0 0.0
  %149 = vmatpush2.msra.mxu0 0.0
  %150 = vmatprep.subr.mxu0 0.0
  %151 = vmatpush2.msra.mxu0 0.0
  %152 = vmatprep.subr.mxu0 0.0
  %153 = vmatpush2.msra.mxu0 0.0
  %154 = vmatprep.subr.mxu0 0.0
  %155 = vmatpush2.msra.mxu0 0.0
  %156 = vmatprep.subr.mxu0 0.0
  %157 = vmatpush2.msra.mxu0 0.0
  %158 = vmatprep.subr.mxu0 0.0
  %159 = vmatpush2.msra.mxu0 0.0
  %160 = vmatprep.subr.mxu0 0.0
  %161 = vmatpush2.msra.mxu0 0.0
  %162 = vmatprep.subr.mxu0 0.0
  %163 = vmatpush2.msra.mxu0 0.0
  %164 = vmatprep.subr.mxu0 0.0
  %165 = vmatpush2.msra.mxu0 0.0
  %166 = vmatprep.subr.mxu0 0.0
  %167 = vmatpush2.msra.mxu0 0.0
  %168 = vmatprep.subr.mxu0 0.0
  %169 = vmatpush2.msra.mxu0 0.0
  %170 = vmatprep.subr.mxu0 0.0
  %171 = vmatpush2.msra.mxu0 0.0
  %172 = vmatprep.mubr.f32.mxu0 0.0
  %173 = vmatmul.mubr.f32.gmra.mxu0 %v61
  %v174 = vpop.f32.mrf.mxu0
  %v175 = vadd.f32 %v57, %v174
  %v176 = vpop.f32.mrf.mxu0
  %177 = vmatprep.mubr.f32.mxu0 0.0
  %178 = vmatmul.mubr.f32.gmra.mxu0 %v64
  %v179 = vpop.f32.mrf.mxu0
  %v180 = vadd.f32 %v57, %v179
  %v181 = vpop.f32.mrf.mxu0
  %182 = vmatprep.mubr.f32.mxu0 0.0
  %183 = vmatmul.mubr.f32.gmra.mxu0 %v67
  %v184 = vpop.f32.mrf.mxu0
  %v185 = vadd.f32 %v57, %v184
  %v186 = vpop.f32.mrf.mxu0
  %187 = vmatprep.mubr.f32.mxu0 0.0
  %188 = vmatmul.mubr.f32.gmra.mxu0 %v70
  %v189 = vpop.f32.mrf.mxu0
  %v190 = vadd.f32 %v57, %v189
  %v191 = vpop.f32.mrf.mxu0
  %192 = vmatprep.mubr.f32.mxu0 0.0
  %193 = vmatmul.mubr.f32.gmra.mxu0 %v73
  %v194 = vpop.f32.mrf.mxu0
  %v195 = vadd.f32 %v57, %v194
  %v196 = vpop.f32.mrf.mxu0
  %197 = vmatprep.mubr.f32.mxu0 0.0
  %198 = vmatmul.mubr.f32.gmra.mxu0 %v76
  %v199 = vpop.f32.mrf.mxu0
  %v200 = vadd.f32 %v57, %v199
  %v201 = vpop.f32.mrf.mxu0
  %202 = vmatprep.mubr.f32.mxu0 0.0
  %203 = vmatmul.mubr.f32.gmra.mxu0 %v79
  %v204 = vpop.f32.mrf.mxu0
  %v205 = vadd.f32 %v57, %v204
  %v206 = vpop.f32.mrf.mxu0
  %207 = vmatprep.mubr.f32.mxu0 0.0
  %208 = vmatmul.mubr.f32.gmra.mxu0 %v82
  %v209 = vpop.f32.mrf.mxu0
  %v210 = vadd.f32 %v57, %v209
  %v211 = vpop.f32.mrf.mxu0
  %212 = vmatprep.mubr.f32.mxu0 0.0
  %213 = vmatmul.mubr.f32.gmra.mxu0 %v85
  %v214 = vpop.f32.mrf.mxu0
  %v215 = vadd.f32 %v57, %v214
  %v216 = vpop.f32.mrf.mxu0
  %217 = vmatprep.mubr.f32.mxu0 0.0
  %218 = vmatmul.mubr.f32.gmra.mxu0 %v88
  %v219 = vpop.f32.mrf.mxu0
  %v220 = vadd.f32 %v57, %v219
  %v221 = vpop.f32.mrf.mxu0
  %222 = vmatprep.mubr.f32.mxu0 0.0
  %223 = vmatmul.mubr.f32.gmra.mxu0 %v91
  %v224 = vpop.f32.mrf.mxu0
  %v225 = vadd.f32 %v57, %v224
  %v226 = vpop.f32.mrf.mxu0
  %227 = vmatprep.mubr.f32.mxu0 0.0
  %228 = vmatmul.mubr.f32.gmra.mxu0 %v94
  %v229 = vpop.f32.mrf.mxu0
  %v230 = vadd.f32 %v57, %v229
  %v231 = vpop.f32.mrf.mxu0
  %232 = vmatprep.mubr.f32.mxu0 0.0
  %233 = vmatmul.mubr.f32.gmra.mxu0 %v97
  %v234 = vpop.f32.mrf.mxu0
  %v235 = vadd.f32 %v57, %v234
  %v236 = vpop.f32.mrf.mxu0
  %237 = vmatprep.mubr.f32.mxu0 0.0
  %238 = vmatmul.mubr.f32.gmra.mxu0 %v100
  %v239 = vpop.f32.mrf.mxu0
  %v240 = vadd.f32 %v57, %v239
  %v241 = vpop.f32.mrf.mxu0
  %242 = vmatprep.mubr.f32.mxu0 0.0
  %243 = vmatmul.mubr.f32.gmra.mxu0 %v103
  %v244 = vpop.f32.mrf.mxu0
  %v245 = vadd.f32 %v57, %v244
  %v246 = vpop.f32.mrf.mxu0
  %247 = vmatprep.mubr.f32.mxu0 0.0
  %248 = vmatmul.mubr.f32.gmra.mxu0 %v106
  %v249 = vpop.f32.mrf.mxu0
  %v250 = vadd.f32 %v57, %v249
  %v251 = vpop.f32.mrf.mxu0
  %252 = vdwg.mxu0
  %v253 = vtanh.pop %v175
  %v254 = vtanh.pop %v180
  %v255 = vtanh.pop %v185
  %v256 = vtanh.pop %v190
  %v257 = vtanh.pop %v195
  %v258 = vtanh.pop %v200
  %v259 = vtanh.pop %v205
  %v260 = vtanh.pop %v210
  %v261 = vtanh.pop %v215
  %v262 = vtanh.pop %v220
  %v263 = vtanh.pop %v225
  %v264 = vtanh.pop %v230
  %v265 = vtanh.pop %v235
  %v266 = vtanh.pop %v240
  %v267 = vtanh.pop %v245
  %v268 = vtanh.pop %v250
  %v269 = vld [vmem:[%s3] sm:$0xff]
  %v270 = vld [vmem:[%s3 + $0x8] sm:$0xff]
  %v271 = vld [vmem:[%s3 + $0x10] sm:$0xff]
  %v272 = vld [vmem:[%s3 + $0x18] sm:$0xff]
  %v273 = vld [vmem:[%s4] sm:$0x1]
  %v275 = vlaneseq
  %v276 = vshrl.u32 %v275, 7
  %v277 = vsub.s32 0, %v276
  %v278 = vrot.slane %v273, %v277
  %vm280 = vcmask 261120
  %v282 = vsel %vm280, %v253, 0
  %v285 = vsel %vm280, %v254, 0
  %v288 = vsel %vm280, %v255, 0
  %v291 = vsel %vm280, %v256, 0
  %v294 = vsel %vm280, %v257, 0
  %v297 = vsel %vm280, %v258, 0
  %v300 = vsel %vm280, %v259, 0
  %v303 = vsel %vm280, %v260, 0
  %v306 = vsel %vm280, %v261, 0
  %v309 = vsel %vm280, %v262, 0
  %v312 = vsel %vm280, %v263, 0
  %v315 = vsel %vm280, %v264, 0
  %v318 = vsel %vm280, %v265, 0
  %v321 = vsel %vm280, %v266, 0
  %v324 = vsel %vm280, %v267, 0
  %v327 = vsel %vm280, %v268, 0
  %329 = vmatprep.subr.mxu0 0.0
  %330 = vmatpush1.msra.mxu0 0.0
  %331 = vmatprep.subr.mxu0 0.0
  %332 = vmatpush1.msra.mxu0 0.0
  %333 = vmatprep.subr.mxu0 0.0
  %334 = vmatpush1.msra.mxu0 0.0
  %335 = vmatprep.subr.mxu0 0.0
  %336 = vmatpush1.msra.mxu0 0.0
  %337 = vmatprep.subr.mxu0 0.0
  %338 = vmatpush1.msra.mxu0 0.0
  %339 = vmatprep.subr.mxu0 0.0
  %340 = vmatpush1.msra.mxu0 0.0
  %341 = vmatprep.subr.mxu0 0.0
  %342 = vmatpush1.msra.mxu0 0.0
  %343 = vmatprep.subr.mxu0 0.0
  %344 = vmatpush1.msra.mxu0 0.0
  %345 = vmatprep.subr.mxu0 0.0
  %346 = vmatpush1.msra.mxu0 0.0
  %347 = vmatprep.subr.mxu0 0.0
  %348 = vmatpush1.msra.mxu0 0.0
  %349 = vmatprep.subr.mxu0 0.0
  %350 = vmatpush1.msra.mxu0 0.0
  %351 = vmatprep.subr.mxu0 0.0
  %352 = vmatpush1.msra.mxu0 0.0
  %353 = vmatprep.subr.mxu0 0.0
  %354 = vmatpush1.msra.mxu0 %v272
  %355 = vmatprep.subr.mxu0 0.0
  %356 = vmatpush1.msra.mxu0 %v271
  %357 = vmatprep.subr.mxu0 0.0
  %358 = vmatpush1.msra.mxu0 %v270
  %359 = vmatprep.subr.mxu0 0.0
  %360 = vmatpush1.msra.mxu0 %v269
  %361 = vmatprep.subr.mxu0 0.0
  %362 = vmatpush2.msra.mxu0 0.0
  %363 = vmatprep.subr.mxu0 0.0
  %364 = vmatpush2.msra.mxu0 0.0
  %365 = vmatprep.subr.mxu0 0.0
  %366 = vmatpush2.msra.mxu0 0.0
  %367 = vmatprep.subr.mxu0 0.0
  %368 = vmatpush2.msra.mxu0 0.0
  %369 = vmatprep.subr.mxu0 0.0
  %370 = vmatpush2.msra.mxu0 0.0
  %371 = vmatprep.subr.mxu0 0.0
  %372 = vmatpush2.msra.mxu0 0.0
  %373 = vmatprep.subr.mxu0 0.0
  %374 = vmatpush2.msra.mxu0 0.0
  %375 = vmatprep.subr.mxu0 0.0
  %376 = vmatpush2.msra.mxu0 0.0
  %377 = vmatprep.subr.mxu0 0.0
  %378 = vmatpush2.msra.mxu0 0.0
  %379 = vmatprep.subr.mxu0 0.0
  %380 = vmatpush2.msra.mxu0 0.0
  %381 = vmatprep.subr.mxu0 0.0
  %382 = vmatpush2.msra.mxu0 0.0
  %383 = vmatprep.subr.mxu0 0.0
  %384 = vmatpush2.msra.mxu0 0.0
  %385 = vmatprep.subr.mxu0 0.0
  %386 = vmatpush2.msra.mxu0 0.0
  %387 = vmatprep.subr.mxu0 0.0
  %388 = vmatpush2.msra.mxu0 0.0
  %389 = vmatprep.subr.mxu0 0.0
  %390 = vmatpush2.msra.mxu0 0.0
  %391 = vmatprep.subr.mxu0 0.0
  %392 = vmatpush2.msra.mxu0 0.0
  %393 = vmatprep.mubr.f32.mxu0 0.0
  %394 = vmatmul.mubr.f32.gmra.mxu0 %v282
  %v395 = vpop.f32.mrf.mxu0
  %v396 = vadd.f32 %v278, %v395
  %v397 = vpop.f32.mrf.mxu0
  %398 = vmatprep.mubr.f32.mxu0 0.0
  %399 = vmatmul.mubr.f32.gmra.mxu0 %v285
  %v400 = vpop.f32.mrf.mxu0
  %v401 = vadd.f32 %v278, %v400
  %v402 = vpop.f32.mrf.mxu0
  %403 = vmatprep.mubr.f32.mxu0 0.0
  %404 = vmatmul.mubr.f32.gmra.mxu0 %v288
  %v405 = vpop.f32.mrf.mxu0
  %v406 = vadd.f32 %v278, %v405
  %v407 = vpop.f32.mrf.mxu0
  %408 = vmatprep.mubr.f32.mxu0 0.0
  %409 = vmatmul.mubr.f32.gmra.mxu0 %v291
  %v410 = vpop.f32.mrf.mxu0
  %v411 = vadd.f32 %v278, %v410
  %v412 = vpop.f32.mrf.mxu0
  %413 = vmatprep.mubr.f32.mxu0 0.0
  %414 = vmatmul.mubr.f32.gmra.mxu0 %v294
  %v415 = vpop.f32.mrf.mxu0
  %v416 = vadd.f32 %v278, %v415
  %v417 = vpop.f32.mrf.mxu0
  %418 = vmatprep.mubr.f32.mxu0 0.0
  %419 = vmatmul.mubr.f32.gmra.mxu0 %v297
  %v420 = vpop.f32.mrf.mxu0
  %v421 = vadd.f32 %v278, %v420
  %v422 = vpop.f32.mrf.mxu0
  %423 = vmatprep.mubr.f32.mxu0 0.0
  %424 = vmatmul.mubr.f32.gmra.mxu0 %v300
  %v425 = vpop.f32.mrf.mxu0
  %v426 = vadd.f32 %v278, %v425
  %v427 = vpop.f32.mrf.mxu0
  %428 = vmatprep.mubr.f32.mxu0 0.0
  %429 = vmatmul.mubr.f32.gmra.mxu0 %v303
  %v430 = vpop.f32.mrf.mxu0
  %v431 = vadd.f32 %v278, %v430
  %v432 = vpop.f32.mrf.mxu0
  %433 = vmatprep.mubr.f32.mxu0 0.0
  %434 = vmatmul.mubr.f32.gmra.mxu0 %v306
  %v435 = vpop.f32.mrf.mxu0
  %v436 = vadd.f32 %v278, %v435
  %v437 = vpop.f32.mrf.mxu0
  %438 = vmatprep.mubr.f32.mxu0 0.0
  %439 = vmatmul.mubr.f32.gmra.mxu0 %v309
  %v440 = vpop.f32.mrf.mxu0
  %v441 = vadd.f32 %v278, %v440
  %v442 = vpop.f32.mrf.mxu0
  %443 = vmatprep.mubr.f32.mxu0 0.0
  %444 = vmatmul.mubr.f32.gmra.mxu0 %v312
  %v445 = vpop.f32.mrf.mxu0
  %v446 = vadd.f32 %v278, %v445
  %v447 = vpop.f32.mrf.mxu0
  %448 = vmatprep.mubr.f32.mxu0 0.0
  %449 = vmatmul.mubr.f32.gmra.mxu0 %v315
  %v450 = vpop.f32.mrf.mxu0
  %v451 = vadd.f32 %v278, %v450
  %v452 = vpop.f32.mrf.mxu0
  %453 = vmatprep.mubr.f32.mxu0 0.0
  %454 = vmatmul.mubr.f32.gmra.mxu0 %v318
  %v455 = vpop.f32.mrf.mxu0
  %v456 = vadd.f32 %v278, %v455
  %v457 = vpop.f32.mrf.mxu0
  %458 = vmatprep.mubr.f32.mxu0 0.0
  %459 = vmatmul.mubr.f32.gmra.mxu0 %v321
  %v460 = vpop.f32.mrf.mxu0
  %v461 = vadd.f32 %v278, %v460
  %v462 = vpop.f32.mrf.mxu0
  %463 = vmatprep.mubr.f32.mxu0 0.0
  %464 = vmatmul.mubr.f32.gmra.mxu0 %v324
  %v465 = vpop.f32.mrf.mxu0
  %v466 = vadd.f32 %v278, %v465
  %v467 = vpop.f32.mrf.mxu0
  %468 = vmatprep.mubr.f32.mxu0 0.0
  %469 = vmatmul.mubr.f32.gmra.mxu0 %v327
  %v470 = vpop.f32.mrf.mxu0
  %v471 = vadd.f32 %v278, %v470
  %v472 = vpop.f32.mrf.mxu0
  %473 = vdwg.mxu0
  %v474 = vtanh.pop %v396
  %v475 = vtanh.pop %v401
  %v476 = vtanh.pop %v406
  %v477 = vtanh.pop %v411
  %v478 = vtanh.pop %v416
  %v479 = vtanh.pop %v421
  %v480 = vtanh.pop %v426
  %v481 = vtanh.pop %v431
  %v482 = vtanh.pop %v436
  %v483 = vtanh.pop %v441
  %v484 = vtanh.pop %v446
  %v485 = vtanh.pop %v451
  %v486 = vtanh.pop %v456
  %v487 = vtanh.pop %v461
  %v488 = vtanh.pop %v466
  %v489 = vtanh.pop %v471
  %v490 = vld [vmem:[%s5] sm:$0xff]
  %v491 = vld [vmem:[%s5 + $0x8] sm:$0xff]
  %v492 = vld [vmem:[%s5 + $0x10] sm:$0xff]
  %v493 = vld [vmem:[%s5 + $0x18] sm:$0xff]
  %v494 = vld [vmem:[%s6] sm:$0x1]
  %v496 = vlaneseq
  %v497 = vshrl.u32 %v496, 7
  %v498 = vsub.s32 0, %v497
  %v499 = vrot.slane %v494, %v498
  %v502 = vsel %vm280, %v474, 0
  %v505 = vsel %vm280, %v475, 0
  %v508 = vsel %vm280, %v476, 0
  %v511 = vsel %vm280, %v477, 0
  %v514 = vsel %vm280, %v478, 0
  %v517 = vsel %vm280, %v479, 0
  %v520 = vsel %vm280, %v480, 0
  %v523 = vsel %vm280, %v481, 0
  %v526 = vsel %vm280, %v482, 0
  %v529 = vsel %vm280, %v483, 0
  %v532 = vsel %vm280, %v484, 0
  %v535 = vsel %vm280, %v485, 0
  %v538 = vsel %vm280, %v486, 0
  %v541 = vsel %vm280, %v487, 0
  %v544 = vsel %vm280, %v488, 0
  %v547 = vsel %vm280, %v489, 0
  %549 = vmatprep.subr.mxu0 0.0
  %550 = vmatpush1.msra.mxu0 0.0
  %551 = vmatprep.subr.mxu0 0.0
  %552 = vmatpush1.msra.mxu0 0.0
  %553 = vmatprep.subr.mxu0 0.0
  %554 = vmatpush1.msra.mxu0 0.0
  %555 = vmatprep.subr.mxu0 0.0
  %556 = vmatpush1.msra.mxu0 0.0
  %557 = vmatprep.subr.mxu0 0.0
  %558 = vmatpush1.msra.mxu0 0.0
  %559 = vmatprep.subr.mxu0 0.0
  %560 = vmatpush1.msra.mxu0 0.0
  %561 = vmatprep.subr.mxu0 0.0
  %562 = vmatpush1.msra.mxu0 0.0
  %563 = vmatprep.subr.mxu0 0.0
  %564 = vmatpush1.msra.mxu0 0.0
  %565 = vmatprep.subr.mxu0 0.0
  %566 = vmatpush1.msra.mxu0 0.0
  %567 = vmatprep.subr.mxu0 0.0
  %568 = vmatpush1.msra.mxu0 0.0
  %569 = vmatprep.subr.mxu0 0.0
  %570 = vmatpush1.msra.mxu0 0.0
  %571 = vmatprep.subr.mxu0 0.0
  %572 = vmatpush1.msra.mxu0 0.0
  %573 = vmatprep.subr.mxu0 0.0
  %574 = vmatpush1.msra.mxu0 %v493
  %575 = vmatprep.subr.mxu0 0.0
  %576 = vmatpush1.msra.mxu0 %v492
  %577 = vmatprep.subr.mxu0 0.0
  %578 = vmatpush1.msra.mxu0 %v491
  %579 = vmatprep.subr.mxu0 0.0
  %580 = vmatpush1.msra.mxu0 %v490
  %581 = vmatprep.subr.mxu0 0.0
  %582 = vmatpush2.msra.mxu0 0.0
  %583 = vmatprep.subr.mxu0 0.0
  %584 = vmatpush2.msra.mxu0 0.0
  %585 = vmatprep.subr.mxu0 0.0
  %586 = vmatpush2.msra.mxu0 0.0
  %587 = vmatprep.subr.mxu0 0.0
  %588 = vmatpush2.msra.mxu0 0.0
  %589 = vmatprep.subr.mxu0 0.0
  %590 = vmatpush2.msra.mxu0 0.0
  %591 = vmatprep.subr.mxu0 0.0
  %592 = vmatpush2.msra.mxu0 0.0
  %593 = vmatprep.subr.mxu0 0.0
  %594 = vmatpush2.msra.mxu0 0.0
  %595 = vmatprep.subr.mxu0 0.0
  %596 = vmatpush2.msra.mxu0 0.0
  %597 = vmatprep.subr.mxu0 0.0
  %598 = vmatpush2.msra.mxu0 0.0
  %599 = vmatprep.subr.mxu0 0.0
  %600 = vmatpush2.msra.mxu0 0.0
  %601 = vmatprep.subr.mxu0 0.0
  %602 = vmatpush2.msra.mxu0 0.0
  %603 = vmatprep.subr.mxu0 0.0
  %604 = vmatpush2.msra.mxu0 0.0
  %605 = vmatprep.subr.mxu0 0.0
  %606 = vmatpush2.msra.mxu0 0.0
  %607 = vmatprep.subr.mxu0 0.0
  %608 = vmatpush2.msra.mxu0 0.0
  %609 = vmatprep.subr.mxu0 0.0
  %610 = vmatpush2.msra.mxu0 0.0
  %611 = vmatprep.subr.mxu0 0.0
  %612 = vmatpush2.msra.mxu0 0.0
  %613 = vmatprep.mubr.f32.mxu0 0.0
  %614 = vmatmul.mubr.f32.gmra.mxu0 %v502
  %v615 = vpop.f32.mrf.mxu0
  %v616 = vadd.f32 %v499, %v615
  %v617 = vpop.f32.mrf.mxu0
  %618 = vmatprep.mubr.f32.mxu0 0.0
  %619 = vmatmul.mubr.f32.gmra.mxu0 %v505
  %v620 = vpop.f32.mrf.mxu0
  %v621 = vadd.f32 %v499, %v620
  %v622 = vpop.f32.mrf.mxu0
  %623 = vmatprep.mubr.f32.mxu0 0.0
  %624 = vmatmul.mubr.f32.gmra.mxu0 %v508
  %v625 = vpop.f32.mrf.mxu0
  %v626 = vadd.f32 %v499, %v625
  %v627 = vpop.f32.mrf.mxu0
  %628 = vmatprep.mubr.f32.mxu0 0.0
  %629 = vmatmul.mubr.f32.gmra.mxu0 %v511
  %v630 = vpop.f32.mrf.mxu0
  %v631 = vadd.f32 %v499, %v630
  %v632 = vpop.f32.mrf.mxu0
  %633 = vmatprep.mubr.f32.mxu0 0.0
  %634 = vmatmul.mubr.f32.gmra.mxu0 %v514
  %v635 = vpop.f32.mrf.mxu0
  %v636 = vadd.f32 %v499, %v635
  %v637 = vpop.f32.mrf.mxu0
  %638 = vmatprep.mubr.f32.mxu0 0.0
  %639 = vmatmul.mubr.f32.gmra.mxu0 %v517
  %v640 = vpop.f32.mrf.mxu0
  %v641 = vadd.f32 %v499, %v640
  %v642 = vpop.f32.mrf.mxu0
  %643 = vmatprep.mubr.f32.mxu0 0.0
  %644 = vmatmul.mubr.f32.gmra.mxu0 %v520
  %v645 = vpop.f32.mrf.mxu0
  %v646 = vadd.f32 %v499, %v645
  %v647 = vpop.f32.mrf.mxu0
  %648 = vmatprep.mubr.f32.mxu0 0.0
  %649 = vmatmul.mubr.f32.gmra.mxu0 %v523
  %v650 = vpop.f32.mrf.mxu0
  %v651 = vadd.f32 %v499, %v650
  %v652 = vpop.f32.mrf.mxu0
  %653 = vmatprep.mubr.f32.mxu0 0.0
  %654 = vmatmul.mubr.f32.gmra.mxu0 %v526
  %v655 = vpop.f32.mrf.mxu0
  %v656 = vadd.f32 %v499, %v655
  %v657 = vpop.f32.mrf.mxu0
  %658 = vmatprep.mubr.f32.mxu0 0.0
  %659 = vmatmul.mubr.f32.gmra.mxu0 %v529
  %v660 = vpop.f32.mrf.mxu0
  %v661 = vadd.f32 %v499, %v660
  %v662 = vpop.f32.mrf.mxu0
  %663 = vmatprep.mubr.f32.mxu0 0.0
  %664 = vmatmul.mubr.f32.gmra.mxu0 %v532
  %v665 = vpop.f32.mrf.mxu0
  %v666 = vadd.f32 %v499, %v665
  %v667 = vpop.f32.mrf.mxu0
  %668 = vmatprep.mubr.f32.mxu0 0.0
  %669 = vmatmul.mubr.f32.gmra.mxu0 %v535
  %v670 = vpop.f32.mrf.mxu0
  %v671 = vadd.f32 %v499, %v670
  %v672 = vpop.f32.mrf.mxu0
  %673 = vmatprep.mubr.f32.mxu0 0.0
  %674 = vmatmul.mubr.f32.gmra.mxu0 %v538
  %v675 = vpop.f32.mrf.mxu0
  %v676 = vadd.f32 %v499, %v675
  %v677 = vpop.f32.mrf.mxu0
  %678 = vmatprep.mubr.f32.mxu0 0.0
  %679 = vmatmul.mubr.f32.gmra.mxu0 %v541
  %v680 = vpop.f32.mrf.mxu0
  %v681 = vadd.f32 %v499, %v680
  %v682 = vpop.f32.mrf.mxu0
  %683 = vmatprep.mubr.f32.mxu0 0.0
  %684 = vmatmul.mubr.f32.gmra.mxu0 %v544
  %v685 = vpop.f32.mrf.mxu0
  %v686 = vadd.f32 %v499, %v685
  %v687 = vpop.f32.mrf.mxu0
  %688 = vmatprep.mubr.f32.mxu0 0.0
  %689 = vmatmul.mubr.f32.gmra.mxu0 %v547
  %v690 = vpop.f32.mrf.mxu0
  %v691 = vadd.f32 %v499, %v690
  %v692 = vpop.f32.mrf.mxu0
  %693 = vdwg.mxu0
  %v694 = vtanh.pop %v616
  %v695 = vtanh.pop %v621
  %v696 = vtanh.pop %v626
  %v697 = vtanh.pop %v631
  %v698 = vtanh.pop %v636
  %v699 = vtanh.pop %v641
  %v700 = vtanh.pop %v646
  %v701 = vtanh.pop %v651
  %v702 = vtanh.pop %v656
  %v703 = vtanh.pop %v661
  %v704 = vtanh.pop %v666
  %v705 = vtanh.pop %v671
  %v706 = vtanh.pop %v676
  %v707 = vtanh.pop %v681
  %v708 = vtanh.pop %v686
  %v709 = vtanh.pop %v691
  %v710 = vld [vmem:[%s7] sm:$0xff]
  %v711 = vld [vmem:[%s7 + $0x8] sm:$0xff]
  %v712 = vld [vmem:[%s7 + $0x10] sm:$0xff]
  %v713 = vld [vmem:[%s7 + $0x18] sm:$0xff]
  %v714 = vld [vmem:[#allocation2] sm:$0x1]
  %v716 = vlaneseq
  %v717 = vshrl.u32 %v716, 7
  %v718 = vsub.s32 0, %v717
  %v719 = vrot.slane %v714, %v718
  %v722 = vsel %vm280, %v694, 0
  %v725 = vsel %vm280, %v695, 0
  %v728 = vsel %vm280, %v696, 0
  %v731 = vsel %vm280, %v697, 0
  %v734 = vsel %vm280, %v698, 0
  %v737 = vsel %vm280, %v699, 0
  %v740 = vsel %vm280, %v700, 0
  %v743 = vsel %vm280, %v701, 0
  %v746 = vsel %vm280, %v702, 0
  %v749 = vsel %vm280, %v703, 0
  %v752 = vsel %vm280, %v704, 0
  %v755 = vsel %vm280, %v705, 0
  %v758 = vsel %vm280, %v706, 0
  %v761 = vsel %vm280, %v707, 0
  %v764 = vsel %vm280, %v708, 0
  %v767 = vsel %vm280, %v709, 0
  %769 = vmatprep.subr.mxu0 0.0
  %770 = vmatpush1.msra.mxu0 0.0
  %771 = vmatprep.subr.mxu0 0.0
  %772 = vmatpush1.msra.mxu0 0.0
  %773 = vmatprep.subr.mxu0 0.0
  %774 = vmatpush1.msra.mxu0 0.0
  %775 = vmatprep.subr.mxu0 0.0
  %776 = vmatpush1.msra.mxu0 0.0
  %777 = vmatprep.subr.mxu0 0.0
  %778 = vmatpush1.msra.mxu0 0.0
  %779 = vmatprep.subr.mxu0 0.0
  %780 = vmatpush1.msra.mxu0 0.0
  %781 = vmatprep.subr.mxu0 0.0
  %782 = vmatpush1.msra.mxu0 0.0
  %783 = vmatprep.subr.mxu0 0.0
  %784 = vmatpush1.msra.mxu0 0.0
  %785 = vmatprep.subr.mxu0 0.0
  %786 = vmatpush1.msra.mxu0 0.0
  %787 = vmatprep.subr.mxu0 0.0
  %788 = vmatpush1.msra.mxu0 0.0
  %789 = vmatprep.subr.mxu0 0.0
  %790 = vmatpush1.msra.mxu0 0.0
  %791 = vmatprep.subr.mxu0 0.0
  %792 = vmatpush1.msra.mxu0 0.0
  %793 = vmatprep.subr.mxu0 0.0
  %794 = vmatpush1.msra.mxu0 %v713
  %795 = vmatprep.subr.mxu0 0.0
  %796 = vmatpush1.msra.mxu0 %v712
  %797 = vmatprep.subr.mxu0 0.0
  %798 = vmatpush1.msra.mxu0 %v711
  %799 = vmatprep.subr.mxu0 0.0
  %800 = vmatpush1.msra.mxu0 %v710
  %801 = vmatprep.subr.mxu0 0.0
  %802 = vmatpush2.msra.mxu0 0.0
  %803 = vmatprep.subr.mxu0 0.0
  %804 = vmatpush2.msra.mxu0 0.0
  %805 = vmatprep.subr.mxu0 0.0
  %806 = vmatpush2.msra.mxu0 0.0
  %807 = vmatprep.subr.mxu0 0.0
  %808 = vmatpush2.msra.mxu0 0.0
  %809 = vmatprep.subr.mxu0 0.0
  %810 = vmatpush2.msra.mxu0 0.0
  %811 = vmatprep.subr.mxu0 0.0
  %812 = vmatpush2.msra.mxu0 0.0
  %813 = vmatprep.subr.mxu0 0.0
  %814 = vmatpush2.msra.mxu0 0.0
  %815 = vmatprep.subr.mxu0 0.0
  %816 = vmatpush2.msra.mxu0 0.0
  %817 = vmatprep.subr.mxu0 0.0
  %818 = vmatpush2.msra.mxu0 0.0
  %819 = vmatprep.subr.mxu0 0.0
  %820 = vmatpush2.msra.mxu0 0.0
  %821 = vmatprep.subr.mxu0 0.0
  %822 = vmatpush2.msra.mxu0 0.0
  %823 = vmatprep.subr.mxu0 0.0
  %824 = vmatpush2.msra.mxu0 0.0
  %825 = vmatprep.subr.mxu0 0.0
  %826 = vmatpush2.msra.mxu0 0.0
  %827 = vmatprep.subr.mxu0 0.0
  %828 = vmatpush2.msra.mxu0 0.0
  %829 = vmatprep.subr.mxu0 0.0
  %830 = vmatpush2.msra.mxu0 0.0
  %831 = vmatprep.subr.mxu0 0.0
  %832 = vmatpush2.msra.mxu0 0.0
  %833 = vmatprep.mubr.f32.mxu0 0.0
  %834 = vmatmul.mubr.f32.gmra.mxu0 %v722
  %v835 = vpop.f32.mrf.mxu0
  %v836 = vadd.f32 %v719, %v835
  %v837 = vpop.f32.mrf.mxu0
  %838 = vmatprep.mubr.f32.mxu0 0.0
  %839 = vmatmul.mubr.f32.gmra.mxu0 %v725
  %v840 = vpop.f32.mrf.mxu0
  %v841 = vadd.f32 %v719, %v840
  %v842 = vpop.f32.mrf.mxu0
  %843 = vmatprep.mubr.f32.mxu0 0.0
  %844 = vmatmul.mubr.f32.gmra.mxu0 %v728
  %v845 = vpop.f32.mrf.mxu0
  %v846 = vadd.f32 %v719, %v845
  %v847 = vpop.f32.mrf.mxu0
  %848 = vmatprep.mubr.f32.mxu0 0.0
  %849 = vmatmul.mubr.f32.gmra.mxu0 %v731
  %v850 = vpop.f32.mrf.mxu0
  %v851 = vadd.f32 %v719, %v850
  %v852 = vpop.f32.mrf.mxu0
  %853 = vmatprep.mubr.f32.mxu0 0.0
  %854 = vmatmul.mubr.f32.gmra.mxu0 %v734
  %v855 = vpop.f32.mrf.mxu0
  %v856 = vadd.f32 %v719, %v855
  %v857 = vpop.f32.mrf.mxu0
  %858 = vmatprep.mubr.f32.mxu0 0.0
  %859 = vmatmul.mubr.f32.gmra.mxu0 %v737
  %v860 = vpop.f32.mrf.mxu0
  %v861 = vadd.f32 %v719, %v860
  %v862 = vpop.f32.mrf.mxu0
  %863 = vmatprep.mubr.f32.mxu0 0.0
  %864 = vmatmul.mubr.f32.gmra.mxu0 %v740
  %v865 = vpop.f32.mrf.mxu0
  %v866 = vadd.f32 %v719, %v865
  %v867 = vpop.f32.mrf.mxu0
  %868 = vmatprep.mubr.f32.mxu0 0.0
  %869 = vmatmul.mubr.f32.gmra.mxu0 %v743
  %v870 = vpop.f32.mrf.mxu0
  %v871 = vadd.f32 %v719, %v870
  %v872 = vpop.f32.mrf.mxu0
  %873 = vmatprep.mubr.f32.mxu0 0.0
  %874 = vmatmul.mubr.f32.gmra.mxu0 %v746
  %v875 = vpop.f32.mrf.mxu0
  %v876 = vadd.f32 %v719, %v875
  %v877 = vpop.f32.mrf.mxu0
  %878 = vmatprep.mubr.f32.mxu0 0.0
  %879 = vmatmul.mubr.f32.gmra.mxu0 %v749
  %v880 = vpop.f32.mrf.mxu0
  %v881 = vadd.f32 %v719, %v880
  %v882 = vpop.f32.mrf.mxu0
  %883 = vmatprep.mubr.f32.mxu0 0.0
  %884 = vmatmul.mubr.f32.gmra.mxu0 %v752
  %v885 = vpop.f32.mrf.mxu0
  %v886 = vadd.f32 %v719, %v885
  %v887 = vpop.f32.mrf.mxu0
  %888 = vmatprep.mubr.f32.mxu0 0.0
  %889 = vmatmul.mubr.f32.gmra.mxu0 %v755
  %v890 = vpop.f32.mrf.mxu0
  %v891 = vadd.f32 %v719, %v890
  %v892 = vpop.f32.mrf.mxu0
  %893 = vmatprep.mubr.f32.mxu0 0.0
  %894 = vmatmul.mubr.f32.gmra.mxu0 %v758
  %v895 = vpop.f32.mrf.mxu0
  %v896 = vadd.f32 %v719, %v895
  %v897 = vpop.f32.mrf.mxu0
  %898 = vmatprep.mubr.f32.mxu0 0.0
  %899 = vmatmul.mubr.f32.gmra.mxu0 %v761
  %v900 = vpop.f32.mrf.mxu0
  %v901 = vadd.f32 %v719, %v900
  %v902 = vpop.f32.mrf.mxu0
  %903 = vmatprep.mubr.f32.mxu0 0.0
  %904 = vmatmul.mubr.f32.gmra.mxu0 %v764
  %v905 = vpop.f32.mrf.mxu0
  %v906 = vadd.f32 %v719, %v905
  %v907 = vpop.f32.mrf.mxu0
  %908 = vmatprep.mubr.f32.mxu0 0.0
  %909 = vmatmul.mubr.f32.gmra.mxu0 %v767
  %v910 = vpop.f32.mrf.mxu0
  %v911 = vadd.f32 %v719, %v910
  %v912 = vpop.f32.mrf.mxu0
  %913 = vdwg.mxu0
  %vm914 = vcmask 7168
  %915 = vst.msk [vmem:[%s9] sm:$0xff] %vm914, %v836
  %916 = vst.msk [vmem:[%s9 + $0x8] sm:$0xff] %vm914, %v841
  %917 = vst.msk [vmem:[%s9 + $0x10] sm:$0xff] %vm914, %v846
  %918 = vst.msk [vmem:[%s9 + $0x18] sm:$0xff] %vm914, %v851
  %919 = vst.msk [vmem:[%s9 + $0x20] sm:$0xff] %vm914, %v856
  %920 = vst.msk [vmem:[%s9 + $0x28] sm:$0xff] %vm914, %v861
  %921 = vst.msk [vmem:[%s9 + $0x30] sm:$0xff] %vm914, %v866
  %922 = vst.msk [vmem:[%s9 + $0x38] sm:$0xff] %vm914, %v871
  %923 = vst.msk [vmem:[%s9 + $0x40] sm:$0xff] %vm914, %v876
  %924 = vst.msk [vmem:[%s9 + $0x48] sm:$0xff] %vm914, %v881
  %925 = vst.msk [vmem:[%s9 + $0x50] sm:$0xff] %vm914, %v886
  %926 = vst.msk [vmem:[%s9 + $0x58] sm:$0xff] %vm914, %v891
  %927 = vst.msk [vmem:[%s9 + $0x60] sm:$0xff] %vm914, %v896
  %928 = vst.msk [vmem:[%s9 + $0x68] sm:$0xff] %vm914, %v901
  %929 = vst.msk [vmem:[%s9 + $0x70] sm:$0xff] %vm914, %v906
  %930 = vst.msk [vmem:[%s9 + $0x78] sm:$0xff] %vm914, %v911
  // Predicated region
  $region38: #{tpu_custom_call.1} parent=0 // pred_check
    _
  $region39: #{tpu_custom_call.1} parent=0 // pred_check_branch
    %932 = sbr.rel (0) target = $region41
  $region40: #{tpu_custom_call.1} parent=0 // pred_region
    _
  $region41: #{tpu_custom_call.1} parent=0 // pred_fallthru
    _
  // Predicated region
  $region42: #{tpu_custom_call.1} parent=0 // pred_check
    _
  $region43: #{tpu_custom_call.1} parent=0 // pred_check_branch
    %934 = sbr.rel (0) target = $region45
  $region44: #{tpu_custom_call.1} parent=0 // pred_region
    _
  $region45: #{tpu_custom_call.1} parent=0 // pred_fallthru
    _

</llo_original>
